<compile_context>
chip_gen: v5e
topology: v5e:2x2
jax: 0.10.0
libtpu: 0.0.40
codegen_flags: <defaults>
</compile_context>

<pallas_src>
import functools

import jax
import jax.numpy as jnp
from jax.experimental import pallas as pl
from jax.experimental.pallas import tpu as pltpu

EPS = 1e-5


def _round_up(x, m):
    return ((x + m - 1) // m) * m


def fold_bn(gamma, beta, mean, var):
    scale = gamma / jnp.sqrt(var + EPS)
    bias = beta - mean * scale
    return scale, bias


# ----------------------------------------------------------------------------
# Fused bottleneck kernel
#   x is presented per-image as a zero-padded, row-flattened (Hp*Wp, Cin_pad)
#   slab.  conv2 (3x3, pad 1) becomes 9 matmuls on constant-offset row windows
#   of a VMEM copy of out1 (the spatial zero-padding supplies the conv pad).
# ----------------------------------------------------------------------------
def _make_bottleneck_kernel(*, wp, pad_rows, res_scale, has_proj):
    def kernel(x_ref, mask_ref, w1_ref, b1_ref, w2_ref, b2_ref,
               w3_ref, b3_ref, *rest):
        if has_proj:
            wsc_ref, bsc_ref, out_ref, out1_s = rest
        else:
            out_ref, out1_s = rest

        m_rows = x_ref.shape[1]                 # flattened padded positions
        x2d = x_ref[0]                          # (M, Cin_pad)  bf16
        mask = mask_ref[...]                    # (M, 1)        f32, 0 on pad ring

        # ---- conv1 (1x1, BN folded into weights) + ReLU, zero the pad ring
        y1 = jnp.dot(x2d, w1_ref[...], preferred_element_type=jnp.float32)
        y1 = jnp.maximum(y1 + b1_ref[...], 0.0) * mask

        # Padded flattened out1 kept entirely in VMEM (replaces HBM im2col).
        # The interior is fully overwritten every step; only the halo row
        # bands at both ends need explicit zeroing.
        out1_s[0:pad_rows, :] = jnp.zeros((pad_rows,) + out1_s.shape[1:],
                                          out1_s.dtype)
        out1_s[pad_rows + m_rows:, :] = jnp.zeros(
            (out1_s.shape[0] - pad_rows - m_rows,) + out1_s.shape[1:],
            out1_s.dtype)
        out1_s[pad_rows:pad_rows + m_rows, :] = y1.astype(out1_s.dtype)

        # ---- conv2 (3x3): 9 shifted-window matmuls, f32 accumulation
        acc = None
        for t in range(9):
            dh, dw = t // 3 - 1, t % 3 - 1
            off = pad_rows + dh * wp + dw       # static flat offset
            win = out1_s[off:off + m_rows, :]   # (M, P) bf16
            part = jnp.dot(win, w2_ref[t], preferred_element_type=jnp.float32)
            acc = part if acc is None else acc + part
        y2 = jnp.maximum(acc + b2_ref[...], 0.0).astype(x2d.dtype)

        # ---- conv3 (1x1) + shortcut (projection matmul OR identity reuse)
        y3 = jnp.dot(y2, w3_ref[...], preferred_element_type=jnp.float32)
        y3 = y3 + b3_ref[...]
        if has_proj:
            sc = jnp.dot(x2d, wsc_ref[...], preferred_element_type=jnp.float32)
            sc = sc + bsc_ref[...]
        else:
            sc = x2d.astype(jnp.float32)        # identity: Cin_pad == C_pad
        if res_scale != 1.0:
            sc = res_scale * sc
        out_ref[0] = jnp.maximum(y3 + sc, 0.0).astype(out_ref.dtype)

    return kernel


def fused_bottleneck_nhwc(x, params, *, stride, is_normal, expansion=4,
                          out_dtype=jnp.bfloat16, compute_dtype=jnp.bfloat16):
    """Whole bottleneck block in one pallas_call.  x: (N, H, W, Cin) f32/bf16."""
    N, H, W, Cin = x.shape
    planes = params["w1"].shape[0]
    Cout = expansion * planes

    Cin_pad = _round_up(Cin, 128)               # lane-dense matmul K dim
    P_pad = _round_up(planes, 128)              # lane-dense intermediate width
    C_pad = _round_up(Cout, 128)                # lane-dense output width

    Hp, Wp = H + 2, W + 2                       # spatially zero-padded image
    Mi = Hp * Wp
    Mi_pad = _round_up(Mi, 8)                   # sublane-aligned row count
    PAD = _round_up(Wp + 1, 8)                  # halo rows in the VMEM scratch
    ROWS = Mi_pad + 2 * PAD

    # ---- fold BN into conv weights / biases, pad channel dims -------------
    s1, b1 = fold_bn(*params["bn1"])
    s2, b2 = fold_bn(*params["bn2"])
    s3, b3 = fold_bn(*params["bn3"])

    w1 = (params["w1"][:, :, 0, 0] * s1[:, None]).T                 # (Cin, P)
    w2 = params["w2"] * s2[:, None, None, None]                     # (P,P,3,3)
    w2 = jnp.transpose(w2, (2, 3, 1, 0)).reshape(9, planes, planes)  # tap,in,out
    w3 = (params["w3"][:, :, 0, 0] * s3[:, None]).T                 # (P, Cout)

    has_proj = (stride != 1) or (Cin != Cout)

    def pad2(a, r, c):
        return jnp.pad(a, ((0, r - a.shape[0]), (0, c - a.shape[1])))

    w1p = pad2(w1, Cin_pad, P_pad).astype(compute_dtype)
    w2p = jnp.pad(w2, ((0, 0), (0, P_pad - planes),
                       (0, P_pad - planes))).astype(compute_dtype)
    w3p = pad2(w3, P_pad, C_pad).astype(compute_dtype)
    b1p = pad2(b1.reshape(1, planes), 1, P_pad).astype(jnp.float32)
    b2p = pad2(b2.reshape(1, planes), 1, P_pad).astype(jnp.float32)
    b3p = pad2(b3.reshape(1, Cout), 1, C_pad).astype(jnp.float32)

    if has_proj:
        ssc, bsc = fold_bn(*params["bnsc"])
        wsc = (params["wsc"][:, :, 0, 0] * ssc[:, None]).T           # (Cin,Cout)
        wscp = pad2(wsc, Cin_pad, C_pad).astype(compute_dtype)
        bscp = pad2(bsc.reshape(1, Cout), 1, C_pad).astype(jnp.float32)

    # ---- activations: spatial zero-pad, flatten rows, pad rows/channels ----
    xp = jnp.pad(x, ((0, 0), (1, 1), (1, 1), (0, 0)))       # (N, Hp, Wp, Cin)
    xf = xp.reshape(N, Mi, Cin)
    xf = jnp.pad(xf, ((0, 0), (0, Mi_pad - Mi),
                      (0, Cin_pad - Cin))).astype(compute_dtype)

    # Interior mask (1 inside the image, 0 on the padding ring) so that
    # conv1's bias does not leak into conv2's zero padding.
    mask = jnp.zeros((Hp, Wp), jnp.float32).at[1:H + 1, 1:W + 1].set(1.0)
    mask = jnp.pad(mask.reshape(Mi, 1), ((0, Mi_pad - Mi), (0, 0)))

    res_scale = 1.0 if is_normal else 1.5
    kernel = _make_bottleneck_kernel(wp=Wp, pad_rows=PAD, res_scale=res_scale,
                                     has_proj=has_proj)

    in_specs = [
        pl.BlockSpec((1, Mi_pad, Cin_pad), lambda n: (n, 0, 0)),     # x
        pl.BlockSpec((Mi_pad, 1), lambda n: (0, 0)),                 # mask
        pl.BlockSpec((Cin_pad, P_pad), lambda n: (0, 0)),            # w1
        pl.BlockSpec((1, P_pad), lambda n: (0, 0)),                  # b1
        pl.BlockSpec((9, P_pad, P_pad), lambda n: (0, 0, 0)),        # w2
        pl.BlockSpec((1, P_pad), lambda n: (0, 0)),                  # b2
        pl.BlockSpec((P_pad, C_pad), lambda n: (0, 0)),              # w3
        pl.BlockSpec((1, C_pad), lambda n: (0, 0)),                  # b3
    ]
    args = [xf, mask, w1p, b1p, w2p, b2p, w3p, b3p]
    if has_proj:
        in_specs += [
            pl.BlockSpec((Cin_pad, C_pad), lambda n: (0, 0)),        # wsc
            pl.BlockSpec((1, C_pad), lambda n: (0, 0)),              # bsc
        ]
        args += [wscp, bscp]

    out_flat = pl.pallas_call(
        kernel,
        out_shape=jax.ShapeDtypeStruct((N, Mi_pad, C_pad), out_dtype),
        grid_spec=pltpu.PrefetchScalarGridSpec(
            num_scalar_prefetch=0,
            grid=(N,),
            in_specs=in_specs,
            out_specs=pl.BlockSpec((1, Mi_pad, C_pad), lambda n: (n, 0, 0)),
            scratch_shapes=[pltpu.VMEM((ROWS, P_pad), compute_dtype)],
        ),
        compiler_params=pltpu.CompilerParams(
            dimension_semantics=("parallel",),
            vmem_limit_bytes=32 * 1024 * 1024),
    )(*args)

    # Extract the interior positions (and apply the stride) + drop lane pad.
    out = out_flat[:, :Mi, :Cout].reshape(N, Hp, Wp, Cout)
    out = out[:, 1:H + 1:stride, 1:W + 1:stride, :]
    return out


def bottleneck_forward(x_nchw, params, *, stride, is_normal, expansion=4,
                       out_dtype=jnp.bfloat16):
    """NCHW adapter matching the PyTorch Bottleneck.forward layout."""
    x = jnp.transpose(x_nchw, (0, 2, 3, 1))
    out = fused_bottleneck_nhwc(x, params, stride=stride, is_normal=is_normal,
                                expansion=expansion, out_dtype=out_dtype)
    return jnp.transpose(out, (0, 3, 1, 2))


# ----------------------------------------------------------------------------
# Pure-JAX f32 reference (for correctness check)
# ----------------------------------------------------------------------------
def _conv_nchw(x, w, stride=1, padding=0):
    return jax.lax.conv_general_dilated(
        x, w, (stride, stride), [(padding, padding), (padding, padding)],
        dimension_numbers=("NCHW", "OIHW", "NCHW"))


def _bn_nchw(x, gamma, beta, mean, var):
    inv = gamma / jnp.sqrt(var + EPS)
    return (x - mean[None, :, None, None]) * inv[None, :, None, None] + \
        beta[None, :, None, None]


def bottleneck_reference(x, params, *, stride, is_normal, expansion=4):
    Cin = x.shape[1]
    planes = params["w1"].shape[0]
    Cout = expansion * planes
    out = jax.nn.relu(_bn_nchw(_conv_nchw(x, params["w1"]), *params["bn1"]))
    out = jax.nn.relu(_bn_nchw(_conv_nchw(out, params["w2"], stride, 1),
                               *params["bn2"]))
    out = _bn_nchw(_conv_nchw(out, params["w3"]), *params["bn3"])
    if (stride != 1) or (Cin != Cout):
        sc = _bn_nchw(_conv_nchw(x, params["wsc"], stride), *params["bnsc"])
    else:
        sc = x
    out = out + (1.0 if is_normal else 1.5) * sc
    return jax.nn.relu(out)


# ----------------------------------------------------------------------------
# Deterministic parameter init (shapes follow the nn.Module.__init__)
# ----------------------------------------------------------------------------
def init_params(key, in_planes, planes, stride, expansion=4):
    Cout = expansion * planes
    ks = jax.random.split(key, 8)

    def bn_params(k, c):
        k1, k2, k3, k4 = jax.random.split(k, 4)
        gamma = jax.random.uniform(k1, (c,), jnp.float32, 0.5, 1.5)
        beta = jax.random.normal(k2, (c,), jnp.float32) * 0.1
        mean = jax.random.normal(k3, (c,), jnp.float32) * 0.1
        var = jax.random.uniform(k4, (c,), jnp.float32, 0.5, 1.5)
        return (gamma, beta, mean, var)

    params = {
        "w1": jax.random.normal(ks[0], (planes, in_planes, 1, 1), jnp.float32) * 0.2,
        "bn1": bn_params(ks[1], planes),
        "w2": jax.random.normal(ks[2], (planes, planes, 3, 3), jnp.float32) * 0.2,
        "bn2": bn_params(ks[3], planes),
        "w3": jax.random.normal(ks[4], (Cout, planes, 1, 1), jnp.float32) * 0.2,
        "bn3": bn_params(ks[5], Cout),
    }
    if stride != 1 or in_planes != Cout:
        params["wsc"] = jax.random.normal(
            ks[6], (Cout, in_planes, 1, 1), jnp.float32) * 0.2
        params["bnsc"] = bn_params(ks[7], Cout)
    return params


# ----------------------------------------------------------------------------
if __name__ == "__main__":
    key = jax.random.PRNGKey(0)
    batch, H, W = 2, 16, 16

    # (in_planes, planes, stride, is_normal)
    tests = [
        (16, 8, 1, True),    # projection shortcut, stride 1 (taylor-style)
        (32, 8, 2, False),   # projection shortcut, stride 2, 1.5x residual
        (32, 8, 1, True),    # identity shortcut
    ]

    for idx, (in_planes, planes, stride, is_normal) in enumerate(tests):
        k_x, k_p, key = jax.random.split(key, 3)
        x = jax.random.normal(k_x, (batch, in_planes, H, W), jnp.float32)
        params = init_params(k_p, in_planes, planes, stride)

        fwd = jax.jit(functools.partial(bottleneck_forward, stride=stride,
                                        is_normal=is_normal))
        out = jax.block_until_ready(fwd(x, params))

        ref = bottleneck_reference(x, params, stride=stride, is_normal=is_normal)
        out32 = jnp.asarray(out, jnp.float32)
        assert out32.shape == ref.shape, (idx, out32.shape, ref.shape)
        assert jnp.allclose(out32, ref, rtol=5e-2, atol=5e-2), \
            (idx, float(jnp.max(jnp.abs(out32 - ref))))

    print("KERNEL_OK")
</pallas_src>

<mosaic_0001>
module attributes {stable_mosaic.version = 11 : i64} {
  func.func @kernel(%arg0: i32, %arg1: memref<1x328x128xbf16, #tpu.memory_space<vmem>>, %arg2: memref<328x1xf32, #tpu.memory_space<vmem>>, %arg3: memref<128x128xbf16, #tpu.memory_space<vmem>>, %arg4: memref<1x128xf32, #tpu.memory_space<vmem>>, %arg5: memref<9x128x128xbf16, #tpu.memory_space<vmem>>, %arg6: memref<1x128xf32, #tpu.memory_space<vmem>>, %arg7: memref<128x128xbf16, #tpu.memory_space<vmem>>, %arg8: memref<1x128xf32, #tpu.memory_space<vmem>>, %arg9: memref<128x128xbf16, #tpu.memory_space<vmem>>, %arg10: memref<1x128xf32, #tpu.memory_space<vmem>>, %arg11: memref<1x328x128xbf16, #tpu.memory_space<vmem>>, %arg12: memref<376x128xbf16, #tpu.memory_space<vmem>>) attributes {dimension_semantics = [#tpu.dimension_semantics<parallel>], iteration_bounds = array<i64: 2>, scalar_prefetch = 0 : i64, scratch_operands = 1 : i64, tpu.core_type = #tpu.core_type<tc>, window_params = [{transform_indices = @transform_0, window_bounds = array<i64: 1, 328, 128>}, {pipeline_mode = #tpu.pipeline_mode<synchronous>, transform_indices = @transform_1, window_bounds = array<i64: 328, 1>}, {pipeline_mode = #tpu.pipeline_mode<synchronous>, transform_indices = @transform_2, window_bounds = array<i64: 128, 128>}, {pipeline_mode = #tpu.pipeline_mode<synchronous>, transform_indices = @transform_3, window_bounds = array<i64: 1, 128>}, {pipeline_mode = #tpu.pipeline_mode<synchronous>, transform_indices = @transform_4, window_bounds = array<i64: 9, 128, 128>}, {pipeline_mode = #tpu.pipeline_mode<synchronous>, transform_indices = @transform_5, window_bounds = array<i64: 1, 128>}, {pipeline_mode = #tpu.pipeline_mode<synchronous>, transform_indices = @transform_6, window_bounds = array<i64: 128, 128>}, {pipeline_mode = #tpu.pipeline_mode<synchronous>, transform_indices = @transform_7, window_bounds = array<i64: 1, 128>}, {pipeline_mode = #tpu.pipeline_mode<synchronous>, transform_indices = @transform_8, window_bounds = array<i64: 128, 128>}, {pipeline_mode = #tpu.pipeline_mode<synchronous>, transform_indices = @transform_9, window_bounds = array<i64: 1, 128>}, {transform_indices = @transform_10, window_bounds = array<i64: 1, 328, 128>}]} {
    %c0 = arith.constant 0 : index
    %c0_0 = arith.constant 0 : index
    %c0_1 = arith.constant 0 : index
    %0 = vector.load %arg1[%c0, %c0_0, %c0_1] : memref<1x328x128xbf16, #tpu.memory_space<vmem>>, vector<1x328x128xbf16>
    %1 = vector.shape_cast %0 : vector<1x328x128xbf16> to vector<328x128xbf16>
    %c0_2 = arith.constant 0 : index
    %c0_3 = arith.constant 0 : index
    %2 = vector.load %arg2[%c0_2, %c0_3] : memref<328x1xf32, #tpu.memory_space<vmem>>, vector<328x1xf32>
    %c0_4 = arith.constant 0 : index
    %c0_5 = arith.constant 0 : index
    %3 = vector.load %arg3[%c0_4, %c0_5] : memref<128x128xbf16, #tpu.memory_space<vmem>>, vector<128x128xbf16>
    %cst = arith.constant dense<0.000000e+00> : vector<328x128xf32>
    %4 = tpu.matmul %1, %3, %cst {dimension_numbers = #tpu.dot_dimension_numbers<[1], [0], [0], [1], [0, 0, 1, 1], [], []>} : vector<328x128xbf16>, vector<128x128xbf16>, vector<328x128xf32> -> vector<328x128xf32>
    %c0_6 = arith.constant 0 : index
    %c0_7 = arith.constant 0 : index
    %5 = vector.load %arg4[%c0_6, %c0_7] : memref<1x128xf32, #tpu.memory_space<vmem>>, vector<1x128xf32>
    %6 = vector.broadcast %5 : vector<1x128xf32> to vector<328x128xf32>
    %7 = arith.addf %4, %6 : vector<328x128xf32>
    %cst_8 = arith.constant 0.000000e+00 : f32
    %8 = vector.broadcast %cst_8 : f32 to vector<328x128xf32>
    %9 = arith.maximumf %7, %8 : vector<328x128xf32>
    %10 = vector.broadcast %2 : vector<328x1xf32> to vector<328x128xf32>
    %11 = arith.mulf %9, %10 : vector<328x128xf32>
    %cst_9 = arith.constant 0.000000e+00 : bf16
    %12 = vector.broadcast %cst_9 : bf16 to vector<24x128xbf16>
    %c0_10 = arith.constant 0 : index
    %c0_11 = arith.constant 0 : index
    %13 = vector.load %arg12[%c0_10, %c0_11] : memref<376x128xbf16, #tpu.memory_space<vmem>>, vector<24x128xbf16>
    tpu.vector_store %arg12[%c0_10, %c0_11], %12 {strides = array<i32>} : memref<376x128xbf16, #tpu.memory_space<vmem>>, vector<24x128xbf16>,
    %cst_12 = arith.constant 0.000000e+00 : bf16
    %14 = vector.broadcast %cst_12 : bf16 to vector<24x128xbf16>
    %c352 = arith.constant 352 : index
    %c0_13 = arith.constant 0 : index
    %15 = vector.load %arg12[%c352, %c0_13] : memref<376x128xbf16, #tpu.memory_space<vmem>>, vector<24x128xbf16>
    tpu.vector_store %arg12[%c352, %c0_13], %14 {strides = array<i32>} : memref<376x128xbf16, #tpu.memory_space<vmem>>, vector<24x128xbf16>,
    %16 = arith.truncf %11 : vector<328x128xf32> to vector<328x128xbf16>
    %c24 = arith.constant 24 : index
    %c0_14 = arith.constant 0 : index
    %17 = vector.load %arg12[%c24, %c0_14] : memref<376x128xbf16, #tpu.memory_space<vmem>>, vector<328x128xbf16>
    tpu.vector_store %arg12[%c24, %c0_14], %16 {strides = array<i32>} : memref<376x128xbf16, #tpu.memory_space<vmem>>, vector<328x128xbf16>,
    %c5 = arith.constant 5 : index
    %c0_15 = arith.constant 0 : index
    %18 = vector.load %arg12[%c5, %c0_15] : memref<376x128xbf16, #tpu.memory_space<vmem>>, vector<328x128xbf16>
    %c0_16 = arith.constant 0 : index
    %c0_17 = arith.constant 0 : index
    %c0_18 = arith.constant 0 : index
    %19 = vector.load %arg5[%c0_16, %c0_17, %c0_18] : memref<9x128x128xbf16, #tpu.memory_space<vmem>>, vector<1x128x128xbf16>
    %20 = vector.shape_cast %19 : vector<1x128x128xbf16> to vector<128x128xbf16>
    %cst_19 = arith.constant dense<0.000000e+00> : vector<328x128xf32>
    %21 = tpu.matmul %18, %20, %cst_19 {dimension_numbers = #tpu.dot_dimension_numbers<[1], [0], [0], [1], [0, 0, 1, 1], [], []>} : vector<328x128xbf16>, vector<128x128xbf16>, vector<328x128xf32> -> vector<328x128xf32>
    %c6 = arith.constant 6 : index
    %c0_20 = arith.constant 0 : index
    %22 = vector.load %arg12[%c6, %c0_20] : memref<376x128xbf16, #tpu.memory_space<vmem>>, vector<328x128xbf16>
    %c1 = arith.constant 1 : index
    %c0_21 = arith.constant 0 : index
    %c0_22 = arith.constant 0 : index
    %23 = vector.load %arg5[%c1, %c0_21, %c0_22] : memref<9x128x128xbf16, #tpu.memory_space<vmem>>, vector<1x128x128xbf16>
    %24 = vector.shape_cast %23 : vector<1x128x128xbf16> to vector<128x128xbf16>
    %cst_23 = arith.constant dense<0.000000e+00> : vector<328x128xf32>
    %25 = tpu.matmul %22, %24, %cst_23 {dimension_numbers = #tpu.dot_dimension_numbers<[1], [0], [0], [1], [0, 0, 1, 1], [], []>} : vector<328x128xbf16>, vector<128x128xbf16>, vector<328x128xf32> -> vector<328x128xf32>
    %26 = arith.addf %21, %25 : vector<328x128xf32>
    %c7 = arith.constant 7 : index
    %c0_24 = arith.constant 0 : index
    %27 = vector.load %arg12[%c7, %c0_24] : memref<376x128xbf16, #tpu.memory_space<vmem>>, vector<328x128xbf16>
    %c2 = arith.constant 2 : index
    %c0_25 = arith.constant 0 : index
    %c0_26 = arith.constant 0 : index
    %28 = vector.load %arg5[%c2, %c0_25, %c0_26] : memref<9x128x128xbf16, #tpu.memory_space<vmem>>, vector<1x128x128xbf16>
    %29 = vector.shape_cast %28 : vector<1x128x128xbf16> to vector<128x128xbf16>
    %cst_27 = arith.constant dense<0.000000e+00> : vector<328x128xf32>
    %30 = tpu.matmul %27, %29, %cst_27 {dimension_numbers = #tpu.dot_dimension_numbers<[1], [0], [0], [1], [0, 0, 1, 1], [], []>} : vector<328x128xbf16>, vector<128x128xbf16>, vector<328x128xf32> -> vector<328x128xf32>
    %31 = arith.addf %26, %30 : vector<328x128xf32>
    %c23 = arith.constant 23 : index
    %c0_28 = arith.constant 0 : index
    %32 = vector.load %arg12[%c23, %c0_28] : memref<376x128xbf16, #tpu.memory_space<vmem>>, vector<328x128xbf16>
    %c3 = arith.constant 3 : index
    %c0_29 = arith.constant 0 : index
    %c0_30 = arith.constant 0 : index
    %33 = vector.load %arg5[%c3, %c0_29, %c0_30] : memref<9x128x128xbf16, #tpu.memory_space<vmem>>, vector<1x128x128xbf16>
    %34 = vector.shape_cast %33 : vector<1x128x128xbf16> to vector<128x128xbf16>
    %cst_31 = arith.constant dense<0.000000e+00> : vector<328x128xf32>
    %35 = tpu.matmul %32, %34, %cst_31 {dimension_numbers = #tpu.dot_dimension_numbers<[1], [0], [0], [1], [0, 0, 1, 1], [], []>} : vector<328x128xbf16>, vector<128x128xbf16>, vector<328x128xf32> -> vector<328x128xf32>
    %36 = arith.addf %31, %35 : vector<328x128xf32>
    %c24_32 = arith.constant 24 : index
    %c0_33 = arith.constant 0 : index
    %37 = vector.load %arg12[%c24_32, %c0_33] : memref<376x128xbf16, #tpu.memory_space<vmem>>, vector<328x128xbf16>
    %c4 = arith.constant 4 : index
    %c0_34 = arith.constant 0 : index
    %c0_35 = arith.constant 0 : index
    %38 = vector.load %arg5[%c4, %c0_34, %c0_35] : memref<9x128x128xbf16, #tpu.memory_space<vmem>>, vector<1x128x128xbf16>
    %39 = vector.shape_cast %38 : vector<1x128x128xbf16> to vector<128x128xbf16>
    %cst_36 = arith.constant dense<0.000000e+00> : vector<328x128xf32>
    %40 = tpu.matmul %37, %39, %cst_36 {dimension_numbers = #tpu.dot_dimension_numbers<[1], [0], [0], [1], [0, 0, 1, 1], [], []>} : vector<328x128xbf16>, vector<128x128xbf16>, vector<328x128xf32> -> vector<328x128xf32>
    %41 = arith.addf %36, %40 : vector<328x128xf32>
    %c25 = arith.constant 25 : index
    %c0_37 = arith.constant 0 : index
    %42 = vector.load %arg12[%c25, %c0_37] : memref<376x128xbf16, #tpu.memory_space<vmem>>, vector<328x128xbf16>
    %c5_38 = arith.constant 5 : index
    %c0_39 = arith.constant 0 : index
    %c0_40 = arith.constant 0 : index
    %43 = vector.load %arg5[%c5_38, %c0_39, %c0_40] : memref<9x128x128xbf16, #tpu.memory_space<vmem>>, vector<1x128x128xbf16>
    %44 = vector.shape_cast %43 : vector<1x128x128xbf16> to vector<128x128xbf16>
    %cst_41 = arith.constant dense<0.000000e+00> : vector<328x128xf32>
    %45 = tpu.matmul %42, %44, %cst_41 {dimension_numbers = #tpu.dot_dimension_numbers<[1], [0], [0], [1], [0, 0, 1, 1], [], []>} : vector<328x128xbf16>, vector<128x128xbf16>, vector<328x128xf32> -> vector<328x128xf32>
    %46 = arith.addf %41, %45 : vector<328x128xf32>
    %c41 = arith.constant 41 : index
    %c0_42 = arith.constant 0 : index
    %47 = vector.load %arg12[%c41, %c0_42] : memref<376x128xbf16, #tpu.memory_space<vmem>>, vector<328x128xbf16>
    %c6_43 = arith.constant 6 : index
    %c0_44 = arith.constant 0 : index
    %c0_45 = arith.constant 0 : index
    %48 = vector.load %arg5[%c6_43, %c0_44, %c0_45] : memref<9x128x128xbf16, #tpu.memory_space<vmem>>, vector<1x128x128xbf16>
    %49 = vector.shape_cast %48 : vector<1x128x128xbf16> to vector<128x128xbf16>
    %cst_46 = arith.constant dense<0.000000e+00> : vector<328x128xf32>
    %50 = tpu.matmul %47, %49, %cst_46 {dimension_numbers = #tpu.dot_dimension_numbers<[1], [0], [0], [1], [0, 0, 1, 1], [], []>} : vector<328x128xbf16>, vector<128x128xbf16>, vector<328x128xf32> -> vector<328x128xf32>
    %51 = arith.addf %46, %50 : vector<328x128xf32>
    %c42 = arith.constant 42 : index
    %c0_47 = arith.constant 0 : index
    %52 = vector.load %arg12[%c42, %c0_47] : memref<376x128xbf16, #tpu.memory_space<vmem>>, vector<328x128xbf16>
    %c7_48 = arith.constant 7 : index
    %c0_49 = arith.constant 0 : index
    %c0_50 = arith.constant 0 : index
    %53 = vector.load %arg5[%c7_48, %c0_49, %c0_50] : memref<9x128x128xbf16, #tpu.memory_space<vmem>>, vector<1x128x128xbf16>
    %54 = vector.shape_cast %53 : vector<1x128x128xbf16> to vector<128x128xbf16>
    %cst_51 = arith.constant dense<0.000000e+00> : vector<328x128xf32>
    %55 = tpu.matmul %52, %54, %cst_51 {dimension_numbers = #tpu.dot_dimension_numbers<[1], [0], [0], [1], [0, 0, 1, 1], [], []>} : vector<328x128xbf16>, vector<128x128xbf16>, vector<328x128xf32> -> vector<328x128xf32>
    %56 = arith.addf %51, %55 : vector<328x128xf32>
    %c43 = arith.constant 43 : index
    %c0_52 = arith.constant 0 : index
    %57 = vector.load %arg12[%c43, %c0_52] : memref<376x128xbf16, #tpu.memory_space<vmem>>, vector<328x128xbf16>
    %c8 = arith.constant 8 : index
    %c0_53 = arith.constant 0 : index
    %c0_54 = arith.constant 0 : index
    %58 = vector.load %arg5[%c8, %c0_53, %c0_54] : memref<9x128x128xbf16, #tpu.memory_space<vmem>>, vector<1x128x128xbf16>
    %59 = vector.shape_cast %58 : vector<1x128x128xbf16> to vector<128x128xbf16>
    %cst_55 = arith.constant dense<0.000000e+00> : vector<328x128xf32>
    %60 = tpu.matmul %57, %59, %cst_55 {dimension_numbers = #tpu.dot_dimension_numbers<[1], [0], [0], [1], [0, 0, 1, 1], [], []>} : vector<328x128xbf16>, vector<128x128xbf16>, vector<328x128xf32> -> vector<328x128xf32>
    %61 = arith.addf %56, %60 : vector<328x128xf32>
    %c0_56 = arith.constant 0 : index
    %c0_57 = arith.constant 0 : index
    %62 = vector.load %arg6[%c0_56, %c0_57] : memref<1x128xf32, #tpu.memory_space<vmem>>, vector<1x128xf32>
    %63 = vector.broadcast %62 : vector<1x128xf32> to vector<328x128xf32>
    %64 = arith.addf %61, %63 : vector<328x128xf32>
    %cst_58 = arith.constant 0.000000e+00 : f32
    %65 = vector.broadcast %cst_58 : f32 to vector<328x128xf32>
    %66 = arith.maximumf %64, %65 : vector<328x128xf32>
    %67 = arith.truncf %66 : vector<328x128xf32> to vector<328x128xbf16>
    %c0_59 = arith.constant 0 : index
    %c0_60 = arith.constant 0 : index
    %68 = vector.load %arg7[%c0_59, %c0_60] : memref<128x128xbf16, #tpu.memory_space<vmem>>, vector<128x128xbf16>
    %cst_61 = arith.constant dense<0.000000e+00> : vector<328x128xf32>
    %69 = tpu.matmul %67, %68, %cst_61 {dimension_numbers = #tpu.dot_dimension_numbers<[1], [0], [0], [1], [0, 0, 1, 1], [], []>} : vector<328x128xbf16>, vector<128x128xbf16>, vector<328x128xf32> -> vector<328x128xf32>
    %c0_62 = arith.constant 0 : index
    %c0_63 = arith.constant 0 : index
    %70 = vector.load %arg8[%c0_62, %c0_63] : memref<1x128xf32, #tpu.memory_space<vmem>>, vector<1x128xf32>
    %71 = vector.broadcast %70 : vector<1x128xf32> to vector<328x128xf32>
    %72 = arith.addf %69, %71 : vector<328x128xf32>
    %c0_64 = arith.constant 0 : index
    %c0_65 = arith.constant 0 : index
    %73 = vector.load %arg9[%c0_64, %c0_65] : memref<128x128xbf16, #tpu.memory_space<vmem>>, vector<128x128xbf16>
    %cst_66 = arith.constant dense<0.000000e+00> : vector<328x128xf32>
    %74 = tpu.matmul %1, %73, %cst_66 {dimension_numbers = #tpu.dot_dimension_numbers<[1], [0], [0], [1], [0, 0, 1, 1], [], []>} : vector<328x128xbf16>, vector<128x128xbf16>, vector<328x128xf32> -> vector<328x128xf32>
    %c0_67 = arith.constant 0 : index
    %c0_68 = arith.constant 0 : index
    %75 = vector.load %arg10[%c0_67, %c0_68] : memref<1x128xf32, #tpu.memory_space<vmem>>, vector<1x128xf32>
    %76 = vector.broadcast %75 : vector<1x128xf32> to vector<328x128xf32>
    %77 = arith.addf %74, %76 : vector<328x128xf32>
    %78 = arith.addf %72, %77 : vector<328x128xf32>
    %cst_69 = arith.constant 0.000000e+00 : f32
    %79 = vector.broadcast %cst_69 : f32 to vector<328x128xf32>
    %80 = arith.maximumf %78, %79 : vector<328x128xf32>
    %81 = arith.truncf %80 : vector<328x128xf32> to vector<328x128xbf16>
    %c0_70 = arith.constant 0 : index
    %c0_71 = arith.constant 0 : index
    %c0_72 = arith.constant 0 : index
    %82 = vector.load %arg11[%c0_70, %c0_71, %c0_72] : memref<1x328x128xbf16, #tpu.memory_space<vmem>>, vector<1x328x128xbf16>
    %83 = vector.shape_cast %82 : vector<1x328x128xbf16> to vector<328x128xbf16>
    %84 = vector.shape_cast %81 : vector<328x128xbf16> to vector<1x328x128xbf16>
    tpu.vector_store %arg11[%c0_70, %c0_71, %c0_72], %84 {strides = array<i32>} : memref<1x328x128xbf16, #tpu.memory_space<vmem>>, vector<1x328x128xbf16>,
    return
  }
  func.func @transform_0(%arg0: i32) -> (i32, i32, i32) {
    %c0_i32 = arith.constant 0 : i32
    %c0_i32_0 = arith.constant 0 : i32
    %c0_i32_1 = arith.constant 0 : i32
    return %arg0, %c0_i32, %c0_i32_0 : i32, i32, i32
  }
  func.func @transform_1(%arg0: i32) -> (i32, i32) {
    %c0_i32 = arith.constant 0 : i32
    %c0_i32_0 = arith.constant 0 : i32
    %c0_i32_1 = arith.constant 0 : i32
    return %c0_i32, %c0_i32_0 : i32, i32
  }
  func.func @transform_2(%arg0: i32) -> (i32, i32) {
    %c0_i32 = arith.constant 0 : i32
    %c0_i32_0 = arith.constant 0 : i32
    %c0_i32_1 = arith.constant 0 : i32
    return %c0_i32, %c0_i32_0 : i32, i32
  }
  func.func @transform_3(%arg0: i32) -> (i32, i32) {
    %c0_i32 = arith.constant 0 : i32
    %c0_i32_0 = arith.constant 0 : i32
    %c0_i32_1 = arith.constant 0 : i32
    return %c0_i32, %c0_i32_0 : i32, i32
  }
  func.func @transform_4(%arg0: i32) -> (i32, i32, i32) {
    %c0_i32 = arith.constant 0 : i32
    %c0_i32_0 = arith.constant 0 : i32
    %c0_i32_1 = arith.constant 0 : i32
    %c0_i32_2 = arith.constant 0 : i32
    return %c0_i32, %c0_i32_0, %c0_i32_1 : i32, i32, i32
  }
  func.func @transform_5(%arg0: i32) -> (i32, i32) {
    %c0_i32 = arith.constant 0 : i32
    %c0_i32_0 = arith.constant 0 : i32
    %c0_i32_1 = arith.constant 0 : i32
    return %c0_i32, %c0_i32_0 : i32, i32
  }
  func.func @transform_6(%arg0: i32) -> (i32, i32) {
    %c0_i32 = arith.constant 0 : i32
    %c0_i32_0 = arith.constant 0 : i32
    %c0_i32_1 = arith.constant 0 : i32
    return %c0_i32, %c0_i32_0 : i32, i32
  }
  func.func @transform_7(%arg0: i32) -> (i32, i32) {
    %c0_i32 = arith.constant 0 : i32
    %c0_i32_0 = arith.constant 0 : i32
    %c0_i32_1 = arith.constant 0 : i32
    return %c0_i32, %c0_i32_0 : i32, i32
  }
  func.func @transform_8(%arg0: i32) -> (i32, i32) {
    %c0_i32 = arith.constant 0 : i32
    %c0_i32_0 = arith.constant 0 : i32
    %c0_i32_1 = arith.constant 0 : i32
    return %c0_i32, %c0_i32_0 : i32, i32
  }
  func.func @transform_9(%arg0: i32) -> (i32, i32) {
    %c0_i32 = arith.constant 0 : i32
    %c0_i32_0 = arith.constant 0 : i32
    %c0_i32_1 = arith.constant 0 : i32
    return %c0_i32, %c0_i32_0 : i32, i32
  }
  func.func @transform_10(%arg0: i32) -> (i32, i32, i32) {
    %c0_i32 = arith.constant 0 : i32
    %c0_i32_0 = arith.constant 0 : i32
    %c0_i32_1 = arith.constant 0 : i32
    return %arg0, %c0_i32, %c0_i32_0 : i32, i32, i32
  }
}

</mosaic_0001>

<llo_original>
// kernel: bottleneck_forward.1
$region0: #{bottleneck_forward.1}
  #allocation0 [shape = 'u32[]', space=smem, size = 0x4, offset = 0x4, fixed_abs, tag = 'smem constant byte address 0x4 - core index']
  #allocation1 [shape = 'u32[72,128]{1,0:T(1,128)}', space=vmem, size = 0x9000, scoped, tag = 'internal scratch']
  #allocation2 [shape = 'bf16[376,128]{1,0:T(8,128)(2,1)}', space=vmem, size = 0x17800, scoped, tag = 'scratch operand']
  %s0 = inlined_call_operand.vmem [shape: bf16[2,328,128], index: 0, kind: input, shape index: {}]
  %s1 = inlined_call_operand.vmem [shape: f32[328,1], index: 1, kind: input, shape index: {}]
  %s2 = inlined_call_operand.vmem [shape: bf16[128,128], index: 2, kind: input, shape index: {}]
  %s3 = inlined_call_operand.vmem [shape: f32[1,128], index: 3, kind: input, shape index: {}]
  %s4 = inlined_call_operand.vmem [shape: bf16[9,128,128], index: 4, kind: input, shape index: {}]
  %s5 = inlined_call_operand.vmem [shape: f32[1,128], index: 5, kind: input, shape index: {}]
  %s6 = inlined_call_operand.vmem [shape: bf16[128,128], index: 6, kind: input, shape index: {}]
  %s7 = inlined_call_operand.vmem [shape: f32[1,128], index: 7, kind: input, shape index: {}]
  %s8 = inlined_call_operand.vmem [shape: bf16[128,128], index: 8, kind: input, shape index: {}]
  %s9 = inlined_call_operand.vmem [shape: f32[1,128], index: 9, kind: input, shape index: {}]
  %s10 = inlined_call_operand.vmem [shape: bf16[2,328,128], index: 10, kind: output, shape index: {}]
  %s11 = sld [smem:[#allocation0]]
  $region73: #{bottleneck_forward.1} parent=0
    _
  %s13 = ssub.s32 1, %s11
  %s14 = scalar_select 0, %s13, %s11
  loop: start=0, step=1, limit=4
  $region2: #{bottleneck_forward.1} parent=0 // loop_pre_header
    _
  $region3: #{bottleneck_forward.1} parent=0 // loop_header
    %s16 = sphi 0, %s20
    %p17 = scmp.ge.s32.totalorder %s16, 4
    %s26 = sphi 0, %s28
    %s29 = sphi 0, %s26
    %s30 = sphi 0, %s29
    %s46 = sphi 0, %s30
    %s50 = sphi 0, %s50
    %s52 = sphi 0, %s50
    %s53 = sphi 0, %s52
    %s67 = sphi 0, %s53
    %s71 = sphi 0, %s71
    %s73 = sphi 0, %s71
    %s74 = sphi 0, %s73
    %s88 = sphi 0, %s74
    %s92 = sphi 0, %s92
    %s94 = sphi 0, %s92
    %s95 = sphi 0, %s94
    %s109 = sphi 0, %s95
    %s113 = sphi 0, %s113
    %s115 = sphi 0, %s113
    %s116 = sphi 0, %s115
    %s130 = sphi 0, %s116
    %s134 = sphi 0, %s134
    %s136 = sphi 0, %s134
    %s137 = sphi 0, %s136
    %s151 = sphi 0, %s137
    %s155 = sphi 0, %s155
    %s157 = sphi 0, %s155
    %s158 = sphi 0, %s157
    %s172 = sphi 0, %s158
    %s176 = sphi 0, %s176
    %s178 = sphi 0, %s176
    %s179 = sphi 0, %s178
    %s193 = sphi 0, %s179
    %s197 = sphi 0, %s197
    %s199 = sphi 0, %s197
    %s200 = sphi 0, %s199
    %s214 = sphi 0, %s200
    %s218 = sphi 0, %s218
    %s220 = sphi 0, %s218
    %s221 = sphi 0, %s220
    %s235 = sphi 0, %s221
    %s241 = sphi 0, %s243
    %s244 = sphi 0, %s241
    %s245 = sphi 0, %s244
    %s261 = sphi 0, %s245
  $region4: #{bottleneck_forward.1} parent=0 // loop_header_branch
    %19 = sbr.rel (%p17) target = $region8
  $region5: #{bottleneck_forward.1} parent=0 // loop_body
    %s21 = ssub.s32 %s16, 1
    %s22 = ssub.s32 %s16, 2
    %s23 = sadd.s32 %s16, 1
    %s24 = ssub.s32 %s16, %s23
    %p25 = scmp.eq.s32.totalorder %s24, 0
    %s27 = sadd.s32 %s26, 1
    %s28 = scalar_select %p25, %s26, %s27
    %p31 = pneg %p25
    %p32 = scmp.eq.s32.totalorder %s16, 1
    %p33 = por %p31, %p32
    %p34 = scmp.ne.s32.totalorder %s26, %s29
    %p35 = scmp.eq.s32.totalorder %s16, 0
    %p36 = por %p34, %p35
    %p37 = scmp.ne.s32.totalorder %s26, %s29
    %p38 = scmp.eq.s32.totalorder %s21, 1
    %p39 = por %p37, %p38
    %p40 = scmp.ne.s32.totalorder %s29, %s30
    %p41 = scmp.eq.s32.totalorder %s21, 0
    %p42 = por %p40, %p41
    %p43 = scmp.ne.s32.totalorder %s29, %s30
    %p44 = scmp.eq.s32.totalorder %s22, 1
    %p45 = por %p43, %p44
    %p47 = scmp.ne.s32.totalorder %s30, %s46
    %p48 = scmp.eq.s32.totalorder %s22, 0
    %p49 = por %p47, %p48
    %s51 = sadd.s32 %s50, 1
    %p54 = scmp.eq.s32.totalorder %s16, 1
    %p55 = scmp.ne.s32.totalorder %s50, %s52
    %p56 = scmp.eq.s32.totalorder %s16, 0
    %p57 = por %p55, %p56
    %p58 = scmp.ne.s32.totalorder %s50, %s52
    %p59 = scmp.eq.s32.totalorder %s21, 1
    %p60 = por %p58, %p59
    %p61 = scmp.ne.s32.totalorder %s52, %s53
    %p62 = scmp.eq.s32.totalorder %s21, 0
    %p63 = por %p61, %p62
    %p64 = scmp.ne.s32.totalorder %s52, %s53
    %p65 = scmp.eq.s32.totalorder %s22, 1
    %p66 = por %p64, %p65
    %p68 = scmp.ne.s32.totalorder %s53, %s67
    %p69 = scmp.eq.s32.totalorder %s22, 0
    %p70 = por %p68, %p69
    %s72 = sadd.s32 %s71, 1
    %p75 = scmp.eq.s32.totalorder %s16, 1
    %p76 = scmp.ne.s32.totalorder %s71, %s73
    %p77 = scmp.eq.s32.totalorder %s16, 0
    %p78 = por %p76, %p77
    %p79 = scmp.ne.s32.totalorder %s71, %s73
    %p80 = scmp.eq.s32.totalorder %s21, 1
    %p81 = por %p79, %p80
    %p82 = scmp.ne.s32.totalorder %s73, %s74
    %p83 = scmp.eq.s32.totalorder %s21, 0
    %p84 = por %p82, %p83
    %p85 = scmp.ne.s32.totalorder %s73, %s74
    %p86 = scmp.eq.s32.totalorder %s22, 1
    %p87 = por %p85, %p86
    %p89 = scmp.ne.s32.totalorder %s74, %s88
    %p90 = scmp.eq.s32.totalorder %s22, 0
    %p91 = por %p89, %p90
    %s93 = sadd.s32 %s92, 1
    %p96 = scmp.eq.s32.totalorder %s16, 1
    %p97 = scmp.ne.s32.totalorder %s92, %s94
    %p98 = scmp.eq.s32.totalorder %s16, 0
    %p99 = por %p97, %p98
    %p100 = scmp.ne.s32.totalorder %s92, %s94
    %p101 = scmp.eq.s32.totalorder %s21, 1
    %p102 = por %p100, %p101
    %p103 = scmp.ne.s32.totalorder %s94, %s95
    %p104 = scmp.eq.s32.totalorder %s21, 0
    %p105 = por %p103, %p104
    %p106 = scmp.ne.s32.totalorder %s94, %s95
    %p107 = scmp.eq.s32.totalorder %s22, 1
    %p108 = por %p106, %p107
    %p110 = scmp.ne.s32.totalorder %s95, %s109
    %p111 = scmp.eq.s32.totalorder %s22, 0
    %p112 = por %p110, %p111
    %s114 = sadd.s32 %s113, 1
    %p117 = scmp.eq.s32.totalorder %s16, 1
    %p118 = scmp.ne.s32.totalorder %s113, %s115
    %p119 = scmp.eq.s32.totalorder %s16, 0
    %p120 = por %p118, %p119
    %p121 = scmp.ne.s32.totalorder %s113, %s115
    %p122 = scmp.eq.s32.totalorder %s21, 1
    %p123 = por %p121, %p122
    %p124 = scmp.ne.s32.totalorder %s115, %s116
    %p125 = scmp.eq.s32.totalorder %s21, 0
    %p126 = por %p124, %p125
    %p127 = scmp.ne.s32.totalorder %s115, %s116
    %p128 = scmp.eq.s32.totalorder %s22, 1
    %p129 = por %p127, %p128
    %p131 = scmp.ne.s32.totalorder %s116, %s130
    %p132 = scmp.eq.s32.totalorder %s22, 0
    %p133 = por %p131, %p132
    %s135 = sadd.s32 %s134, 1
    %p138 = scmp.eq.s32.totalorder %s16, 1
    %p139 = scmp.ne.s32.totalorder %s134, %s136
    %p140 = scmp.eq.s32.totalorder %s16, 0
    %p141 = por %p139, %p140
    %p142 = scmp.ne.s32.totalorder %s134, %s136
    %p143 = scmp.eq.s32.totalorder %s21, 1
    %p144 = por %p142, %p143
    %p145 = scmp.ne.s32.totalorder %s136, %s137
    %p146 = scmp.eq.s32.totalorder %s21, 0
    %p147 = por %p145, %p146
    %p148 = scmp.ne.s32.totalorder %s136, %s137
    %p149 = scmp.eq.s32.totalorder %s22, 1
    %p150 = por %p148, %p149
    %p152 = scmp.ne.s32.totalorder %s137, %s151
    %p153 = scmp.eq.s32.totalorder %s22, 0
    %p154 = por %p152, %p153
    %s156 = sadd.s32 %s155, 1
    %p159 = scmp.eq.s32.totalorder %s16, 1
    %p160 = scmp.ne.s32.totalorder %s155, %s157
    %p161 = scmp.eq.s32.totalorder %s16, 0
    %p162 = por %p160, %p161
    %p163 = scmp.ne.s32.totalorder %s155, %s157
    %p164 = scmp.eq.s32.totalorder %s21, 1
    %p165 = por %p163, %p164
    %p166 = scmp.ne.s32.totalorder %s157, %s158
    %p167 = scmp.eq.s32.totalorder %s21, 0
    %p168 = por %p166, %p167
    %p169 = scmp.ne.s32.totalorder %s157, %s158
    %p170 = scmp.eq.s32.totalorder %s22, 1
    %p171 = por %p169, %p170
    %p173 = scmp.ne.s32.totalorder %s158, %s172
    %p174 = scmp.eq.s32.totalorder %s22, 0
    %p175 = por %p173, %p174
    %s177 = sadd.s32 %s176, 1
    %p180 = scmp.eq.s32.totalorder %s16, 1
    %p181 = scmp.ne.s32.totalorder %s176, %s178
    %p182 = scmp.eq.s32.totalorder %s16, 0
    %p183 = por %p181, %p182
    %p184 = scmp.ne.s32.totalorder %s176, %s178
    %p185 = scmp.eq.s32.totalorder %s21, 1
    %p186 = por %p184, %p185
    %p187 = scmp.ne.s32.totalorder %s178, %s179
    %p188 = scmp.eq.s32.totalorder %s21, 0
    %p189 = por %p187, %p188
    %p190 = scmp.ne.s32.totalorder %s178, %s179
    %p191 = scmp.eq.s32.totalorder %s22, 1
    %p192 = por %p190, %p191
    %p194 = scmp.ne.s32.totalorder %s179, %s193
    %p195 = scmp.eq.s32.totalorder %s22, 0
    %p196 = por %p194, %p195
    %s198 = sadd.s32 %s197, 1
    %p201 = scmp.eq.s32.totalorder %s16, 1
    %p202 = scmp.ne.s32.totalorder %s197, %s199
    %p203 = scmp.eq.s32.totalorder %s16, 0
    %p204 = por %p202, %p203
    %p205 = scmp.ne.s32.totalorder %s197, %s199
    %p206 = scmp.eq.s32.totalorder %s21, 1
    %p207 = por %p205, %p206
    %p208 = scmp.ne.s32.totalorder %s199, %s200
    %p209 = scmp.eq.s32.totalorder %s21, 0
    %p210 = por %p208, %p209
    %p211 = scmp.ne.s32.totalorder %s199, %s200
    %p212 = scmp.eq.s32.totalorder %s22, 1
    %p213 = por %p211, %p212
    %p215 = scmp.ne.s32.totalorder %s200, %s214
    %p216 = scmp.eq.s32.totalorder %s22, 0
    %p217 = por %p215, %p216
    %s219 = sadd.s32 %s218, 1
    %p222 = scmp.eq.s32.totalorder %s16, 1
    %p223 = scmp.ne.s32.totalorder %s218, %s220
    %p224 = scmp.eq.s32.totalorder %s16, 0
    %p225 = por %p223, %p224
    %p226 = scmp.ne.s32.totalorder %s218, %s220
    %p227 = scmp.eq.s32.totalorder %s21, 1
    %p228 = por %p226, %p227
    %p229 = scmp.ne.s32.totalorder %s220, %s221
    %p230 = scmp.eq.s32.totalorder %s21, 0
    %p231 = por %p229, %p230
    %p232 = scmp.ne.s32.totalorder %s220, %s221
    %p233 = scmp.eq.s32.totalorder %s22, 1
    %p234 = por %p232, %p233
    %p236 = scmp.ne.s32.totalorder %s221, %s235
    %p237 = scmp.eq.s32.totalorder %s22, 0
    %p238 = por %p236, %p237
    %s239 = ssub.s32 %s16, %s23
    %p240 = scmp.eq.s32.totalorder %s239, 0
    %s242 = sadd.s32 %s241, 1
    %s243 = scalar_select %p240, %s241, %s242
    %p246 = pneg %p240
    %p247 = scmp.eq.s32.totalorder %s16, 1
    %p248 = por %p246, %p247
    %p249 = scmp.ne.s32.totalorder %s241, %s244
    %p250 = scmp.eq.s32.totalorder %s16, 0
    %p251 = por %p249, %p250
    %p252 = scmp.ne.s32.totalorder %s241, %s244
    %p253 = scmp.eq.s32.totalorder %s21, 1
    %p254 = por %p252, %p253
    %p255 = scmp.ne.s32.totalorder %s244, %s245
    %p256 = scmp.eq.s32.totalorder %s21, 0
    %p257 = por %p255, %p256
    %p258 = scmp.ne.s32.totalorder %s244, %s245
    %p259 = scmp.eq.s32.totalorder %s22, 1
    %p260 = por %p258, %p259
    %p262 = scmp.ne.s32.totalorder %s245, %s261
    %p263 = scmp.eq.s32.totalorder %s22, 0
    %p264 = por %p262, %p263
    %p265 = scmp.le.s32.totalorder 1, %s16
    %p266 = scmp.lt.s32.totalorder %s16, 3
    %p267 = pnand %p265, %p266
    %p268 = pneg %p267
    // Predicated region
    $region9: #{bottleneck_forward.1} parent=5 // pred_check
      _
    $region10: #{bottleneck_forward.1} parent=5 // pred_check_branch
      %270 = sbr.rel (%p267) target = $region12
    $region11: #{bottleneck_forward.1} parent=5 // pred_region
      %s271 = ssub.s32 %s16, 1
      // Predicated region
      $region13: #{bottleneck_forward.1} parent=11 // pred_check
        %p272 = pneg %p63
      $region14: #{bottleneck_forward.1} parent=11 // pred_check_branch
        %274 = sbr.rel (%p272) target = $region16
      $region15: #{bottleneck_forward.1} parent=11 // pred_region
        _
      $region16: #{bottleneck_forward.1} parent=11 // pred_fallthru
        _
      // Predicated region
      $region17: #{bottleneck_forward.1} parent=11 // pred_check
        %p275 = pneg %p84
      $region18: #{bottleneck_forward.1} parent=11 // pred_check_branch
        %277 = sbr.rel (%p275) target = $region20
      $region19: #{bottleneck_forward.1} parent=11 // pred_region
        _
      $region20: #{bottleneck_forward.1} parent=11 // pred_fallthru
        _
      // Predicated region
      $region21: #{bottleneck_forward.1} parent=11 // pred_check
        %p278 = pneg %p105
      $region22: #{bottleneck_forward.1} parent=11 // pred_check_branch
        %280 = sbr.rel (%p278) target = $region24
      $region23: #{bottleneck_forward.1} parent=11 // pred_region
        _
      $region24: #{bottleneck_forward.1} parent=11 // pred_fallthru
        _
      // Predicated region
      $region25: #{bottleneck_forward.1} parent=11 // pred_check
        %p281 = pneg %p126
      $region26: #{bottleneck_forward.1} parent=11 // pred_check_branch
        %283 = sbr.rel (%p281) target = $region28
      $region27: #{bottleneck_forward.1} parent=11 // pred_region
        _
      $region28: #{bottleneck_forward.1} parent=11 // pred_fallthru
        _
      // Predicated region
      $region29: #{bottleneck_forward.1} parent=11 // pred_check
        %p284 = pneg %p147
      $region30: #{bottleneck_forward.1} parent=11 // pred_check_branch
        %286 = sbr.rel (%p284) target = $region32
      $region31: #{bottleneck_forward.1} parent=11 // pred_region
        _
      $region32: #{bottleneck_forward.1} parent=11 // pred_fallthru
        _
      // Predicated region
      $region33: #{bottleneck_forward.1} parent=11 // pred_check
        %p287 = pneg %p168
      $region34: #{bottleneck_forward.1} parent=11 // pred_check_branch
        %289 = sbr.rel (%p287) target = $region36
      $region35: #{bottleneck_forward.1} parent=11 // pred_region
        _
      $region36: #{bottleneck_forward.1} parent=11 // pred_fallthru
        _
      // Predicated region
      $region37: #{bottleneck_forward.1} parent=11 // pred_check
        %p290 = pneg %p189
      $region38: #{bottleneck_forward.1} parent=11 // pred_check_branch
        %292 = sbr.rel (%p290) target = $region40
      $region39: #{bottleneck_forward.1} parent=11 // pred_region
        _
      $region40: #{bottleneck_forward.1} parent=11 // pred_fallthru
        _
      // Predicated region
      $region41: #{bottleneck_forward.1} parent=11 // pred_check
        %p293 = pneg %p210
      $region42: #{bottleneck_forward.1} parent=11 // pred_check_branch
        %295 = sbr.rel (%p293) target = $region44
      $region43: #{bottleneck_forward.1} parent=11 // pred_region
        _
      $region44: #{bottleneck_forward.1} parent=11 // pred_fallthru
        _
      // Predicated region
      $region45: #{bottleneck_forward.1} parent=11 // pred_check
        %p296 = pneg %p231
      $region46: #{bottleneck_forward.1} parent=11 // pred_check_branch
        %298 = sbr.rel (%p296) target = $region48
      $region47: #{bottleneck_forward.1} parent=11 // pred_region
        _
      $region48: #{bottleneck_forward.1} parent=11 // pred_fallthru
        _
    $region12: #{bottleneck_forward.1} parent=5 // pred_fallthru
      _
    %p299 = scmp.lt.s32.totalorder %s16, 2
    // Predicated region
    $region49: #{bottleneck_forward.1} parent=5 // pred_check
      %p300 = pneg %p299
    $region50: #{bottleneck_forward.1} parent=5 // pred_check_branch
      %302 = sbr.rel (%p300) target = $region52
    $region51: #{bottleneck_forward.1} parent=5 // pred_region
      // Predicated region
      $region53: #{bottleneck_forward.1} parent=51 // pred_check
        %p303 = pneg %p36
      $region54: #{bottleneck_forward.1} parent=51 // pred_check_branch
        %305 = sbr.rel (%p303) target = $region56
      $region55: #{bottleneck_forward.1} parent=51 // pred_region
        %p306 = scmp.lt.s32.totalorder %s16, 1
        %s307 = scalar_select %p306, %s16, 1
        %s308 = smul.addr %s307, 41
        %s309 = smul.addr %s308, 4
        %s310 = scalar_lea.vmem %s0, %s309
      $region56: #{bottleneck_forward.1} parent=51 // pred_fallthru
        _
    $region52: #{bottleneck_forward.1} parent=5 // pred_fallthru
      _
    %p311 = scmp.le.s32.totalorder 1, %s16
    %p312 = scmp.lt.s32.totalorder %s16, 3
    %p313 = pnand %p311, %p312
    %p314 = pneg %p313
    // Predicated region
    $region57: #{bottleneck_forward.1} parent=5 // pred_check
      _
    $region58: #{bottleneck_forward.1} parent=5 // pred_check_branch
      %316 = sbr.rel (%p313) target = $region60
    $region59: #{bottleneck_forward.1} parent=5 // pred_region
      %s317 = ssub.s32 %s16, 1
      %p318 = scmp.lt.s32.totalorder %s21, 1
      %s319 = scalar_select %p318, %s21, 1
      %s320 = smul.addr %s319, 41
      %s321 = smul.addr %s320, 4
      %s322 = scalar_lea.vmem %s0, %s321
      %p323 = pneg %p42
      %p324 = pneg %p39
      %p325 = pneg %p63
      %p326 = pneg %p60
      %p327 = pneg %p84
      %p328 = pneg %p81
      %p329 = pneg %p105
      %p330 = pneg %p102
      %p331 = pneg %p126
      %p332 = pneg %p123
      %p333 = pneg %p147
      %p334 = pneg %p144
      %p335 = pneg %p168
      %p336 = pneg %p165
      %p337 = pneg %p189
      %p338 = pneg %p186
      %p339 = pneg %p210
      %p340 = pneg %p207
      %p341 = pneg %p231
      %p342 = pneg %p228
      %p343 = pneg %p257
      %p344 = pneg %p254
      %p345 = scmp.lt.s32.totalorder %s21, 1
      %s346 = scalar_select %p345, %s21, 1
      %s347 = smul.addr %s346, 41
      %s348 = smul.addr %s347, 4
      %s349 = scalar_lea.vmem %s10, %s348
      %p350 = scmp.lt.s32.totalorder %s21, 1
      %s351 = scalar_select %p350, %s21, 1
      %s352 = smul.addr %s351, 41
      %s353 = smul.addr %s352, 4
      %s354 = scalar_lea.vmem %s0, %s353
      %p355 = scmp.lt.s32.totalorder %s21, 1
      %s356 = scalar_select %p355, %s21, 1
      %s357 = smul.addr %s356, 41
      %s358 = smul.addr %s357, 4
      %s359 = scalar_lea.vmem %s10, %s358
      %v361 = vld [vmem:[%s354] sm:$0xf]
      %v362 = vld [vmem:[%s354 + $0x4] sm:$0xf]
      %v363 = vld [vmem:[%s354 + $0x8] sm:$0xf]
      %v364 = vld [vmem:[%s354 + $0xc] sm:$0xf]
      %v365 = vld [vmem:[%s354 + $0x10] sm:$0xf]
      %v366 = vld [vmem:[%s354 + $0x14] sm:$0xf]
      %v367 = vld [vmem:[%s354 + $0x18] sm:$0xf]
      %v368 = vld [vmem:[%s354 + $0x1c] sm:$0xf]
      %v369 = vld [vmem:[%s354 + $0x20] sm:$0xf]
      %v370 = vld [vmem:[%s354 + $0x24] sm:$0xf]
      %v371 = vld [vmem:[%s354 + $0x28] sm:$0xf]
      %v372 = vld [vmem:[%s354 + $0x2c] sm:$0xf]
      %v373 = vld [vmem:[%s354 + $0x30] sm:$0xf]
      %v374 = vld [vmem:[%s354 + $0x34] sm:$0xf]
      %v375 = vld [vmem:[%s354 + $0x38] sm:$0xf]
      %v376 = vld [vmem:[%s354 + $0x3c] sm:$0xf]
      %v377 = vld [vmem:[%s354 + $0x40] sm:$0xf]
      %v378 = vld [vmem:[%s354 + $0x44] sm:$0xf]
      %v379 = vld [vmem:[%s354 + $0x48] sm:$0xf]
      %v380 = vld [vmem:[%s354 + $0x4c] sm:$0xf]
      %v381 = vld [vmem:[%s354 + $0x50] sm:$0xf]
      %v382 = vld [vmem:[%s354 + $0x54] sm:$0xf]
      %v383 = vld [vmem:[%s354 + $0x58] sm:$0xf]
      %v384 = vld [vmem:[%s354 + $0x5c] sm:$0xf]
      %v385 = vld [vmem:[%s354 + $0x60] sm:$0xf]
      %v386 = vld [vmem:[%s354 + $0x64] sm:$0xf]
      %v387 = vld [vmem:[%s354 + $0x68] sm:$0xf]
      %v388 = vld [vmem:[%s354 + $0x6c] sm:$0xf]
      %v389 = vld [vmem:[%s354 + $0x70] sm:$0xf]
      %v390 = vld [vmem:[%s354 + $0x74] sm:$0xf]
      %v391 = vld [vmem:[%s354 + $0x78] sm:$0xf]
      %v392 = vld [vmem:[%s354 + $0x7c] sm:$0xf]
      %v393 = vld [vmem:[%s354 + $0x80] sm:$0xf]
      %v394 = vld [vmem:[%s354 + $0x84] sm:$0xf]
      %v395 = vld [vmem:[%s354 + $0x88] sm:$0xf]
      %v396 = vld [vmem:[%s354 + $0x8c] sm:$0xf]
      %v397 = vld [vmem:[%s354 + $0x90] sm:$0xf]
      %v398 = vld [vmem:[%s354 + $0x94] sm:$0xf]
      %v399 = vld [vmem:[%s354 + $0x98] sm:$0xf]
      %v400 = vld [vmem:[%s354 + $0x9c] sm:$0xf]
      %v401 = vld [vmem:[%s354 + $0xa0] sm:$0xf]
      %v402 = vld [vmem:[%s1] sm:$0xff]
      %v403 = vld [vmem:[%s1 + $0x8] sm:$0xff]
      %v404 = vld [vmem:[%s1 + $0x10] sm:$0xff]
      %v405 = vld [vmem:[%s1 + $0x18] sm:$0xff]
      %v406 = vld [vmem:[%s1 + $0x20] sm:$0xff]
      %v407 = vld [vmem:[%s1 + $0x28] sm:$0xff]
      %v408 = vld [vmem:[%s1 + $0x30] sm:$0xff]
      %v409 = vld [vmem:[%s1 + $0x38] sm:$0xff]
      %v410 = vld [vmem:[%s1 + $0x40] sm:$0xff]
      %v411 = vld [vmem:[%s1 + $0x48] sm:$0xff]
      %v412 = vld [vmem:[%s1 + $0x50] sm:$0xff]
      %v413 = vld [vmem:[%s1 + $0x58] sm:$0xff]
      %v414 = vld [vmem:[%s1 + $0x60] sm:$0xff]
      %v415 = vld [vmem:[%s1 + $0x68] sm:$0xff]
      %v416 = vld [vmem:[%s1 + $0x70] sm:$0xff]
      %v417 = vld [vmem:[%s1 + $0x78] sm:$0xff]
      %v418 = vld [vmem:[%s1 + $0x80] sm:$0xff]
      %v419 = vld [vmem:[%s1 + $0x88] sm:$0xff]
      %v420 = vld [vmem:[%s1 + $0x90] sm:$0xff]
      %v421 = vld [vmem:[%s1 + $0x98] sm:$0xff]
      %v422 = vld [vmem:[%s1 + $0xa0] sm:$0xff]
      %v423 = vld [vmem:[%s1 + $0xa8] sm:$0xff]
      %v424 = vld [vmem:[%s1 + $0xb0] sm:$0xff]
      %v425 = vld [vmem:[%s1 + $0xb8] sm:$0xff]
      %v426 = vld [vmem:[%s1 + $0xc0] sm:$0xff]
      %v427 = vld [vmem:[%s1 + $0xc8] sm:$0xff]
      %v428 = vld [vmem:[%s1 + $0xd0] sm:$0xff]
      %v429 = vld [vmem:[%s1 + $0xd8] sm:$0xff]
      %v430 = vld [vmem:[%s1 + $0xe0] sm:$0xff]
      %v431 = vld [vmem:[%s1 + $0xe8] sm:$0xff]
      %v432 = vld [vmem:[%s1 + $0xf0] sm:$0xff]
      %v433 = vld [vmem:[%s1 + $0xf8] sm:$0xff]
      %v434 = vld [vmem:[%s1 + $0x100] sm:$0xff]
      %v435 = vld [vmem:[%s1 + $0x108] sm:$0xff]
      %v436 = vld [vmem:[%s1 + $0x110] sm:$0xff]
      %v437 = vld [vmem:[%s1 + $0x118] sm:$0xff]
      %v438 = vld [vmem:[%s1 + $0x120] sm:$0xff]
      %v439 = vld [vmem:[%s1 + $0x128] sm:$0xff]
      %v440 = vld [vmem:[%s1 + $0x130] sm:$0xff]
      %v441 = vld [vmem:[%s1 + $0x138] sm:$0xff]
      %v442 = vld [vmem:[%s1 + $0x140] sm:$0xff]
      %v443 = vld [vmem:[%s2] sm:$0xf]
      %v444 = vld [vmem:[%s2 + $0x4] sm:$0xf]
      %v445 = vld [vmem:[%s2 + $0x8] sm:$0xf]
      %v446 = vld [vmem:[%s2 + $0xc] sm:$0xf]
      %v447 = vld [vmem:[%s2 + $0x10] sm:$0xf]
      %v448 = vld [vmem:[%s2 + $0x14] sm:$0xf]
      %v449 = vld [vmem:[%s2 + $0x18] sm:$0xf]
      %v450 = vld [vmem:[%s2 + $0x1c] sm:$0xf]
      %v451 = vld [vmem:[%s2 + $0x20] sm:$0xf]
      %v452 = vld [vmem:[%s2 + $0x24] sm:$0xf]
      %v453 = vld [vmem:[%s2 + $0x28] sm:$0xf]
      %v454 = vld [vmem:[%s2 + $0x2c] sm:$0xf]
      %v455 = vld [vmem:[%s2 + $0x30] sm:$0xf]
      %v456 = vld [vmem:[%s2 + $0x34] sm:$0xf]
      %v457 = vld [vmem:[%s2 + $0x38] sm:$0xf]
      %v458 = vld [vmem:[%s2 + $0x3c] sm:$0xf]
      %v459 = vld [vmem:[%s3] sm:$0x1]
      %v461 = vperm.slane %v459, 0
      %v504 = vunpack.c.l.b16 %v361
      %v505 = vunpack.c.l.b16 %v362
      %v506 = vunpack.c.l.b16 %v363
      %v507 = vunpack.c.l.b16 %v364
      %v508 = vunpack.c.l.b16 %v365
      %v509 = vunpack.c.l.b16 %v366
      %v510 = vunpack.c.l.b16 %v367
      %v511 = vunpack.c.l.b16 %v368
      %v512 = vunpack.c.l.b16 %v369
      %v513 = vunpack.c.l.b16 %v370
      %v514 = vunpack.c.l.b16 %v371
      %v515 = vunpack.c.l.b16 %v372
      %v516 = vunpack.c.l.b16 %v373
      %v517 = vunpack.c.l.b16 %v374
      %v518 = vunpack.c.l.b16 %v375
      %v519 = vunpack.c.l.b16 %v376
      %v520 = vunpack.c.l.b16 %v377
      %v521 = vunpack.c.l.b16 %v378
      %v522 = vunpack.c.l.b16 %v379
      %v523 = vunpack.c.l.b16 %v380
      %v524 = vunpack.c.l.b16 %v381
      %v525 = vunpack.c.l.b16 %v382
      %v526 = vunpack.c.l.b16 %v383
      %v527 = vunpack.c.l.b16 %v384
      %v528 = vunpack.c.l.b16 %v385
      %v529 = vunpack.c.l.b16 %v386
      %v530 = vunpack.c.l.b16 %v387
      %v531 = vunpack.c.l.b16 %v388
      %v532 = vunpack.c.l.b16 %v389
      %v533 = vunpack.c.l.b16 %v390
      %v534 = vunpack.c.l.b16 %v391
      %v535 = vunpack.c.l.b16 %v392
      %v536 = vunpack.c.l.b16 %v393
      %v537 = vunpack.c.l.b16 %v394
      %v538 = vunpack.c.l.b16 %v395
      %v539 = vunpack.c.l.b16 %v396
      %v540 = vunpack.c.l.b16 %v397
      %v541 = vunpack.c.l.b16 %v398
      %v542 = vunpack.c.l.b16 %v399
      %v543 = vunpack.c.l.b16 %v400
      %v544 = vunpack.c.l.b16 %v401
      %v545 = vpack.c.b16 %v505, %v504
      %v546 = vpack.c.b16 %v507, %v506
      %v547 = vpack.c.b16 %v509, %v508
      %v548 = vpack.c.b16 %v511, %v510
      %v549 = vpack.c.b16 %v513, %v512
      %v550 = vpack.c.b16 %v515, %v514
      %v551 = vpack.c.b16 %v517, %v516
      %v552 = vpack.c.b16 %v519, %v518
      %v553 = vpack.c.b16 %v521, %v520
      %v554 = vpack.c.b16 %v523, %v522
      %v555 = vpack.c.b16 %v525, %v524
      %v556 = vpack.c.b16 %v527, %v526
      %v557 = vpack.c.b16 %v529, %v528
      %v558 = vpack.c.b16 %v531, %v530
      %v559 = vpack.c.b16 %v533, %v532
      %v560 = vpack.c.b16 %v535, %v534
      %v561 = vpack.c.b16 %v537, %v536
      %v562 = vpack.c.b16 %v539, %v538
      %v563 = vpack.c.b16 %v541, %v540
      %v564 = vpack.c.b16 %v543, %v542
      %v565 = vpack.c.b16 %v544, %v544
      %v603 = vunpack.c.l.b16 %v443
      %v604 = vunpack.c.l.b16 %v444
      %v605 = vunpack.c.l.b16 %v445
      %v606 = vunpack.c.l.b16 %v446
      %v607 = vunpack.c.l.b16 %v447
      %v608 = vunpack.c.l.b16 %v448
      %v609 = vunpack.c.l.b16 %v449
      %v610 = vunpack.c.l.b16 %v450
      %v611 = vunpack.c.l.b16 %v451
      %v612 = vunpack.c.l.b16 %v452
      %v613 = vunpack.c.l.b16 %v453
      %v614 = vunpack.c.l.b16 %v454
      %v615 = vunpack.c.l.b16 %v455
      %v616 = vunpack.c.l.b16 %v456
      %v617 = vunpack.c.l.b16 %v457
      %v618 = vunpack.c.l.b16 %v458
      %v619 = vpack.c.b16 %v604, %v603
      %v620 = vpack.c.b16 %v606, %v605
      %v621 = vpack.c.b16 %v608, %v607
      %v622 = vpack.c.b16 %v610, %v609
      %v623 = vpack.c.b16 %v612, %v611
      %v624 = vpack.c.b16 %v614, %v613
      %v625 = vpack.c.b16 %v616, %v615
      %v626 = vpack.c.b16 %v618, %v617
      %635 = vmatpush.bf16.msra.mxu0 %v626
      %636 = vmatpush.bf16.msra.mxu0 %v625
      %637 = vmatpush.bf16.msra.mxu0 %v624
      %638 = vmatpush.bf16.msra.mxu0 %v623
      %639 = vmatpush.bf16.msra.mxu0 %v622
      %640 = vmatpush.bf16.msra.mxu0 %v621
      %641 = vmatpush.bf16.msra.mxu0 %v620
      %642 = vmatpush.bf16.msra.mxu0 %v619
      %643 = vmatmul.bf16.gmra.mxu0 %v545
      %v644 = vpop.f32.mrf.mxu0
      %v645 = vadd.f32 %v461, %v644
      %v646 = vpop.f32.mrf.mxu0
      %v647 = vadd.f32 %v461, %v646
      %648 = vmatmul.bf16.gmra.mxu0 %v546
      %v649 = vpop.f32.mrf.mxu0
      %v650 = vadd.f32 %v461, %v649
      %v651 = vpop.f32.mrf.mxu0
      %v652 = vadd.f32 %v461, %v651
      %653 = vmatmul.bf16.gmra.mxu0 %v547
      %v654 = vpop.f32.mrf.mxu0
      %v655 = vadd.f32 %v461, %v654
      %v656 = vpop.f32.mrf.mxu0
      %v657 = vadd.f32 %v461, %v656
      %658 = vmatmul.bf16.gmra.mxu0 %v548
      %v659 = vpop.f32.mrf.mxu0
      %v660 = vadd.f32 %v461, %v659
      %v661 = vpop.f32.mrf.mxu0
      %v662 = vadd.f32 %v461, %v661
      %663 = vmatmul.bf16.gmra.mxu0 %v549
      %v664 = vpop.f32.mrf.mxu0
      %v665 = vadd.f32 %v461, %v664
      %v666 = vpop.f32.mrf.mxu0
      %v667 = vadd.f32 %v461, %v666
      %668 = vmatmul.bf16.gmra.mxu0 %v550
      %v669 = vpop.f32.mrf.mxu0
      %v670 = vadd.f32 %v461, %v669
      %v671 = vpop.f32.mrf.mxu0
      %v672 = vadd.f32 %v461, %v671
      %673 = vmatmul.bf16.gmra.mxu0 %v551
      %v674 = vpop.f32.mrf.mxu0
      %v675 = vadd.f32 %v461, %v674
      %v676 = vpop.f32.mrf.mxu0
      %v677 = vadd.f32 %v461, %v676
      %678 = vmatmul.bf16.gmra.mxu0 %v552
      %v679 = vpop.f32.mrf.mxu0
      %v680 = vadd.f32 %v461, %v679
      %v681 = vpop.f32.mrf.mxu0
      %v682 = vadd.f32 %v461, %v681
      %683 = vmatmul.bf16.gmra.mxu0 %v553
      %v684 = vpop.f32.mrf.mxu0
      %v685 = vadd.f32 %v461, %v684
      %v686 = vpop.f32.mrf.mxu0
      %v687 = vadd.f32 %v461, %v686
      %688 = vmatmul.bf16.gmra.mxu0 %v554
      %v689 = vpop.f32.mrf.mxu0
      %v690 = vadd.f32 %v461, %v689
      %v691 = vpop.f32.mrf.mxu0
      %v692 = vadd.f32 %v461, %v691
      %693 = vmatmul.bf16.gmra.mxu0 %v555
      %v694 = vpop.f32.mrf.mxu0
      %v695 = vadd.f32 %v461, %v694
      %v696 = vpop.f32.mrf.mxu0
      %v697 = vadd.f32 %v461, %v696
      %698 = vmatmul.bf16.gmra.mxu0 %v556
      %v699 = vpop.f32.mrf.mxu0
      %v700 = vadd.f32 %v461, %v699
      %v701 = vpop.f32.mrf.mxu0
      %v702 = vadd.f32 %v461, %v701
      %703 = vmatmul.bf16.gmra.mxu0 %v557
      %v704 = vpop.f32.mrf.mxu0
      %v705 = vadd.f32 %v461, %v704
      %v706 = vpop.f32.mrf.mxu0
      %v707 = vadd.f32 %v461, %v706
      %708 = vmatmul.bf16.gmra.mxu0 %v558
      %v709 = vpop.f32.mrf.mxu0
      %v710 = vadd.f32 %v461, %v709
      %v711 = vpop.f32.mrf.mxu0
      %v712 = vadd.f32 %v461, %v711
      %713 = vmatmul.bf16.gmra.mxu0 %v559
      %v714 = vpop.f32.mrf.mxu0
      %v715 = vadd.f32 %v461, %v714
      %v716 = vpop.f32.mrf.mxu0
      %v717 = vadd.f32 %v461, %v716
      %718 = vmatmul.bf16.gmra.mxu0 %v560
      %v719 = vpop.f32.mrf.mxu0
      %v720 = vadd.f32 %v461, %v719
      %v721 = vpop.f32.mrf.mxu0
      %v722 = vadd.f32 %v461, %v721
      %723 = vmatmul.bf16.gmra.mxu0 %v561
      %v724 = vpop.f32.mrf.mxu0
      %v725 = vadd.f32 %v461, %v724
      %v726 = vpop.f32.mrf.mxu0
      %v727 = vadd.f32 %v461, %v726
      %728 = vmatmul.bf16.gmra.mxu0 %v562
      %v729 = vpop.f32.mrf.mxu0
      %v730 = vadd.f32 %v461, %v729
      %v731 = vpop.f32.mrf.mxu0
      %v732 = vadd.f32 %v461, %v731
      %733 = vmatmul.bf16.gmra.mxu0 %v563
      %v734 = vpop.f32.mrf.mxu0
      %v735 = vadd.f32 %v461, %v734
      %v736 = vpop.f32.mrf.mxu0
      %v737 = vadd.f32 %v461, %v736
      %738 = vmatmul.bf16.gmra.mxu0 %v564
      %v739 = vpop.f32.mrf.mxu0
      %v740 = vadd.f32 %v461, %v739
      %v741 = vpop.f32.mrf.mxu0
      %v742 = vadd.f32 %v461, %v741
      %743 = vmatmul.bf16.gmra.mxu0 %v565
      %v744 = vpop.f32.mrf.mxu0
      %v745 = vadd.f32 %v461, %v744
      %v746 = vpop.f32.mrf.mxu0
      %747 = vdwg.mxu0
      %v748 = vmax.f32 %v645, 0.0
      %v749 = vmax.f32 %v647, 0.0
      %v750 = vmax.f32 %v650, 0.0
      %v751 = vmax.f32 %v652, 0.0
      %v752 = vmax.f32 %v655, 0.0
      %v753 = vmax.f32 %v657, 0.0
      %v754 = vmax.f32 %v660, 0.0
      %v755 = vmax.f32 %v662, 0.0
      %v756 = vmax.f32 %v665, 0.0
      %v757 = vmax.f32 %v667, 0.0
      %v758 = vmax.f32 %v670, 0.0
      %v759 = vmax.f32 %v672, 0.0
      %v760 = vmax.f32 %v675, 0.0
      %v761 = vmax.f32 %v677, 0.0
      %v762 = vmax.f32 %v680, 0.0
      %v763 = vmax.f32 %v682, 0.0
      %v764 = vmax.f32 %v685, 0.0
      %v765 = vmax.f32 %v687, 0.0
      %v766 = vmax.f32 %v690, 0.0
      %v767 = vmax.f32 %v692, 0.0
      %v768 = vmax.f32 %v695, 0.0
      %v769 = vmax.f32 %v697, 0.0
      %v770 = vmax.f32 %v700, 0.0
      %v771 = vmax.f32 %v702, 0.0
      %v772 = vmax.f32 %v705, 0.0
      %v773 = vmax.f32 %v707, 0.0
      %v774 = vmax.f32 %v710, 0.0
      %v775 = vmax.f32 %v712, 0.0
      %v776 = vmax.f32 %v715, 0.0
      %v777 = vmax.f32 %v717, 0.0
      %v778 = vmax.f32 %v720, 0.0
      %v779 = vmax.f32 %v722, 0.0
      %v780 = vmax.f32 %v725, 0.0
      %v781 = vmax.f32 %v727, 0.0
      %v782 = vmax.f32 %v730, 0.0
      %v783 = vmax.f32 %v732, 0.0
      %v784 = vmax.f32 %v735, 0.0
      %v785 = vmax.f32 %v737, 0.0
      %v786 = vmax.f32 %v740, 0.0
      %v787 = vmax.f32 %v742, 0.0
      %v788 = vmax.f32 %v745, 0.0
      %790 = vset.pattern.permute.xlu0 0
      %791 = vperm.xlu0 %790, %v402
      %v792 = vpop.permute.xlu0 %791
      %795 = vset.pattern.permute.xlu0 0
      %796 = vperm.xlu0 %795, %v403
      %v797 = vpop.permute.xlu0 %796
      %800 = vset.pattern.permute.xlu0 0
      %801 = vperm.xlu0 %800, %v404
      %v802 = vpop.permute.xlu0 %801
      %805 = vset.pattern.permute.xlu0 0
      %806 = vperm.xlu0 %805, %v405
      %v807 = vpop.permute.xlu0 %806
      %810 = vset.pattern.permute.xlu0 0
      %811 = vperm.xlu0 %810, %v406
      %v812 = vpop.permute.xlu0 %811
      %815 = vset.pattern.permute.xlu0 0
      %816 = vperm.xlu0 %815, %v407
      %v817 = vpop.permute.xlu0 %816
      %820 = vset.pattern.permute.xlu0 0
      %821 = vperm.xlu0 %820, %v408
      %v822 = vpop.permute.xlu0 %821
      %825 = vset.pattern.permute.xlu0 0
      %826 = vperm.xlu0 %825, %v409
      %v827 = vpop.permute.xlu0 %826
      %830 = vset.pattern.permute.xlu0 0
      %831 = vperm.xlu0 %830, %v410
      %v832 = vpop.permute.xlu0 %831
      %835 = vset.pattern.permute.xlu0 0
      %836 = vperm.xlu0 %835, %v411
      %v837 = vpop.permute.xlu0 %836
      %840 = vset.pattern.permute.xlu0 0
      %841 = vperm.xlu0 %840, %v412
      %v842 = vpop.permute.xlu0 %841
      %845 = vset.pattern.permute.xlu0 0
      %846 = vperm.xlu0 %845, %v413
      %v847 = vpop.permute.xlu0 %846
      %850 = vset.pattern.permute.xlu0 0
      %851 = vperm.xlu0 %850, %v414
      %v852 = vpop.permute.xlu0 %851
      %855 = vset.pattern.permute.xlu0 0
      %856 = vperm.xlu0 %855, %v415
      %v857 = vpop.permute.xlu0 %856
      %860 = vset.pattern.permute.xlu0 0
      %861 = vperm.xlu0 %860, %v416
      %v862 = vpop.permute.xlu0 %861
      %865 = vset.pattern.permute.xlu0 0
      %866 = vperm.xlu0 %865, %v417
      %v867 = vpop.permute.xlu0 %866
      %870 = vset.pattern.permute.xlu0 0
      %871 = vperm.xlu0 %870, %v418
      %v872 = vpop.permute.xlu0 %871
      %875 = vset.pattern.permute.xlu0 0
      %876 = vperm.xlu0 %875, %v419
      %v877 = vpop.permute.xlu0 %876
      %880 = vset.pattern.permute.xlu0 0
      %881 = vperm.xlu0 %880, %v420
      %v882 = vpop.permute.xlu0 %881
      %885 = vset.pattern.permute.xlu0 0
      %886 = vperm.xlu0 %885, %v421
      %v887 = vpop.permute.xlu0 %886
      %890 = vset.pattern.permute.xlu0 0
      %891 = vperm.xlu0 %890, %v422
      %v892 = vpop.permute.xlu0 %891
      %895 = vset.pattern.permute.xlu0 0
      %896 = vperm.xlu0 %895, %v423
      %v897 = vpop.permute.xlu0 %896
      %900 = vset.pattern.permute.xlu0 0
      %901 = vperm.xlu0 %900, %v424
      %v902 = vpop.permute.xlu0 %901
      %905 = vset.pattern.permute.xlu0 0
      %906 = vperm.xlu0 %905, %v425
      %v907 = vpop.permute.xlu0 %906
      %910 = vset.pattern.permute.xlu0 0
      %911 = vperm.xlu0 %910, %v426
      %v912 = vpop.permute.xlu0 %911
      %915 = vset.pattern.permute.xlu0 0
      %916 = vperm.xlu0 %915, %v427
      %v917 = vpop.permute.xlu0 %916
      %920 = vset.pattern.permute.xlu0 0
      %921 = vperm.xlu0 %920, %v428
      %v922 = vpop.permute.xlu0 %921
      %925 = vset.pattern.permute.xlu0 0
      %926 = vperm.xlu0 %925, %v429
      %v927 = vpop.permute.xlu0 %926
      %930 = vset.pattern.permute.xlu0 0
      %931 = vperm.xlu0 %930, %v430
      %v932 = vpop.permute.xlu0 %931
      %935 = vset.pattern.permute.xlu0 0
      %936 = vperm.xlu0 %935, %v431
      %v937 = vpop.permute.xlu0 %936
      %940 = vset.pattern.permute.xlu0 0
      %941 = vperm.xlu0 %940, %v432
      %v942 = vpop.permute.xlu0 %941
      %945 = vset.pattern.permute.xlu0 0
      %946 = vperm.xlu0 %945, %v433
      %v947 = vpop.permute.xlu0 %946
      %950 = vset.pattern.permute.xlu0 0
      %951 = vperm.xlu0 %950, %v434
      %v952 = vpop.permute.xlu0 %951
      %955 = vset.pattern.permute.xlu0 0
      %956 = vperm.xlu0 %955, %v435
      %v957 = vpop.permute.xlu0 %956
      %960 = vset.pattern.permute.xlu0 0
      %961 = vperm.xlu0 %960, %v436
      %v962 = vpop.permute.xlu0 %961
      %965 = vset.pattern.permute.xlu0 0
      %966 = vperm.xlu0 %965, %v437
      %v967 = vpop.permute.xlu0 %966
      %970 = vset.pattern.permute.xlu0 0
      %971 = vperm.xlu0 %970, %v438
      %v972 = vpop.permute.xlu0 %971
      %975 = vset.pattern.permute.xlu0 0
      %976 = vperm.xlu0 %975, %v439
      %v977 = vpop.permute.xlu0 %976
      %980 = vset.pattern.permute.xlu0 0
      %981 = vperm.xlu0 %980, %v440
      %v982 = vpop.permute.xlu0 %981
      %985 = vset.pattern.permute.xlu0 0
      %986 = vperm.xlu0 %985, %v441
      %v987 = vpop.permute.xlu0 %986
      %990 = vset.pattern.permute.xlu0 0
      %991 = vperm.xlu0 %990, %v442
      %v992 = vpop.permute.xlu0 %991
      %v994 = vmul.f32 %v748, %v792
      %v995 = vmul.f32 %v749, %v797
      %v996 = vmul.f32 %v750, %v802
      %v997 = vmul.f32 %v751, %v807
      %v998 = vmul.f32 %v752, %v812
      %v999 = vmul.f32 %v753, %v817
      %v1000 = vmul.f32 %v754, %v822
      %v1001 = vmul.f32 %v755, %v827
      %v1002 = vmul.f32 %v756, %v832
      %v1003 = vmul.f32 %v757, %v837
      %v1004 = vmul.f32 %v758, %v842
      %v1005 = vmul.f32 %v759, %v847
      %v1006 = vmul.f32 %v760, %v852
      %v1007 = vmul.f32 %v761, %v857
      %v1008 = vmul.f32 %v762, %v862
      %v1009 = vmul.f32 %v763, %v867
      %v1010 = vmul.f32 %v764, %v872
      %v1011 = vmul.f32 %v765, %v877
      %v1012 = vmul.f32 %v766, %v882
      %v1013 = vmul.f32 %v767, %v887
      %v1014 = vmul.f32 %v768, %v892
      %v1015 = vmul.f32 %v769, %v897
      %v1016 = vmul.f32 %v770, %v902
      %v1017 = vmul.f32 %v771, %v907
      %v1018 = vmul.f32 %v772, %v912
      %v1019 = vmul.f32 %v773, %v917
      %v1020 = vmul.f32 %v774, %v922
      %v1021 = vmul.f32 %v775, %v927
      %v1022 = vmul.f32 %v776, %v932
      %v1023 = vmul.f32 %v777, %v937
      %v1024 = vmul.f32 %v778, %v942
      %v1025 = vmul.f32 %v779, %v947
      %v1026 = vmul.f32 %v780, %v952
      %v1027 = vmul.f32 %v781, %v957
      %v1028 = vmul.f32 %v782, %v962
      %v1029 = vmul.f32 %v783, %v967
      %v1030 = vmul.f32 %v784, %v972
      %v1031 = vmul.f32 %v785, %v977
      %v1032 = vmul.f32 %v786, %v982
      %v1033 = vmul.f32 %v787, %v987
      %v1034 = vmul.f32 %v788, %v992
      %1035 = vst [vmem:[#allocation2] sm:$0xf] 0
      %1036 = vst [vmem:[#allocation2 + $0x4] sm:$0xf] 0
      %1037 = vst [vmem:[#allocation2 + $0x8] sm:$0xf] 0
      %1038 = vst [vmem:[#allocation2 + $0xb0] sm:$0xf] 0
      %1039 = vst [vmem:[#allocation2 + $0xb4] sm:$0xf] 0
      %1040 = vst [vmem:[#allocation2 + $0xb8] sm:$0xf] 0
      %v1041 = vpack.c.bf16 %v994, %v994
      %v1042 = vpack.c.bf16 %v995, %v995
      %v1043 = vpack.c.bf16 %v996, %v996
      %v1044 = vpack.c.bf16 %v997, %v997
      %v1045 = vpack.c.bf16 %v998, %v998
      %v1046 = vpack.c.bf16 %v999, %v999
      %v1047 = vpack.c.bf16 %v1000, %v1000
      %v1048 = vpack.c.bf16 %v1001, %v1001
      %v1049 = vpack.c.bf16 %v1002, %v1002
      %v1050 = vpack.c.bf16 %v1003, %v1003
      %v1051 = vpack.c.bf16 %v1004, %v1004
      %v1052 = vpack.c.bf16 %v1005, %v1005
      %v1053 = vpack.c.bf16 %v1006, %v1006
      %v1054 = vpack.c.bf16 %v1007, %v1007
      %v1055 = vpack.c.bf16 %v1008, %v1008
      %v1056 = vpack.c.bf16 %v1009, %v1009
      %v1057 = vpack.c.bf16 %v1010, %v1010
      %v1058 = vpack.c.bf16 %v1011, %v1011
      %v1059 = vpack.c.bf16 %v1012, %v1012
      %v1060 = vpack.c.bf16 %v1013, %v1013
      %v1061 = vpack.c.bf16 %v1014, %v1014
      %v1062 = vpack.c.bf16 %v1015, %v1015
      %v1063 = vpack.c.bf16 %v1016, %v1016
      %v1064 = vpack.c.bf16 %v1017, %v1017
      %v1065 = vpack.c.bf16 %v1018, %v1018
      %v1066 = vpack.c.bf16 %v1019, %v1019
      %v1067 = vpack.c.bf16 %v1020, %v1020
      %v1068 = vpack.c.bf16 %v1021, %v1021
      %v1069 = vpack.c.bf16 %v1022, %v1022
      %v1070 = vpack.c.bf16 %v1023, %v1023
      %v1071 = vpack.c.bf16 %v1024, %v1024
      %v1072 = vpack.c.bf16 %v1025, %v1025
      %v1073 = vpack.c.bf16 %v1026, %v1026
      %v1074 = vpack.c.bf16 %v1027, %v1027
      %v1075 = vpack.c.bf16 %v1028, %v1028
      %v1076 = vpack.c.bf16 %v1029, %v1029
      %v1077 = vpack.c.bf16 %v1030, %v1030
      %v1078 = vpack.c.bf16 %v1031, %v1031
      %v1079 = vpack.c.bf16 %v1032, %v1032
      %v1080 = vpack.c.bf16 %v1033, %v1033
      %v1081 = vpack.c.bf16 %v1034, %v1034
      %1082 = vst [vmem:[#allocation2 + $0xc] sm:$0xf] %v1041
      %1083 = vst [vmem:[#allocation2 + $0x10] sm:$0xf] %v1042
      %1084 = vst [vmem:[#allocation2 + $0x14] sm:$0xf] %v1043
      %1085 = vst [vmem:[#allocation2 + $0x18] sm:$0xf] %v1044
      %1086 = vst [vmem:[#allocation2 + $0x1c] sm:$0xf] %v1045
      %1087 = vst [vmem:[#allocation2 + $0x20] sm:$0xf] %v1046
      %1088 = vst [vmem:[#allocation2 + $0x24] sm:$0xf] %v1047
      %1089 = vst [vmem:[#allocation2 + $0x28] sm:$0xf] %v1048
      %1090 = vst [vmem:[#allocation2 + $0x2c] sm:$0xf] %v1049
      %1091 = vst [vmem:[#allocation2 + $0x30] sm:$0xf] %v1050
      %1092 = vst [vmem:[#allocation2 + $0x34] sm:$0xf] %v1051
      %1093 = vst [vmem:[#allocation2 + $0x38] sm:$0xf] %v1052
      %1094 = vst [vmem:[#allocation2 + $0x3c] sm:$0xf] %v1053
      %1095 = vst [vmem:[#allocation2 + $0x40] sm:$0xf] %v1054
      %1096 = vst [vmem:[#allocation2 + $0x44] sm:$0xf] %v1055
      %1097 = vst [vmem:[#allocation2 + $0x48] sm:$0xf] %v1056
      %1098 = vst [vmem:[#allocation2 + $0x4c] sm:$0xf] %v1057
      %1099 = vst [vmem:[#allocation2 + $0x50] sm:$0xf] %v1058
      %1100 = vst [vmem:[#allocation2 + $0x54] sm:$0xf] %v1059
      %1101 = vst [vmem:[#allocation2 + $0x58] sm:$0xf] %v1060
      %1102 = vst [vmem:[#allocation2 + $0x5c] sm:$0xf] %v1061
      %1103 = vst [vmem:[#allocation2 + $0x60] sm:$0xf] %v1062
      %1104 = vst [vmem:[#allocation2 + $0x64] sm:$0xf] %v1063
      %1105 = vst [vmem:[#allocation2 + $0x68] sm:$0xf] %v1064
      %1106 = vst [vmem:[#allocation2 + $0x6c] sm:$0xf] %v1065
      %1107 = vst [vmem:[#allocation2 + $0x70] sm:$0xf] %v1066
      %1108 = vst [vmem:[#allocation2 + $0x74] sm:$0xf] %v1067
      %1109 = vst [vmem:[#allocation2 + $0x78] sm:$0xf] %v1068
      %1110 = vst [vmem:[#allocation2 + $0x7c] sm:$0xf] %v1069
      %1111 = vst [vmem:[#allocation2 + $0x80] sm:$0xf] %v1070
      %1112 = vst [vmem:[#allocation2 + $0x84] sm:$0xf] %v1071
      %1113 = vst [vmem:[#allocation2 + $0x88] sm:$0xf] %v1072
      %1114 = vst [vmem:[#allocation2 + $0x8c] sm:$0xf] %v1073
      %1115 = vst [vmem:[#allocation2 + $0x90] sm:$0xf] %v1074
      %1116 = vst [vmem:[#allocation2 + $0x94] sm:$0xf] %v1075
      %1117 = vst [vmem:[#allocation2 + $0x98] sm:$0xf] %v1076
      %1118 = vst [vmem:[#allocation2 + $0x9c] sm:$0xf] %v1077
      %1119 = vst [vmem:[#allocation2 + $0xa0] sm:$0xf] %v1078
      %1120 = vst [vmem:[#allocation2 + $0xa4] sm:$0xf] %v1079
      %1121 = vst [vmem:[#allocation2 + $0xa8] sm:$0xf] %v1080
      %1122 = vst [vmem:[#allocation2 + $0xac] sm:$0xf] %v1081
      %v1123 = vld [vmem:[#allocation2] sm:$0xc]
      %v1124 = vld [vmem:[#allocation2 + $0x4] sm:$0xf]
      %v1125 = vld [vmem:[#allocation2 + $0x8] sm:$0xf]
      %v1126 = vld [vmem:[#allocation2 + $0xc] sm:$0xf]
      %v1127 = vld [vmem:[#allocation2 + $0x10] sm:$0xf]
      %v1128 = vld [vmem:[#allocation2 + $0x14] sm:$0xf]
      %v1129 = vld [vmem:[#allocation2 + $0x18] sm:$0xf]
      %v1130 = vld [vmem:[#allocation2 + $0x1c] sm:$0xf]
      %v1131 = vld [vmem:[#allocation2 + $0x20] sm:$0xf]
      %v1132 = vld [vmem:[#allocation2 + $0x24] sm:$0xf]
      %v1133 = vld [vmem:[#allocation2 + $0x28] sm:$0xf]
      %v1134 = vld [vmem:[#allocation2 + $0x2c] sm:$0xf]
      %v1135 = vld [vmem:[#allocation2 + $0x30] sm:$0xf]
      %v1136 = vld [vmem:[#allocation2 + $0x34] sm:$0xf]
      %v1137 = vld [vmem:[#allocation2 + $0x38] sm:$0xf]
      %v1138 = vld [vmem:[#allocation2 + $0x3c] sm:$0xf]
      %v1139 = vld [vmem:[#allocation2 + $0x40] sm:$0xf]
      %v1140 = vld [vmem:[#allocation2 + $0x44] sm:$0xf]
      %v1141 = vld [vmem:[#allocation2 + $0x48] sm:$0xf]
      %v1142 = vld [vmem:[#allocation2 + $0x4c] sm:$0xf]
      %v1143 = vld [vmem:[#allocation2 + $0x50] sm:$0xf]
      %v1144 = vld [vmem:[#allocation2 + $0x54] sm:$0xf]
      %v1145 = vld [vmem:[#allocation2 + $0x58] sm:$0xf]
      %v1146 = vld [vmem:[#allocation2 + $0x5c] sm:$0xf]
      %v1147 = vld [vmem:[#allocation2 + $0x60] sm:$0xf]
      %v1148 = vld [vmem:[#allocation2 + $0x64] sm:$0xf]
      %v1149 = vld [vmem:[#allocation2 + $0x68] sm:$0xf]
      %v1150 = vld [vmem:[#allocation2 + $0x6c] sm:$0xf]
      %v1151 = vld [vmem:[#allocation2 + $0x70] sm:$0xf]
      %v1152 = vld [vmem:[#allocation2 + $0x74] sm:$0xf]
      %v1153 = vld [vmem:[#allocation2 + $0x78] sm:$0xf]
      %v1154 = vld [vmem:[#allocation2 + $0x7c] sm:$0xf]
      %v1155 = vld [vmem:[#allocation2 + $0x80] sm:$0xf]
      %v1156 = vld [vmem:[#allocation2 + $0x84] sm:$0xf]
      %v1157 = vld [vmem:[#allocation2 + $0x88] sm:$0xf]
      %v1158 = vld [vmem:[#allocation2 + $0x8c] sm:$0xf]
      %v1159 = vld [vmem:[#allocation2 + $0x90] sm:$0xf]
      %v1160 = vld [vmem:[#allocation2 + $0x94] sm:$0xf]
      %v1161 = vld [vmem:[#allocation2 + $0x98] sm:$0xf]
      %v1162 = vld [vmem:[#allocation2 + $0x9c] sm:$0xf]
      %v1163 = vld [vmem:[#allocation2 + $0xa0] sm:$0xf]
      %v1164 = vld [vmem:[#allocation2 + $0xa4] sm:$0x7]
      %v1165 = vld [vmem:[%s4] sm:$0xf]
      %v1166 = vld [vmem:[%s4 + $0x4] sm:$0xf]
      %v1167 = vld [vmem:[%s4 + $0x8] sm:$0xf]
      %v1168 = vld [vmem:[%s4 + $0xc] sm:$0xf]
      %v1169 = vld [vmem:[%s4 + $0x10] sm:$0xf]
      %v1170 = vld [vmem:[%s4 + $0x14] sm:$0xf]
      %v1171 = vld [vmem:[%s4 + $0x18] sm:$0xf]
      %v1172 = vld [vmem:[%s4 + $0x1c] sm:$0xf]
      %v1173 = vld [vmem:[%s4 + $0x20] sm:$0xf]
      %v1174 = vld [vmem:[%s4 + $0x24] sm:$0xf]
      %v1175 = vld [vmem:[%s4 + $0x28] sm:$0xf]
      %v1176 = vld [vmem:[%s4 + $0x2c] sm:$0xf]
      %v1177 = vld [vmem:[%s4 + $0x30] sm:$0xf]
      %v1178 = vld [vmem:[%s4 + $0x34] sm:$0xf]
      %v1179 = vld [vmem:[%s4 + $0x38] sm:$0xf]
      %v1180 = vld [vmem:[%s4 + $0x3c] sm:$0xf]
      %v1181 = vld [vmem:[#allocation2] sm:$0x8]
      %s1182 = scalar_lea.vmem %s4, 64
      %v1183 = vld [vmem:[%s1182] sm:$0xf]
      %v1184 = vld [vmem:[%s1182 + $0x4] sm:$0xf]
      %v1185 = vld [vmem:[%s1182 + $0x8] sm:$0xf]
      %v1186 = vld [vmem:[%s1182 + $0xc] sm:$0xf]
      %v1187 = vld [vmem:[%s1182 + $0x10] sm:$0xf]
      %v1188 = vld [vmem:[%s1182 + $0x14] sm:$0xf]
      %v1189 = vld [vmem:[%s1182 + $0x18] sm:$0xf]
      %v1190 = vld [vmem:[%s1182 + $0x1c] sm:$0xf]
      %v1191 = vld [vmem:[%s1182 + $0x20] sm:$0xf]
      %v1192 = vld [vmem:[%s1182 + $0x24] sm:$0xf]
      %v1193 = vld [vmem:[%s1182 + $0x28] sm:$0xf]
      %v1194 = vld [vmem:[%s1182 + $0x2c] sm:$0xf]
      %v1195 = vld [vmem:[%s1182 + $0x30] sm:$0xf]
      %v1196 = vld [vmem:[%s1182 + $0x34] sm:$0xf]
      %v1197 = vld [vmem:[%s1182 + $0x38] sm:$0xf]
      %v1198 = vld [vmem:[%s1182 + $0x3c] sm:$0xf]
      %v1241 = vunpack.c.l.b16 %v1181
      %v1242 = vunpack.c.l.b16 %v1124
      %v1243 = vunpack.c.l.b16 %v1125
      %v1244 = vunpack.c.l.b16 %v1126
      %v1245 = vunpack.c.l.b16 %v1127
      %v1246 = vunpack.c.l.b16 %v1128
      %v1247 = vunpack.c.l.b16 %v1129
      %v1248 = vunpack.c.l.b16 %v1130
      %v1249 = vunpack.c.l.b16 %v1131
      %v1250 = vunpack.c.l.b16 %v1132
      %v1251 = vunpack.c.l.b16 %v1133
      %v1252 = vunpack.c.l.b16 %v1134
      %v1253 = vunpack.c.l.b16 %v1135
      %v1254 = vunpack.c.l.b16 %v1136
      %v1255 = vunpack.c.l.b16 %v1137
      %v1256 = vunpack.c.l.b16 %v1138
      %v1257 = vunpack.c.l.b16 %v1139
      %v1258 = vunpack.c.l.b16 %v1140
      %v1259 = vunpack.c.l.b16 %v1141
      %v1260 = vunpack.c.l.b16 %v1142
      %v1261 = vunpack.c.l.b16 %v1143
      %v1262 = vunpack.c.l.b16 %v1144
      %v1263 = vunpack.c.l.b16 %v1145
      %v1264 = vunpack.c.l.b16 %v1146
      %v1265 = vunpack.c.l.b16 %v1147
      %v1266 = vunpack.c.l.b16 %v1148
      %v1267 = vunpack.c.l.b16 %v1149
      %v1268 = vunpack.c.l.b16 %v1150
      %v1269 = vunpack.c.l.b16 %v1151
      %v1270 = vunpack.c.l.b16 %v1152
      %v1271 = vunpack.c.l.b16 %v1153
      %v1272 = vunpack.c.l.b16 %v1154
      %v1273 = vunpack.c.l.b16 %v1155
      %v1274 = vunpack.c.l.b16 %v1156
      %v1275 = vunpack.c.l.b16 %v1157
      %v1276 = vunpack.c.l.b16 %v1158
      %v1277 = vunpack.c.l.b16 %v1159
      %v1278 = vunpack.c.l.b16 %v1160
      %v1279 = vunpack.c.l.b16 %v1161
      %v1280 = vunpack.c.l.b16 %v1162
      %v1281 = vunpack.c.l.b16 %v1163
      %v1282 = vunpack.c.l.b16 %v1164
      %v1283 = vpack.c.b16 %v1242, %v1241
      %v1284 = vpack.c.b16 %v1244, %v1243
      %v1285 = vpack.c.b16 %v1246, %v1245
      %v1286 = vpack.c.b16 %v1248, %v1247
      %v1287 = vpack.c.b16 %v1250, %v1249
      %v1288 = vpack.c.b16 %v1252, %v1251
      %v1289 = vpack.c.b16 %v1254, %v1253
      %v1290 = vpack.c.b16 %v1256, %v1255
      %v1291 = vpack.c.b16 %v1258, %v1257
      %v1292 = vpack.c.b16 %v1260, %v1259
      %v1293 = vpack.c.b16 %v1262, %v1261
      %v1294 = vpack.c.b16 %v1264, %v1263
      %v1295 = vpack.c.b16 %v1266, %v1265
      %v1296 = vpack.c.b16 %v1268, %v1267
      %v1297 = vpack.c.b16 %v1270, %v1269
      %v1298 = vpack.c.b16 %v1272, %v1271
      %v1299 = vpack.c.b16 %v1274, %v1273
      %v1300 = vpack.c.b16 %v1276, %v1275
      %v1301 = vpack.c.b16 %v1278, %v1277
      %v1302 = vpack.c.b16 %v1280, %v1279
      %v1303 = vpack.c.b16 %v1282, %v1281
      %vm1304 = vcmask 1044480
      %v1305 = vrot.slane %v1283, 3
      %v1306 = vrot.slane %v1284, 3
      %v1307 = vsel %vm1304, %v1305, %v1306
      %v1308 = vrot.slane %v1285, 3
      %v1309 = vsel %vm1304, %v1306, %v1308
      %v1310 = vrot.slane %v1286, 3
      %v1311 = vsel %vm1304, %v1308, %v1310
      %v1312 = vrot.slane %v1287, 3
      %v1313 = vsel %vm1304, %v1310, %v1312
      %v1314 = vrot.slane %v1288, 3
      %v1315 = vsel %vm1304, %v1312, %v1314
      %v1316 = vrot.slane %v1289, 3
      %v1317 = vsel %vm1304, %v1314, %v1316
      %v1318 = vrot.slane %v1290, 3
      %v1319 = vsel %vm1304, %v1316, %v1318
      %v1320 = vrot.slane %v1291, 3
      %v1321 = vsel %vm1304, %v1318, %v1320
      %v1322 = vrot.slane %v1292, 3
      %v1323 = vsel %vm1304, %v1320, %v1322
      %v1324 = vrot.slane %v1293, 3
      %v1325 = vsel %vm1304, %v1322, %v1324
      %v1326 = vrot.slane %v1294, 3
      %v1327 = vsel %vm1304, %v1324, %v1326
      %v1328 = vrot.slane %v1295, 3
      %v1329 = vsel %vm1304, %v1326, %v1328
      %v1330 = vrot.slane %v1296, 3
      %v1331 = vsel %vm1304, %v1328, %v1330
      %v1332 = vrot.slane %v1297, 3
      %v1333 = vsel %vm1304, %v1330, %v1332
      %v1334 = vrot.slane %v1298, 3
      %v1335 = vsel %vm1304, %v1332, %v1334
      %v1336 = vrot.slane %v1299, 3
      %v1337 = vsel %vm1304, %v1334, %v1336
      %v1338 = vrot.slane %v1300, 3
      %v1339 = vsel %vm1304, %v1336, %v1338
      %v1340 = vrot.slane %v1301, 3
      %v1341 = vsel %vm1304, %v1338, %v1340
      %v1342 = vrot.slane %v1302, 3
      %v1343 = vsel %vm1304, %v1340, %v1342
      %v1344 = vrot.slane %v1303, 3
      %v1345 = vsel %vm1304, %v1342, %v1344
      %v1383 = vunpack.c.l.b16 %v1183
      %v1384 = vunpack.c.l.b16 %v1184
      %v1385 = vunpack.c.l.b16 %v1185
      %v1386 = vunpack.c.l.b16 %v1186
      %v1387 = vunpack.c.l.b16 %v1187
      %v1388 = vunpack.c.l.b16 %v1188
      %v1389 = vunpack.c.l.b16 %v1189
      %v1390 = vunpack.c.l.b16 %v1190
      %v1391 = vunpack.c.l.b16 %v1191
      %v1392 = vunpack.c.l.b16 %v1192
      %v1393 = vunpack.c.l.b16 %v1193
      %v1394 = vunpack.c.l.b16 %v1194
      %v1395 = vunpack.c.l.b16 %v1195
      %v1396 = vunpack.c.l.b16 %v1196
      %v1397 = vunpack.c.l.b16 %v1197
      %v1398 = vunpack.c.l.b16 %v1198
      %v1399 = vpack.c.b16 %v1384, %v1383
      %v1400 = vpack.c.b16 %v1386, %v1385
      %v1401 = vpack.c.b16 %v1388, %v1387
      %v1402 = vpack.c.b16 %v1390, %v1389
      %v1403 = vpack.c.b16 %v1392, %v1391
      %v1404 = vpack.c.b16 %v1394, %v1393
      %v1405 = vpack.c.b16 %v1396, %v1395
      %v1406 = vpack.c.b16 %v1398, %v1397
      %1415 = vmatpush.bf16.msra.mxu0 %v1406
      %1416 = vmatpush.bf16.msra.mxu0 %v1405
      %1417 = vmatpush.bf16.msra.mxu0 %v1404
      %1418 = vmatpush.bf16.msra.mxu0 %v1403
      %1419 = vmatpush.bf16.msra.mxu0 %v1402
      %1420 = vmatpush.bf16.msra.mxu0 %v1401
      %1421 = vmatpush.bf16.msra.mxu0 %v1400
      %1422 = vmatpush.bf16.msra.mxu0 %v1399
      %1423 = vmatmul.bf16.gmra.mxu0 %v1307
      %v1424 = vpop.f32.mrf.mxu0
      %v1425 = vadd.f32 0.0, %v1424
      %v1426 = vpop.f32.mrf.mxu0
      %v1427 = vadd.f32 0.0, %v1426
      %1428 = vmatmul.bf16.gmra.mxu0 %v1309
      %v1429 = vpop.f32.mrf.mxu0
      %v1430 = vadd.f32 0.0, %v1429
      %v1431 = vpop.f32.mrf.mxu0
      %v1432 = vadd.f32 0.0, %v1431
      %1433 = vmatmul.bf16.gmra.mxu0 %v1311
      %v1434 = vpop.f32.mrf.mxu0
      %v1435 = vadd.f32 0.0, %v1434
      %v1436 = vpop.f32.mrf.mxu0
      %v1437 = vadd.f32 0.0, %v1436
      %1438 = vmatmul.bf16.gmra.mxu0 %v1313
      %v1439 = vpop.f32.mrf.mxu0
      %v1440 = vadd.f32 0.0, %v1439
      %v1441 = vpop.f32.mrf.mxu0
      %v1442 = vadd.f32 0.0, %v1441
      %1443 = vmatmul.bf16.gmra.mxu0 %v1315
      %v1444 = vpop.f32.mrf.mxu0
      %v1445 = vadd.f32 0.0, %v1444
      %v1446 = vpop.f32.mrf.mxu0
      %v1447 = vadd.f32 0.0, %v1446
      %1448 = vmatmul.bf16.gmra.mxu0 %v1317
      %v1449 = vpop.f32.mrf.mxu0
      %v1450 = vadd.f32 0.0, %v1449
      %v1451 = vpop.f32.mrf.mxu0
      %v1452 = vadd.f32 0.0, %v1451
      %1453 = vmatmul.bf16.gmra.mxu0 %v1319
      %v1454 = vpop.f32.mrf.mxu0
      %v1455 = vadd.f32 0.0, %v1454
      %v1456 = vpop.f32.mrf.mxu0
      %v1457 = vadd.f32 0.0, %v1456
      %1458 = vmatmul.bf16.gmra.mxu0 %v1321
      %v1459 = vpop.f32.mrf.mxu0
      %v1460 = vadd.f32 0.0, %v1459
      %v1461 = vpop.f32.mrf.mxu0
      %v1462 = vadd.f32 0.0, %v1461
      %1463 = vmatmul.bf16.gmra.mxu0 %v1323
      %v1464 = vpop.f32.mrf.mxu0
      %v1465 = vadd.f32 0.0, %v1464
      %v1466 = vpop.f32.mrf.mxu0
      %v1467 = vadd.f32 0.0, %v1466
      %1468 = vmatmul.bf16.gmra.mxu0 %v1325
      %v1469 = vpop.f32.mrf.mxu0
      %v1470 = vadd.f32 0.0, %v1469
      %v1471 = vpop.f32.mrf.mxu0
      %v1472 = vadd.f32 0.0, %v1471
      %1473 = vmatmul.bf16.gmra.mxu0 %v1327
      %v1474 = vpop.f32.mrf.mxu0
      %v1475 = vadd.f32 0.0, %v1474
      %v1476 = vpop.f32.mrf.mxu0
      %v1477 = vadd.f32 0.0, %v1476
      %1478 = vmatmul.bf16.gmra.mxu0 %v1329
      %v1479 = vpop.f32.mrf.mxu0
      %v1480 = vadd.f32 0.0, %v1479
      %v1481 = vpop.f32.mrf.mxu0
      %v1482 = vadd.f32 0.0, %v1481
      %1483 = vmatmul.bf16.gmra.mxu0 %v1331
      %v1484 = vpop.f32.mrf.mxu0
      %v1485 = vadd.f32 0.0, %v1484
      %v1486 = vpop.f32.mrf.mxu0
      %v1487 = vadd.f32 0.0, %v1486
      %1488 = vmatmul.bf16.gmra.mxu0 %v1333
      %v1489 = vpop.f32.mrf.mxu0
      %v1490 = vadd.f32 0.0, %v1489
      %v1491 = vpop.f32.mrf.mxu0
      %v1492 = vadd.f32 0.0, %v1491
      %1493 = vmatmul.bf16.gmra.mxu0 %v1335
      %v1494 = vpop.f32.mrf.mxu0
      %v1495 = vadd.f32 0.0, %v1494
      %v1496 = vpop.f32.mrf.mxu0
      %v1497 = vadd.f32 0.0, %v1496
      %1498 = vmatmul.bf16.gmra.mxu0 %v1337
      %v1499 = vpop.f32.mrf.mxu0
      %v1500 = vadd.f32 0.0, %v1499
      %v1501 = vpop.f32.mrf.mxu0
      %v1502 = vadd.f32 0.0, %v1501
      %1503 = vmatmul.bf16.gmra.mxu0 %v1339
      %v1504 = vpop.f32.mrf.mxu0
      %v1505 = vadd.f32 0.0, %v1504
      %v1506 = vpop.f32.mrf.mxu0
      %v1507 = vadd.f32 0.0, %v1506
      %1508 = vmatmul.bf16.gmra.mxu0 %v1341
      %v1509 = vpop.f32.mrf.mxu0
      %v1510 = vadd.f32 0.0, %v1509
      %v1511 = vpop.f32.mrf.mxu0
      %v1512 = vadd.f32 0.0, %v1511
      %1513 = vmatmul.bf16.gmra.mxu0 %v1343
      %v1514 = vpop.f32.mrf.mxu0
      %v1515 = vadd.f32 0.0, %v1514
      %v1516 = vpop.f32.mrf.mxu0
      %v1517 = vadd.f32 0.0, %v1516
      %1518 = vmatmul.bf16.gmra.mxu0 %v1345
      %v1519 = vpop.f32.mrf.mxu0
      %v1520 = vadd.f32 0.0, %v1519
      %v1521 = vpop.f32.mrf.mxu0
      %v1522 = vadd.f32 0.0, %v1521
      %1523 = vmatmul.bf16.gmra.mxu0 %v1344
      %v1524 = vpop.f32.mrf.mxu0
      %v1525 = vadd.f32 0.0, %v1524
      %v1526 = vpop.f32.mrf.mxu0
      %1527 = vdwg.mxu0
      %v1529 = vunpack.c.l.b16 %v1123
      %v1530 = vpack.c.b16 %v1242, %v1529
      %vm1531 = vsmask.f32 5376
      %v1533 = vshrl.u32 %v1530, 16
      %v1535 = vrot.slane %v1533, 2
      %v1536 = vshll.u32 %v1530, 16
      %v1538 = vrot.slane %v1536, 3
      %v1539 = vor.u32 %v1535, %v1538
      %v1541 = vshrl.u32 %v1284, 16
      %v1543 = vrot.slane %v1541, 2
      %v1544 = vshll.u32 %v1284, 16
      %v1546 = vrot.slane %v1544, 3
      %v1547 = vor.u32 %v1543, %v1546
      %v1548 = vsel %vm1531, %v1539, %v1547
      %v1550 = vshrl.u32 %v1285, 16
      %v1552 = vrot.slane %v1550, 2
      %v1553 = vshll.u32 %v1285, 16
      %v1555 = vrot.slane %v1553, 3
      %v1556 = vor.u32 %v1552, %v1555
      %v1557 = vsel %vm1531, %v1547, %v1556
      %v1559 = vshrl.u32 %v1286, 16
      %v1561 = vrot.slane %v1559, 2
      %v1562 = vshll.u32 %v1286, 16
      %v1564 = vrot.slane %v1562, 3
      %v1565 = vor.u32 %v1561, %v1564
      %v1566 = vsel %vm1531, %v1556, %v1565
      %v1568 = vshrl.u32 %v1287, 16
      %v1570 = vrot.slane %v1568, 2
      %v1571 = vshll.u32 %v1287, 16
      %v1573 = vrot.slane %v1571, 3
      %v1574 = vor.u32 %v1570, %v1573
      %v1575 = vsel %vm1531, %v1565, %v1574
      %v1577 = vshrl.u32 %v1288, 16
      %v1579 = vrot.slane %v1577, 2
      %v1580 = vshll.u32 %v1288, 16
      %v1582 = vrot.slane %v1580, 3
      %v1583 = vor.u32 %v1579, %v1582
      %v1584 = vsel %vm1531, %v1574, %v1583
      %v1586 = vshrl.u32 %v1289, 16
      %v1588 = vrot.slane %v1586, 2
      %v1589 = vshll.u32 %v1289, 16
      %v1591 = vrot.slane %v1589, 3
      %v1592 = vor.u32 %v1588, %v1591
      %v1593 = vsel %vm1531, %v1583, %v1592
      %v1595 = vshrl.u32 %v1290, 16
      %v1597 = vrot.slane %v1595, 2
      %v1598 = vshll.u32 %v1290, 16
      %v1600 = vrot.slane %v1598, 3
      %v1601 = vor.u32 %v1597, %v1600
      %v1602 = vsel %vm1531, %v1592, %v1601
      %v1604 = vshrl.u32 %v1291, 16
      %v1606 = vrot.slane %v1604, 2
      %v1607 = vshll.u32 %v1291, 16
      %v1609 = vrot.slane %v1607, 3
      %v1610 = vor.u32 %v1606, %v1609
      %v1611 = vsel %vm1531, %v1601, %v1610
      %v1613 = vshrl.u32 %v1292, 16
      %v1615 = vrot.slane %v1613, 2
      %v1616 = vshll.u32 %v1292, 16
      %v1618 = vrot.slane %v1616, 3
      %v1619 = vor.u32 %v1615, %v1618
      %v1620 = vsel %vm1531, %v1610, %v1619
      %v1622 = vshrl.u32 %v1293, 16
      %v1624 = vrot.slane %v1622, 2
      %v1625 = vshll.u32 %v1293, 16
      %v1627 = vrot.slane %v1625, 3
      %v1628 = vor.u32 %v1624, %v1627
      %v1629 = vsel %vm1531, %v1619, %v1628
      %v1631 = vshrl.u32 %v1294, 16
      %v1633 = vrot.slane %v1631, 2
      %v1634 = vshll.u32 %v1294, 16
      %v1636 = vrot.slane %v1634, 3
      %v1637 = vor.u32 %v1633, %v1636
      %v1638 = vsel %vm1531, %v1628, %v1637
      %v1640 = vshrl.u32 %v1295, 16
      %v1642 = vrot.slane %v1640, 2
      %v1643 = vshll.u32 %v1295, 16
      %v1645 = vrot.slane %v1643, 3
      %v1646 = vor.u32 %v1642, %v1645
      %v1647 = vsel %vm1531, %v1637, %v1646
      %v1649 = vshrl.u32 %v1296, 16
      %v1651 = vrot.slane %v1649, 2
      %v1652 = vshll.u32 %v1296, 16
      %v1654 = vrot.slane %v1652, 3
      %v1655 = vor.u32 %v1651, %v1654
      %v1656 = vsel %vm1531, %v1646, %v1655
      %v1658 = vshrl.u32 %v1297, 16
      %v1660 = vrot.slane %v1658, 2
      %v1661 = vshll.u32 %v1297, 16
      %v1663 = vrot.slane %v1661, 3
      %v1664 = vor.u32 %v1660, %v1663
      %v1665 = vsel %vm1531, %v1655, %v1664
      %v1667 = vshrl.u32 %v1298, 16
      %v1669 = vrot.slane %v1667, 2
      %v1670 = vshll.u32 %v1298, 16
      %v1672 = vrot.slane %v1670, 3
      %v1673 = vor.u32 %v1669, %v1672
      %v1674 = vsel %vm1531, %v1664, %v1673
      %v1676 = vshrl.u32 %v1299, 16
      %v1678 = vrot.slane %v1676, 2
      %v1679 = vshll.u32 %v1299, 16
      %v1681 = vrot.slane %v1679, 3
      %v1682 = vor.u32 %v1678, %v1681
      %v1683 = vsel %vm1531, %v1673, %v1682
      %v1685 = vshrl.u32 %v1300, 16
      %v1687 = vrot.slane %v1685, 2
      %v1688 = vshll.u32 %v1300, 16
      %v1690 = vrot.slane %v1688, 3
      %v1691 = vor.u32 %v1687, %v1690
      %v1692 = vsel %vm1531, %v1682, %v1691
      %v1694 = vshrl.u32 %v1301, 16
      %v1696 = vrot.slane %v1694, 2
      %v1697 = vshll.u32 %v1301, 16
      %v1699 = vrot.slane %v1697, 3
      %v1700 = vor.u32 %v1696, %v1699
      %v1701 = vsel %vm1531, %v1691, %v1700
      %v1703 = vshrl.u32 %v1302, 16
      %v1705 = vrot.slane %v1703, 2
      %v1706 = vshll.u32 %v1302, 16
      %v1708 = vrot.slane %v1706, 3
      %v1709 = vor.u32 %v1705, %v1708
      %v1710 = vsel %vm1531, %v1700, %v1709
      %v1712 = vshrl.u32 %v1303, 16
      %v1714 = vrot.slane %v1712, 2
      %v1715 = vshll.u32 %v1303, 16
      %v1717 = vrot.slane %v1715, 3
      %v1718 = vor.u32 %v1714, %v1717
      %v1719 = vsel %vm1531, %v1709, %v1718
      %v1757 = vunpack.c.l.b16 %v1165
      %v1758 = vunpack.c.l.b16 %v1166
      %v1759 = vunpack.c.l.b16 %v1167
      %v1760 = vunpack.c.l.b16 %v1168
      %v1761 = vunpack.c.l.b16 %v1169
      %v1762 = vunpack.c.l.b16 %v1170
      %v1763 = vunpack.c.l.b16 %v1171
      %v1764 = vunpack.c.l.b16 %v1172
      %v1765 = vunpack.c.l.b16 %v1173
      %v1766 = vunpack.c.l.b16 %v1174
      %v1767 = vunpack.c.l.b16 %v1175
      %v1768 = vunpack.c.l.b16 %v1176
      %v1769 = vunpack.c.l.b16 %v1177
      %v1770 = vunpack.c.l.b16 %v1178
      %v1771 = vunpack.c.l.b16 %v1179
      %v1772 = vunpack.c.l.b16 %v1180
      %v1773 = vpack.c.b16 %v1758, %v1757
      %v1774 = vpack.c.b16 %v1760, %v1759
      %v1775 = vpack.c.b16 %v1762, %v1761
      %v1776 = vpack.c.b16 %v1764, %v1763
      %v1777 = vpack.c.b16 %v1766, %v1765
      %v1778 = vpack.c.b16 %v1768, %v1767
      %v1779 = vpack.c.b16 %v1770, %v1769
      %v1780 = vpack.c.b16 %v1772, %v1771
      %1789 = vmatpush.bf16.msra.mxu0 %v1780
      %1790 = vmatpush.bf16.msra.mxu0 %v1779
      %1791 = vmatpush.bf16.msra.mxu0 %v1778
      %1792 = vmatpush.bf16.msra.mxu0 %v1777
      %1793 = vmatpush.bf16.msra.mxu0 %v1776
      %1794 = vmatpush.bf16.msra.mxu0 %v1775
      %1795 = vmatpush.bf16.msra.mxu0 %v1774
      %1796 = vmatpush.bf16.msra.mxu0 %v1773
      %1797 = vmatmul.bf16.gmra.mxu0 %v1548
      %v1798 = vpop.f32.mrf.mxu0
      %v1799 = vadd.f32 %v1425, %v1798
      %v1800 = vpop.f32.mrf.mxu0
      %v1801 = vadd.f32 %v1427, %v1800
      %1802 = vmatmul.bf16.gmra.mxu0 %v1557
      %v1803 = vpop.f32.mrf.mxu0
      %v1804 = vadd.f32 %v1430, %v1803
      %v1805 = vpop.f32.mrf.mxu0
      %v1806 = vadd.f32 %v1432, %v1805
      %1807 = vmatmul.bf16.gmra.mxu0 %v1566
      %v1808 = vpop.f32.mrf.mxu0
      %v1809 = vadd.f32 %v1435, %v1808
      %v1810 = vpop.f32.mrf.mxu0
      %v1811 = vadd.f32 %v1437, %v1810
      %1812 = vmatmul.bf16.gmra.mxu0 %v1575
      %v1813 = vpop.f32.mrf.mxu0
      %v1814 = vadd.f32 %v1440, %v1813
      %v1815 = vpop.f32.mrf.mxu0
      %v1816 = vadd.f32 %v1442, %v1815
      %1817 = vmatmul.bf16.gmra.mxu0 %v1584
      %v1818 = vpop.f32.mrf.mxu0
      %v1819 = vadd.f32 %v1445, %v1818
      %v1820 = vpop.f32.mrf.mxu0
      %v1821 = vadd.f32 %v1447, %v1820
      %1822 = vmatmul.bf16.gmra.mxu0 %v1593
      %v1823 = vpop.f32.mrf.mxu0
      %v1824 = vadd.f32 %v1450, %v1823
      %v1825 = vpop.f32.mrf.mxu0
      %v1826 = vadd.f32 %v1452, %v1825
      %1827 = vmatmul.bf16.gmra.mxu0 %v1602
      %v1828 = vpop.f32.mrf.mxu0
      %v1829 = vadd.f32 %v1455, %v1828
      %v1830 = vpop.f32.mrf.mxu0
      %v1831 = vadd.f32 %v1457, %v1830
      %1832 = vmatmul.bf16.gmra.mxu0 %v1611
      %v1833 = vpop.f32.mrf.mxu0
      %v1834 = vadd.f32 %v1460, %v1833
      %v1835 = vpop.f32.mrf.mxu0
      %v1836 = vadd.f32 %v1462, %v1835
      %1837 = vmatmul.bf16.gmra.mxu0 %v1620
      %v1838 = vpop.f32.mrf.mxu0
      %v1839 = vadd.f32 %v1465, %v1838
      %v1840 = vpop.f32.mrf.mxu0
      %v1841 = vadd.f32 %v1467, %v1840
      %1842 = vmatmul.bf16.gmra.mxu0 %v1629
      %v1843 = vpop.f32.mrf.mxu0
      %v1844 = vadd.f32 %v1470, %v1843
      %v1845 = vpop.f32.mrf.mxu0
      %v1846 = vadd.f32 %v1472, %v1845
      %1847 = vmatmul.bf16.gmra.mxu0 %v1638
      %v1848 = vpop.f32.mrf.mxu0
      %v1849 = vadd.f32 %v1475, %v1848
      %v1850 = vpop.f32.mrf.mxu0
      %v1851 = vadd.f32 %v1477, %v1850
      %1852 = vmatmul.bf16.gmra.mxu0 %v1647
      %v1853 = vpop.f32.mrf.mxu0
      %v1854 = vadd.f32 %v1480, %v1853
      %v1855 = vpop.f32.mrf.mxu0
      %v1856 = vadd.f32 %v1482, %v1855
      %1857 = vmatmul.bf16.gmra.mxu0 %v1656
      %v1858 = vpop.f32.mrf.mxu0
      %v1859 = vadd.f32 %v1485, %v1858
      %v1860 = vpop.f32.mrf.mxu0
      %v1861 = vadd.f32 %v1487, %v1860
      %1862 = vmatmul.bf16.gmra.mxu0 %v1665
      %v1863 = vpop.f32.mrf.mxu0
      %v1864 = vadd.f32 %v1490, %v1863
      %v1865 = vpop.f32.mrf.mxu0
      %v1866 = vadd.f32 %v1492, %v1865
      %1867 = vmatmul.bf16.gmra.mxu0 %v1674
      %v1868 = vpop.f32.mrf.mxu0
      %v1869 = vadd.f32 %v1495, %v1868
      %v1870 = vpop.f32.mrf.mxu0
      %v1871 = vadd.f32 %v1497, %v1870
      %1872 = vmatmul.bf16.gmra.mxu0 %v1683
      %v1873 = vpop.f32.mrf.mxu0
      %v1874 = vadd.f32 %v1500, %v1873
      %v1875 = vpop.f32.mrf.mxu0
      %v1876 = vadd.f32 %v1502, %v1875
      %1877 = vmatmul.bf16.gmra.mxu0 %v1692
      %v1878 = vpop.f32.mrf.mxu0
      %v1879 = vadd.f32 %v1505, %v1878
      %v1880 = vpop.f32.mrf.mxu0
      %v1881 = vadd.f32 %v1507, %v1880
      %1882 = vmatmul.bf16.gmra.mxu0 %v1701
      %v1883 = vpop.f32.mrf.mxu0
      %v1884 = vadd.f32 %v1510, %v1883
      %v1885 = vpop.f32.mrf.mxu0
      %v1886 = vadd.f32 %v1512, %v1885
      %1887 = vmatmul.bf16.gmra.mxu0 %v1710
      %v1888 = vpop.f32.mrf.mxu0
      %v1889 = vadd.f32 %v1515, %v1888
      %v1890 = vpop.f32.mrf.mxu0
      %v1891 = vadd.f32 %v1517, %v1890
      %1892 = vmatmul.bf16.gmra.mxu0 %v1719
      %v1893 = vpop.f32.mrf.mxu0
      %v1894 = vadd.f32 %v1520, %v1893
      %v1895 = vpop.f32.mrf.mxu0
      %v1896 = vadd.f32 %v1522, %v1895
      %1897 = vmatmul.bf16.gmra.mxu0 %v1718
      %v1898 = vpop.f32.mrf.mxu0
      %v1899 = vadd.f32 %v1525, %v1898
      %v1900 = vpop.f32.mrf.mxu0
      %1901 = vdwg.mxu0
      %v1902 = vld [vmem:[#allocation2 + $0xa4] sm:$0xf]
      %s1903 = scalar_lea.vmem %s4, 128
      %v1904 = vld [vmem:[%s1903] sm:$0xf]
      %v1905 = vld [vmem:[%s1903 + $0x4] sm:$0xf]
      %v1906 = vld [vmem:[%s1903 + $0x8] sm:$0xf]
      %v1907 = vld [vmem:[%s1903 + $0xc] sm:$0xf]
      %v1908 = vld [vmem:[%s1903 + $0x10] sm:$0xf]
      %v1909 = vld [vmem:[%s1903 + $0x14] sm:$0xf]
      %v1910 = vld [vmem:[%s1903 + $0x18] sm:$0xf]
      %v1911 = vld [vmem:[%s1903 + $0x1c] sm:$0xf]
      %v1912 = vld [vmem:[%s1903 + $0x20] sm:$0xf]
      %v1913 = vld [vmem:[%s1903 + $0x24] sm:$0xf]
      %v1914 = vld [vmem:[%s1903 + $0x28] sm:$0xf]
      %v1915 = vld [vmem:[%s1903 + $0x2c] sm:$0xf]
      %v1916 = vld [vmem:[%s1903 + $0x30] sm:$0xf]
      %v1917 = vld [vmem:[%s1903 + $0x34] sm:$0xf]
      %v1918 = vld [vmem:[%s1903 + $0x38] sm:$0xf]
      %v1919 = vld [vmem:[%s1903 + $0x3c] sm:$0xf]
      %v1921 = vunpack.c.l.b16 %v1902
      %v1922 = vpack.c.b16 %v1921, %v1281
      %vm1923 = vsmask.f32 4352
      %v1925 = vshrl.u32 %v1283, 16
      %v1927 = vrot.slane %v1925, 3
      %v1928 = vshll.u32 %v1283, 16
      %v1930 = vrot.slane %v1928, 4
      %v1931 = vor.u32 %v1927, %v1930
      %v1932 = vrot.slane %v1541, 3
      %v1933 = vrot.slane %v1544, 4
      %v1934 = vor.u32 %v1932, %v1933
      %v1935 = vsel %vm1923, %v1931, %v1934
      %v1936 = vrot.slane %v1550, 3
      %v1937 = vrot.slane %v1553, 4
      %v1938 = vor.u32 %v1936, %v1937
      %v1939 = vsel %vm1923, %v1934, %v1938
      %v1940 = vrot.slane %v1559, 3
      %v1941 = vrot.slane %v1562, 4
      %v1942 = vor.u32 %v1940, %v1941
      %v1943 = vsel %vm1923, %v1938, %v1942
      %v1944 = vrot.slane %v1568, 3
      %v1945 = vrot.slane %v1571, 4
      %v1946 = vor.u32 %v1944, %v1945
      %v1947 = vsel %vm1923, %v1942, %v1946
      %v1948 = vrot.slane %v1577, 3
      %v1949 = vrot.slane %v1580, 4
      %v1950 = vor.u32 %v1948, %v1949
      %v1951 = vsel %vm1923, %v1946, %v1950
      %v1952 = vrot.slane %v1586, 3
      %v1953 = vrot.slane %v1589, 4
      %v1954 = vor.u32 %v1952, %v1953
      %v1955 = vsel %vm1923, %v1950, %v1954
      %v1956 = vrot.slane %v1595, 3
      %v1957 = vrot.slane %v1598, 4
      %v1958 = vor.u32 %v1956, %v1957
      %v1959 = vsel %vm1923, %v1954, %v1958
      %v1960 = vrot.slane %v1604, 3
      %v1961 = vrot.slane %v1607, 4
      %v1962 = vor.u32 %v1960, %v1961
      %v1963 = vsel %vm1923, %v1958, %v1962
      %v1964 = vrot.slane %v1613, 3
      %v1965 = vrot.slane %v1616, 4
      %v1966 = vor.u32 %v1964, %v1965
      %v1967 = vsel %vm1923, %v1962, %v1966
      %v1968 = vrot.slane %v1622, 3
      %v1969 = vrot.slane %v1625, 4
      %v1970 = vor.u32 %v1968, %v1969
      %v1971 = vsel %vm1923, %v1966, %v1970
      %v1972 = vrot.slane %v1631, 3
      %v1973 = vrot.slane %v1634, 4
      %v1974 = vor.u32 %v1972, %v1973
      %v1975 = vsel %vm1923, %v1970, %v1974
      %v1976 = vrot.slane %v1640, 3
      %v1977 = vrot.slane %v1643, 4
      %v1978 = vor.u32 %v1976, %v1977
      %v1979 = vsel %vm1923, %v1974, %v1978
      %v1980 = vrot.slane %v1649, 3
      %v1981 = vrot.slane %v1652, 4
      %v1982 = vor.u32 %v1980, %v1981
      %v1983 = vsel %vm1923, %v1978, %v1982
      %v1984 = vrot.slane %v1658, 3
      %v1985 = vrot.slane %v1661, 4
      %v1986 = vor.u32 %v1984, %v1985
      %v1987 = vsel %vm1923, %v1982, %v1986
      %v1988 = vrot.slane %v1667, 3
      %v1989 = vrot.slane %v1670, 4
      %v1990 = vor.u32 %v1988, %v1989
      %v1991 = vsel %vm1923, %v1986, %v1990
      %v1992 = vrot.slane %v1676, 3
      %v1993 = vrot.slane %v1679, 4
      %v1994 = vor.u32 %v1992, %v1993
      %v1995 = vsel %vm1923, %v1990, %v1994
      %v1996 = vrot.slane %v1685, 3
      %v1997 = vrot.slane %v1688, 4
      %v1998 = vor.u32 %v1996, %v1997
      %v1999 = vsel %vm1923, %v1994, %v1998
      %v2000 = vrot.slane %v1694, 3
      %v2001 = vrot.slane %v1697, 4
      %v2002 = vor.u32 %v2000, %v2001
      %v2003 = vsel %vm1923, %v1998, %v2002
      %v2004 = vrot.slane %v1703, 3
      %v2005 = vrot.slane %v1706, 4
      %v2006 = vor.u32 %v2004, %v2005
      %v2007 = vsel %vm1923, %v2002, %v2006
      %v2009 = vshrl.u32 %v1922, 16
      %v2011 = vrot.slane %v2009, 3
      %v2012 = vshll.u32 %v1922, 16
      %v2014 = vrot.slane %v2012, 4
      %v2015 = vor.u32 %v2011, %v2014
      %v2016 = vsel %vm1923, %v2006, %v2015
      %v2054 = vunpack.c.l.b16 %v1904
      %v2055 = vunpack.c.l.b16 %v1905
      %v2056 = vunpack.c.l.b16 %v1906
      %v2057 = vunpack.c.l.b16 %v1907
      %v2058 = vunpack.c.l.b16 %v1908
      %v2059 = vunpack.c.l.b16 %v1909
      %v2060 = vunpack.c.l.b16 %v1910
      %v2061 = vunpack.c.l.b16 %v1911
      %v2062 = vunpack.c.l.b16 %v1912
      %v2063 = vunpack.c.l.b16 %v1913
      %v2064 = vunpack.c.l.b16 %v1914
      %v2065 = vunpack.c.l.b16 %v1915
      %v2066 = vunpack.c.l.b16 %v1916
      %v2067 = vunpack.c.l.b16 %v1917
      %v2068 = vunpack.c.l.b16 %v1918
      %v2069 = vunpack.c.l.b16 %v1919
      %v2070 = vpack.c.b16 %v2055, %v2054
      %v2071 = vpack.c.b16 %v2057, %v2056
      %v2072 = vpack.c.b16 %v2059, %v2058
      %v2073 = vpack.c.b16 %v2061, %v2060
      %v2074 = vpack.c.b16 %v2063, %v2062
      %v2075 = vpack.c.b16 %v2065, %v2064
      %v2076 = vpack.c.b16 %v2067, %v2066
      %v2077 = vpack.c.b16 %v2069, %v2068
      %2086 = vmatpush.bf16.msra.mxu0 %v2077
      %2087 = vmatpush.bf16.msra.mxu0 %v2076
      %2088 = vmatpush.bf16.msra.mxu0 %v2075
      %2089 = vmatpush.bf16.msra.mxu0 %v2074
      %2090 = vmatpush.bf16.msra.mxu0 %v2073
      %2091 = vmatpush.bf16.msra.mxu0 %v2072
      %2092 = vmatpush.bf16.msra.mxu0 %v2071
      %2093 = vmatpush.bf16.msra.mxu0 %v2070
      %2094 = vmatmul.bf16.gmra.mxu0 %v1935
      %v2095 = vpop.f32.mrf.mxu0
      %v2096 = vadd.f32 0.0, %v2095
      %v2097 = vpop.f32.mrf.mxu0
      %v2098 = vadd.f32 0.0, %v2097
      %2099 = vmatmul.bf16.gmra.mxu0 %v1939
      %v2100 = vpop.f32.mrf.mxu0
      %v2101 = vadd.f32 0.0, %v2100
      %v2102 = vpop.f32.mrf.mxu0
      %v2103 = vadd.f32 0.0, %v2102
      %2104 = vmatmul.bf16.gmra.mxu0 %v1943
      %v2105 = vpop.f32.mrf.mxu0
      %v2106 = vadd.f32 0.0, %v2105
      %v2107 = vpop.f32.mrf.mxu0
      %v2108 = vadd.f32 0.0, %v2107
      %2109 = vmatmul.bf16.gmra.mxu0 %v1947
      %v2110 = vpop.f32.mrf.mxu0
      %v2111 = vadd.f32 0.0, %v2110
      %v2112 = vpop.f32.mrf.mxu0
      %v2113 = vadd.f32 0.0, %v2112
      %2114 = vmatmul.bf16.gmra.mxu0 %v1951
      %v2115 = vpop.f32.mrf.mxu0
      %v2116 = vadd.f32 0.0, %v2115
      %v2117 = vpop.f32.mrf.mxu0
      %v2118 = vadd.f32 0.0, %v2117
      %2119 = vmatmul.bf16.gmra.mxu0 %v1955
      %v2120 = vpop.f32.mrf.mxu0
      %v2121 = vadd.f32 0.0, %v2120
      %v2122 = vpop.f32.mrf.mxu0
      %v2123 = vadd.f32 0.0, %v2122
      %2124 = vmatmul.bf16.gmra.mxu0 %v1959
      %v2125 = vpop.f32.mrf.mxu0
      %v2126 = vadd.f32 0.0, %v2125
      %v2127 = vpop.f32.mrf.mxu0
      %v2128 = vadd.f32 0.0, %v2127
      %2129 = vmatmul.bf16.gmra.mxu0 %v1963
      %v2130 = vpop.f32.mrf.mxu0
      %v2131 = vadd.f32 0.0, %v2130
      %v2132 = vpop.f32.mrf.mxu0
      %v2133 = vadd.f32 0.0, %v2132
      %2134 = vmatmul.bf16.gmra.mxu0 %v1967
      %v2135 = vpop.f32.mrf.mxu0
      %v2136 = vadd.f32 0.0, %v2135
      %v2137 = vpop.f32.mrf.mxu0
      %v2138 = vadd.f32 0.0, %v2137
      %2139 = vmatmul.bf16.gmra.mxu0 %v1971
      %v2140 = vpop.f32.mrf.mxu0
      %v2141 = vadd.f32 0.0, %v2140
      %v2142 = vpop.f32.mrf.mxu0
      %v2143 = vadd.f32 0.0, %v2142
      %2144 = vmatmul.bf16.gmra.mxu0 %v1975
      %v2145 = vpop.f32.mrf.mxu0
      %v2146 = vadd.f32 0.0, %v2145
      %v2147 = vpop.f32.mrf.mxu0
      %v2148 = vadd.f32 0.0, %v2147
      %2149 = vmatmul.bf16.gmra.mxu0 %v1979
      %v2150 = vpop.f32.mrf.mxu0
      %v2151 = vadd.f32 0.0, %v2150
      %v2152 = vpop.f32.mrf.mxu0
      %v2153 = vadd.f32 0.0, %v2152
      %2154 = vmatmul.bf16.gmra.mxu0 %v1983
      %v2155 = vpop.f32.mrf.mxu0
      %v2156 = vadd.f32 0.0, %v2155
      %v2157 = vpop.f32.mrf.mxu0
      %v2158 = vadd.f32 0.0, %v2157
      %2159 = vmatmul.bf16.gmra.mxu0 %v1987
      %v2160 = vpop.f32.mrf.mxu0
      %v2161 = vadd.f32 0.0, %v2160
      %v2162 = vpop.f32.mrf.mxu0
      %v2163 = vadd.f32 0.0, %v2162
      %2164 = vmatmul.bf16.gmra.mxu0 %v1991
      %v2165 = vpop.f32.mrf.mxu0
      %v2166 = vadd.f32 0.0, %v2165
      %v2167 = vpop.f32.mrf.mxu0
      %v2168 = vadd.f32 0.0, %v2167
      %2169 = vmatmul.bf16.gmra.mxu0 %v1995
      %v2170 = vpop.f32.mrf.mxu0
      %v2171 = vadd.f32 0.0, %v2170
      %v2172 = vpop.f32.mrf.mxu0
      %v2173 = vadd.f32 0.0, %v2172
      %2174 = vmatmul.bf16.gmra.mxu0 %v1999
      %v2175 = vpop.f32.mrf.mxu0
      %v2176 = vadd.f32 0.0, %v2175
      %v2177 = vpop.f32.mrf.mxu0
      %v2178 = vadd.f32 0.0, %v2177
      %2179 = vmatmul.bf16.gmra.mxu0 %v2003
      %v2180 = vpop.f32.mrf.mxu0
      %v2181 = vadd.f32 0.0, %v2180
      %v2182 = vpop.f32.mrf.mxu0
      %v2183 = vadd.f32 0.0, %v2182
      %2184 = vmatmul.bf16.gmra.mxu0 %v2007
      %v2185 = vpop.f32.mrf.mxu0
      %v2186 = vadd.f32 0.0, %v2185
      %v2187 = vpop.f32.mrf.mxu0
      %v2188 = vadd.f32 0.0, %v2187
      %2189 = vmatmul.bf16.gmra.mxu0 %v2016
      %v2190 = vpop.f32.mrf.mxu0
      %v2191 = vadd.f32 0.0, %v2190
      %v2192 = vpop.f32.mrf.mxu0
      %v2193 = vadd.f32 0.0, %v2192
      %2194 = vmatmul.bf16.gmra.mxu0 %v2015
      %v2195 = vpop.f32.mrf.mxu0
      %v2196 = vadd.f32 0.0, %v2195
      %v2197 = vpop.f32.mrf.mxu0
      %2198 = vdwg.mxu0
      %v2199 = vadd.f32 %v1799, %v2096
      %v2200 = vadd.f32 %v1801, %v2098
      %v2201 = vadd.f32 %v1804, %v2101
      %v2202 = vadd.f32 %v1806, %v2103
      %v2203 = vadd.f32 %v1809, %v2106
      %v2204 = vadd.f32 %v1811, %v2108
      %v2205 = vadd.f32 %v1814, %v2111
      %v2206 = vadd.f32 %v1816, %v2113
      %v2207 = vadd.f32 %v1819, %v2116
      %v2208 = vadd.f32 %v1821, %v2118
      %v2209 = vadd.f32 %v1824, %v2121
      %v2210 = vadd.f32 %v1826, %v2123
      %v2211 = vadd.f32 %v1829, %v2126
      %v2212 = vadd.f32 %v1831, %v2128
      %v2213 = vadd.f32 %v1834, %v2131
      %v2214 = vadd.f32 %v1836, %v2133
      %v2215 = vadd.f32 %v1839, %v2136
      %v2216 = vadd.f32 %v1841, %v2138
      %v2217 = vadd.f32 %v1844, %v2141
      %v2218 = vadd.f32 %v1846, %v2143
      %v2219 = vadd.f32 %v1849, %v2146
      %v2220 = vadd.f32 %v1851, %v2148
      %v2221 = vadd.f32 %v1854, %v2151
      %v2222 = vadd.f32 %v1856, %v2153
      %v2223 = vadd.f32 %v1859, %v2156
      %v2224 = vadd.f32 %v1861, %v2158
      %v2225 = vadd.f32 %v1864, %v2161
      %v2226 = vadd.f32 %v1866, %v2163
      %v2227 = vadd.f32 %v1869, %v2166
      %v2228 = vadd.f32 %v1871, %v2168
      %v2229 = vadd.f32 %v1874, %v2171
      %v2230 = vadd.f32 %v1876, %v2173
      %v2231 = vadd.f32 %v1879, %v2176
      %v2232 = vadd.f32 %v1881, %v2178
      %v2233 = vadd.f32 %v1884, %v2181
      %v2234 = vadd.f32 %v1886, %v2183
      %v2235 = vadd.f32 %v1889, %v2186
      %v2236 = vadd.f32 %v1891, %v2188
      %v2237 = vadd.f32 %v1894, %v2191
      %v2238 = vadd.f32 %v1896, %v2193
      %v2239 = vadd.f32 %v1899, %v2196
      %v2240 = vld [vmem:[#allocation2 + $0x8] sm:$0x8]
      %v2241 = vld [vmem:[#allocation2 + $0xc] sm:$0xf]
      %v2242 = vld [vmem:[#allocation2 + $0x10] sm:$0xf]
      %v2243 = vld [vmem:[#allocation2 + $0x14] sm:$0xf]
      %v2244 = vld [vmem:[#allocation2 + $0x18] sm:$0xf]
      %v2245 = vld [vmem:[#allocation2 + $0x1c] sm:$0xf]
      %v2246 = vld [vmem:[#allocation2 + $0x20] sm:$0xf]
      %v2247 = vld [vmem:[#allocation2 + $0x24] sm:$0xf]
      %v2248 = vld [vmem:[#allocation2 + $0x28] sm:$0xf]
      %v2249 = vld [vmem:[#allocation2 + $0x2c] sm:$0xf]
      %v2250 = vld [vmem:[#allocation2 + $0x30] sm:$0xf]
      %v2251 = vld [vmem:[#allocation2 + $0x34] sm:$0xf]
      %v2252 = vld [vmem:[#allocation2 + $0x38] sm:$0xf]
      %v2253 = vld [vmem:[#allocation2 + $0x3c] sm:$0xf]
      %v2254 = vld [vmem:[#allocation2 + $0x40] sm:$0xf]
      %v2255 = vld [vmem:[#allocation2 + $0x44] sm:$0xf]
      %v2256 = vld [vmem:[#allocation2 + $0x48] sm:$0xf]
      %v2257 = vld [vmem:[#allocation2 + $0x4c] sm:$0xf]
      %v2258 = vld [vmem:[#allocation2 + $0x50] sm:$0xf]
      %v2259 = vld [vmem:[#allocation2 + $0x54] sm:$0xf]
      %v2260 = vld [vmem:[#allocation2 + $0x58] sm:$0xf]
      %v2261 = vld [vmem:[#allocation2 + $0x5c] sm:$0xf]
      %v2262 = vld [vmem:[#allocation2 + $0x60] sm:$0xf]
      %v2263 = vld [vmem:[#allocation2 + $0x64] sm:$0xf]
      %v2264 = vld [vmem:[#allocation2 + $0x68] sm:$0xf]
      %v2265 = vld [vmem:[#allocation2 + $0x6c] sm:$0xf]
      %v2266 = vld [vmem:[#allocation2 + $0x70] sm:$0xf]
      %v2267 = vld [vmem:[#allocation2 + $0x74] sm:$0xf]
      %v2268 = vld [vmem:[#allocation2 + $0x78] sm:$0xf]
      %v2269 = vld [vmem:[#allocation2 + $0x7c] sm:$0xf]
      %v2270 = vld [vmem:[#allocation2 + $0x80] sm:$0xf]
      %v2271 = vld [vmem:[#allocation2 + $0x84] sm:$0xf]
      %v2272 = vld [vmem:[#allocation2 + $0x88] sm:$0xf]
      %v2273 = vld [vmem:[#allocation2 + $0x8c] sm:$0xf]
      %v2274 = vld [vmem:[#allocation2 + $0x90] sm:$0xf]
      %v2275 = vld [vmem:[#allocation2 + $0x94] sm:$0xf]
      %v2276 = vld [vmem:[#allocation2 + $0x98] sm:$0xf]
      %v2277 = vld [vmem:[#allocation2 + $0x9c] sm:$0xf]
      %v2278 = vld [vmem:[#allocation2 + $0xa0] sm:$0xf]
      %v2279 = vld [vmem:[#allocation2 + $0xa4] sm:$0xf]
      %v2280 = vld [vmem:[#allocation2 + $0xa8] sm:$0xf]
      %v2281 = vld [vmem:[#allocation2 + $0xac] sm:$0xf]
      %s2282 = scalar_lea.vmem %s4, 192
      %v2283 = vld [vmem:[%s2282] sm:$0xf]
      %v2284 = vld [vmem:[%s2282 + $0x4] sm:$0xf]
      %v2285 = vld [vmem:[%s2282 + $0x8] sm:$0xf]
      %v2286 = vld [vmem:[%s2282 + $0xc] sm:$0xf]
      %v2287 = vld [vmem:[%s2282 + $0x10] sm:$0xf]
      %v2288 = vld [vmem:[%s2282 + $0x14] sm:$0xf]
      %v2289 = vld [vmem:[%s2282 + $0x18] sm:$0xf]
      %v2290 = vld [vmem:[%s2282 + $0x1c] sm:$0xf]
      %v2291 = vld [vmem:[%s2282 + $0x20] sm:$0xf]
      %v2292 = vld [vmem:[%s2282 + $0x24] sm:$0xf]
      %v2293 = vld [vmem:[%s2282 + $0x28] sm:$0xf]
      %v2294 = vld [vmem:[%s2282 + $0x2c] sm:$0xf]
      %v2295 = vld [vmem:[%s2282 + $0x30] sm:$0xf]
      %v2296 = vld [vmem:[%s2282 + $0x34] sm:$0xf]
      %v2297 = vld [vmem:[%s2282 + $0x38] sm:$0xf]
      %v2298 = vld [vmem:[%s2282 + $0x3c] sm:$0xf]
      %v2341 = vunpack.c.l.b16 %v2240
      %v2342 = vunpack.c.l.b16 %v2241
      %v2343 = vunpack.c.l.b16 %v2242
      %v2344 = vunpack.c.l.b16 %v2243
      %v2345 = vunpack.c.l.b16 %v2244
      %v2346 = vunpack.c.l.b16 %v2245
      %v2347 = vunpack.c.l.b16 %v2246
      %v2348 = vunpack.c.l.b16 %v2247
      %v2349 = vunpack.c.l.b16 %v2248
      %v2350 = vunpack.c.l.b16 %v2249
      %v2351 = vunpack.c.l.b16 %v2250
      %v2352 = vunpack.c.l.b16 %v2251
      %v2353 = vunpack.c.l.b16 %v2252
      %v2354 = vunpack.c.l.b16 %v2253
      %v2355 = vunpack.c.l.b16 %v2254
      %v2356 = vunpack.c.l.b16 %v2255
      %v2357 = vunpack.c.l.b16 %v2256
      %v2358 = vunpack.c.l.b16 %v2257
      %v2359 = vunpack.c.l.b16 %v2258
      %v2360 = vunpack.c.l.b16 %v2259
      %v2361 = vunpack.c.l.b16 %v2260
      %v2362 = vunpack.c.l.b16 %v2261
      %v2363 = vunpack.c.l.b16 %v2262
      %v2364 = vunpack.c.l.b16 %v2263
      %v2365 = vunpack.c.l.b16 %v2264
      %v2366 = vunpack.c.l.b16 %v2265
      %v2367 = vunpack.c.l.b16 %v2266
      %v2368 = vunpack.c.l.b16 %v2267
      %v2369 = vunpack.c.l.b16 %v2268
      %v2370 = vunpack.c.l.b16 %v2269
      %v2371 = vunpack.c.l.b16 %v2270
      %v2372 = vunpack.c.l.b16 %v2271
      %v2373 = vunpack.c.l.b16 %v2272
      %v2374 = vunpack.c.l.b16 %v2273
      %v2375 = vunpack.c.l.b16 %v2274
      %v2376 = vunpack.c.l.b16 %v2275
      %v2377 = vunpack.c.l.b16 %v2276
      %v2378 = vunpack.c.l.b16 %v2277
      %v2379 = vunpack.c.l.b16 %v2278
      %v2380 = vunpack.c.l.b16 %v2279
      %v2381 = vunpack.c.l.b16 %v2280
      %v2382 = vunpack.c.l.b16 %v2281
      %v2383 = vpack.c.b16 %v2342, %v2341
      %v2384 = vpack.c.b16 %v2344, %v2343
      %v2385 = vpack.c.b16 %v2346, %v2345
      %v2386 = vpack.c.b16 %v2348, %v2347
      %v2387 = vpack.c.b16 %v2350, %v2349
      %v2388 = vpack.c.b16 %v2352, %v2351
      %v2389 = vpack.c.b16 %v2354, %v2353
      %v2390 = vpack.c.b16 %v2356, %v2355
      %v2391 = vpack.c.b16 %v2358, %v2357
      %v2392 = vpack.c.b16 %v2360, %v2359
      %v2393 = vpack.c.b16 %v2362, %v2361
      %v2394 = vpack.c.b16 %v2364, %v2363
      %v2395 = vpack.c.b16 %v2366, %v2365
      %v2396 = vpack.c.b16 %v2368, %v2367
      %v2397 = vpack.c.b16 %v2370, %v2369
      %v2398 = vpack.c.b16 %v2372, %v2371
      %v2399 = vpack.c.b16 %v2374, %v2373
      %v2400 = vpack.c.b16 %v2376, %v2375
      %v2401 = vpack.c.b16 %v2378, %v2377
      %v2402 = vpack.c.b16 %v2380, %v2379
      %v2403 = vpack.c.b16 %v2382, %v2381
      %v2405 = vshrl.u32 %v2383, 16
      %v2407 = vrot.slane %v2405, 3
      %v2408 = vshll.u32 %v2383, 16
      %v2410 = vrot.slane %v2408, 4
      %v2411 = vor.u32 %v2407, %v2410
      %v2413 = vshrl.u32 %v2384, 16
      %v2415 = vrot.slane %v2413, 3
      %v2416 = vshll.u32 %v2384, 16
      %v2418 = vrot.slane %v2416, 4
      %v2419 = vor.u32 %v2415, %v2418
      %v2420 = vsel %vm1923, %v2411, %v2419
      %v2422 = vshrl.u32 %v2385, 16
      %v2424 = vrot.slane %v2422, 3
      %v2425 = vshll.u32 %v2385, 16
      %v2427 = vrot.slane %v2425, 4
      %v2428 = vor.u32 %v2424, %v2427
      %v2429 = vsel %vm1923, %v2419, %v2428
      %v2431 = vshrl.u32 %v2386, 16
      %v2433 = vrot.slane %v2431, 3
      %v2434 = vshll.u32 %v2386, 16
      %v2436 = vrot.slane %v2434, 4
      %v2437 = vor.u32 %v2433, %v2436
      %v2438 = vsel %vm1923, %v2428, %v2437
      %v2440 = vshrl.u32 %v2387, 16
      %v2442 = vrot.slane %v2440, 3
      %v2443 = vshll.u32 %v2387, 16
      %v2445 = vrot.slane %v2443, 4
      %v2446 = vor.u32 %v2442, %v2445
      %v2447 = vsel %vm1923, %v2437, %v2446
      %v2449 = vshrl.u32 %v2388, 16
      %v2451 = vrot.slane %v2449, 3
      %v2452 = vshll.u32 %v2388, 16
      %v2454 = vrot.slane %v2452, 4
      %v2455 = vor.u32 %v2451, %v2454
      %v2456 = vsel %vm1923, %v2446, %v2455
      %v2458 = vshrl.u32 %v2389, 16
      %v2460 = vrot.slane %v2458, 3
      %v2461 = vshll.u32 %v2389, 16
      %v2463 = vrot.slane %v2461, 4
      %v2464 = vor.u32 %v2460, %v2463
      %v2465 = vsel %vm1923, %v2455, %v2464
      %v2467 = vshrl.u32 %v2390, 16
      %v2469 = vrot.slane %v2467, 3
      %v2470 = vshll.u32 %v2390, 16
      %v2472 = vrot.slane %v2470, 4
      %v2473 = vor.u32 %v2469, %v2472
      %v2474 = vsel %vm1923, %v2464, %v2473
      %v2476 = vshrl.u32 %v2391, 16
      %v2478 = vrot.slane %v2476, 3
      %v2479 = vshll.u32 %v2391, 16
      %v2481 = vrot.slane %v2479, 4
      %v2482 = vor.u32 %v2478, %v2481
      %v2483 = vsel %vm1923, %v2473, %v2482
      %v2485 = vshrl.u32 %v2392, 16
      %v2487 = vrot.slane %v2485, 3
      %v2488 = vshll.u32 %v2392, 16
      %v2490 = vrot.slane %v2488, 4
      %v2491 = vor.u32 %v2487, %v2490
      %v2492 = vsel %vm1923, %v2482, %v2491
      %v2494 = vshrl.u32 %v2393, 16
      %v2496 = vrot.slane %v2494, 3
      %v2497 = vshll.u32 %v2393, 16
      %v2499 = vrot.slane %v2497, 4
      %v2500 = vor.u32 %v2496, %v2499
      %v2501 = vsel %vm1923, %v2491, %v2500
      %v2503 = vshrl.u32 %v2394, 16
      %v2505 = vrot.slane %v2503, 3
      %v2506 = vshll.u32 %v2394, 16
      %v2508 = vrot.slane %v2506, 4
      %v2509 = vor.u32 %v2505, %v2508
      %v2510 = vsel %vm1923, %v2500, %v2509
      %v2512 = vshrl.u32 %v2395, 16
      %v2514 = vrot.slane %v2512, 3
      %v2515 = vshll.u32 %v2395, 16
      %v2517 = vrot.slane %v2515, 4
      %v2518 = vor.u32 %v2514, %v2517
      %v2519 = vsel %vm1923, %v2509, %v2518
      %v2521 = vshrl.u32 %v2396, 16
      %v2523 = vrot.slane %v2521, 3
      %v2524 = vshll.u32 %v2396, 16
      %v2526 = vrot.slane %v2524, 4
      %v2527 = vor.u32 %v2523, %v2526
      %v2528 = vsel %vm1923, %v2518, %v2527
      %v2530 = vshrl.u32 %v2397, 16
      %v2532 = vrot.slane %v2530, 3
      %v2533 = vshll.u32 %v2397, 16
      %v2535 = vrot.slane %v2533, 4
      %v2536 = vor.u32 %v2532, %v2535
      %v2537 = vsel %vm1923, %v2527, %v2536
      %v2539 = vshrl.u32 %v2398, 16
      %v2541 = vrot.slane %v2539, 3
      %v2542 = vshll.u32 %v2398, 16
      %v2544 = vrot.slane %v2542, 4
      %v2545 = vor.u32 %v2541, %v2544
      %v2546 = vsel %vm1923, %v2536, %v2545
      %v2548 = vshrl.u32 %v2399, 16
      %v2550 = vrot.slane %v2548, 3
      %v2551 = vshll.u32 %v2399, 16
      %v2553 = vrot.slane %v2551, 4
      %v2554 = vor.u32 %v2550, %v2553
      %v2555 = vsel %vm1923, %v2545, %v2554
      %v2557 = vshrl.u32 %v2400, 16
      %v2559 = vrot.slane %v2557, 3
      %v2560 = vshll.u32 %v2400, 16
      %v2562 = vrot.slane %v2560, 4
      %v2563 = vor.u32 %v2559, %v2562
      %v2564 = vsel %vm1923, %v2554, %v2563
      %v2566 = vshrl.u32 %v2401, 16
      %v2568 = vrot.slane %v2566, 3
      %v2569 = vshll.u32 %v2401, 16
      %v2571 = vrot.slane %v2569, 4
      %v2572 = vor.u32 %v2568, %v2571
      %v2573 = vsel %vm1923, %v2563, %v2572
      %v2575 = vshrl.u32 %v2402, 16
      %v2577 = vrot.slane %v2575, 3
      %v2578 = vshll.u32 %v2402, 16
      %v2580 = vrot.slane %v2578, 4
      %v2581 = vor.u32 %v2577, %v2580
      %v2582 = vsel %vm1923, %v2572, %v2581
      %v2584 = vshrl.u32 %v2403, 16
      %v2586 = vrot.slane %v2584, 3
      %v2587 = vshll.u32 %v2403, 16
      %v2589 = vrot.slane %v2587, 4
      %v2590 = vor.u32 %v2586, %v2589
      %v2591 = vsel %vm1923, %v2581, %v2590
      %v2629 = vunpack.c.l.b16 %v2283
      %v2630 = vunpack.c.l.b16 %v2284
      %v2631 = vunpack.c.l.b16 %v2285
      %v2632 = vunpack.c.l.b16 %v2286
      %v2633 = vunpack.c.l.b16 %v2287
      %v2634 = vunpack.c.l.b16 %v2288
      %v2635 = vunpack.c.l.b16 %v2289
      %v2636 = vunpack.c.l.b16 %v2290
      %v2637 = vunpack.c.l.b16 %v2291
      %v2638 = vunpack.c.l.b16 %v2292
      %v2639 = vunpack.c.l.b16 %v2293
      %v2640 = vunpack.c.l.b16 %v2294
      %v2641 = vunpack.c.l.b16 %v2295
      %v2642 = vunpack.c.l.b16 %v2296
      %v2643 = vunpack.c.l.b16 %v2297
      %v2644 = vunpack.c.l.b16 %v2298
      %v2645 = vpack.c.b16 %v2630, %v2629
      %v2646 = vpack.c.b16 %v2632, %v2631
      %v2647 = vpack.c.b16 %v2634, %v2633
      %v2648 = vpack.c.b16 %v2636, %v2635
      %v2649 = vpack.c.b16 %v2638, %v2637
      %v2650 = vpack.c.b16 %v2640, %v2639
      %v2651 = vpack.c.b16 %v2642, %v2641
      %v2652 = vpack.c.b16 %v2644, %v2643
      %2661 = vmatpush.bf16.msra.mxu0 %v2652
      %2662 = vmatpush.bf16.msra.mxu0 %v2651
      %2663 = vmatpush.bf16.msra.mxu0 %v2650
      %2664 = vmatpush.bf16.msra.mxu0 %v2649
      %2665 = vmatpush.bf16.msra.mxu0 %v2648
      %2666 = vmatpush.bf16.msra.mxu0 %v2647
      %2667 = vmatpush.bf16.msra.mxu0 %v2646
      %2668 = vmatpush.bf16.msra.mxu0 %v2645
      %2669 = vmatmul.bf16.gmra.mxu0 %v2420
      %v2670 = vpop.f32.mrf.mxu0
      %v2671 = vadd.f32 0.0, %v2670
      %v2672 = vpop.f32.mrf.mxu0
      %v2673 = vadd.f32 0.0, %v2672
      %2674 = vmatmul.bf16.gmra.mxu0 %v2429
      %v2675 = vpop.f32.mrf.mxu0
      %v2676 = vadd.f32 0.0, %v2675
      %v2677 = vpop.f32.mrf.mxu0
      %v2678 = vadd.f32 0.0, %v2677
      %2679 = vmatmul.bf16.gmra.mxu0 %v2438
      %v2680 = vpop.f32.mrf.mxu0
      %v2681 = vadd.f32 0.0, %v2680
      %v2682 = vpop.f32.mrf.mxu0
      %v2683 = vadd.f32 0.0, %v2682
      %2684 = vmatmul.bf16.gmra.mxu0 %v2447
      %v2685 = vpop.f32.mrf.mxu0
      %v2686 = vadd.f32 0.0, %v2685
      %v2687 = vpop.f32.mrf.mxu0
      %v2688 = vadd.f32 0.0, %v2687
      %2689 = vmatmul.bf16.gmra.mxu0 %v2456
      %v2690 = vpop.f32.mrf.mxu0
      %v2691 = vadd.f32 0.0, %v2690
      %v2692 = vpop.f32.mrf.mxu0
      %v2693 = vadd.f32 0.0, %v2692
      %2694 = vmatmul.bf16.gmra.mxu0 %v2465
      %v2695 = vpop.f32.mrf.mxu0
      %v2696 = vadd.f32 0.0, %v2695
      %v2697 = vpop.f32.mrf.mxu0
      %v2698 = vadd.f32 0.0, %v2697
      %2699 = vmatmul.bf16.gmra.mxu0 %v2474
      %v2700 = vpop.f32.mrf.mxu0
      %v2701 = vadd.f32 0.0, %v2700
      %v2702 = vpop.f32.mrf.mxu0
      %v2703 = vadd.f32 0.0, %v2702
      %2704 = vmatmul.bf16.gmra.mxu0 %v2483
      %v2705 = vpop.f32.mrf.mxu0
      %v2706 = vadd.f32 0.0, %v2705
      %v2707 = vpop.f32.mrf.mxu0
      %v2708 = vadd.f32 0.0, %v2707
      %2709 = vmatmul.bf16.gmra.mxu0 %v2492
      %v2710 = vpop.f32.mrf.mxu0
      %v2711 = vadd.f32 0.0, %v2710
      %v2712 = vpop.f32.mrf.mxu0
      %v2713 = vadd.f32 0.0, %v2712
      %2714 = vmatmul.bf16.gmra.mxu0 %v2501
      %v2715 = vpop.f32.mrf.mxu0
      %v2716 = vadd.f32 0.0, %v2715
      %v2717 = vpop.f32.mrf.mxu0
      %v2718 = vadd.f32 0.0, %v2717
      %2719 = vmatmul.bf16.gmra.mxu0 %v2510
      %v2720 = vpop.f32.mrf.mxu0
      %v2721 = vadd.f32 0.0, %v2720
      %v2722 = vpop.f32.mrf.mxu0
      %v2723 = vadd.f32 0.0, %v2722
      %2724 = vmatmul.bf16.gmra.mxu0 %v2519
      %v2725 = vpop.f32.mrf.mxu0
      %v2726 = vadd.f32 0.0, %v2725
      %v2727 = vpop.f32.mrf.mxu0
      %v2728 = vadd.f32 0.0, %v2727
      %2729 = vmatmul.bf16.gmra.mxu0 %v2528
      %v2730 = vpop.f32.mrf.mxu0
      %v2731 = vadd.f32 0.0, %v2730
      %v2732 = vpop.f32.mrf.mxu0
      %v2733 = vadd.f32 0.0, %v2732
      %2734 = vmatmul.bf16.gmra.mxu0 %v2537
      %v2735 = vpop.f32.mrf.mxu0
      %v2736 = vadd.f32 0.0, %v2735
      %v2737 = vpop.f32.mrf.mxu0
      %v2738 = vadd.f32 0.0, %v2737
      %2739 = vmatmul.bf16.gmra.mxu0 %v2546
      %v2740 = vpop.f32.mrf.mxu0
      %v2741 = vadd.f32 0.0, %v2740
      %v2742 = vpop.f32.mrf.mxu0
      %v2743 = vadd.f32 0.0, %v2742
      %2744 = vmatmul.bf16.gmra.mxu0 %v2555
      %v2745 = vpop.f32.mrf.mxu0
      %v2746 = vadd.f32 0.0, %v2745
      %v2747 = vpop.f32.mrf.mxu0
      %v2748 = vadd.f32 0.0, %v2747
      %2749 = vmatmul.bf16.gmra.mxu0 %v2564
      %v2750 = vpop.f32.mrf.mxu0
      %v2751 = vadd.f32 0.0, %v2750
      %v2752 = vpop.f32.mrf.mxu0
      %v2753 = vadd.f32 0.0, %v2752
      %2754 = vmatmul.bf16.gmra.mxu0 %v2573
      %v2755 = vpop.f32.mrf.mxu0
      %v2756 = vadd.f32 0.0, %v2755
      %v2757 = vpop.f32.mrf.mxu0
      %v2758 = vadd.f32 0.0, %v2757
      %2759 = vmatmul.bf16.gmra.mxu0 %v2582
      %v2760 = vpop.f32.mrf.mxu0
      %v2761 = vadd.f32 0.0, %v2760
      %v2762 = vpop.f32.mrf.mxu0
      %v2763 = vadd.f32 0.0, %v2762
      %2764 = vmatmul.bf16.gmra.mxu0 %v2591
      %v2765 = vpop.f32.mrf.mxu0
      %v2766 = vadd.f32 0.0, %v2765
      %v2767 = vpop.f32.mrf.mxu0
      %v2768 = vadd.f32 0.0, %v2767
      %2769 = vmatmul.bf16.gmra.mxu0 %v2590
      %v2770 = vpop.f32.mrf.mxu0
      %v2771 = vadd.f32 0.0, %v2770
      %v2772 = vpop.f32.mrf.mxu0
      %2773 = vdwg.mxu0
      %v2774 = vadd.f32 %v2199, %v2671
      %v2775 = vadd.f32 %v2200, %v2673
      %v2776 = vadd.f32 %v2201, %v2676
      %v2777 = vadd.f32 %v2202, %v2678
      %v2778 = vadd.f32 %v2203, %v2681
      %v2779 = vadd.f32 %v2204, %v2683
      %v2780 = vadd.f32 %v2205, %v2686
      %v2781 = vadd.f32 %v2206, %v2688
      %v2782 = vadd.f32 %v2207, %v2691
      %v2783 = vadd.f32 %v2208, %v2693
      %v2784 = vadd.f32 %v2209, %v2696
      %v2785 = vadd.f32 %v2210, %v2698
      %v2786 = vadd.f32 %v2211, %v2701
      %v2787 = vadd.f32 %v2212, %v2703
      %v2788 = vadd.f32 %v2213, %v2706
      %v2789 = vadd.f32 %v2214, %v2708
      %v2790 = vadd.f32 %v2215, %v2711
      %v2791 = vadd.f32 %v2216, %v2713
      %v2792 = vadd.f32 %v2217, %v2716
      %v2793 = vadd.f32 %v2218, %v2718
      %v2794 = vadd.f32 %v2219, %v2721
      %v2795 = vadd.f32 %v2220, %v2723
      %v2796 = vadd.f32 %v2221, %v2726
      %v2797 = vadd.f32 %v2222, %v2728
      %v2798 = vadd.f32 %v2223, %v2731
      %v2799 = vadd.f32 %v2224, %v2733
      %v2800 = vadd.f32 %v2225, %v2736
      %v2801 = vadd.f32 %v2226, %v2738
      %v2802 = vadd.f32 %v2227, %v2741
      %v2803 = vadd.f32 %v2228, %v2743
      %v2804 = vadd.f32 %v2229, %v2746
      %v2805 = vadd.f32 %v2230, %v2748
      %v2806 = vadd.f32 %v2231, %v2751
      %v2807 = vadd.f32 %v2232, %v2753
      %v2808 = vadd.f32 %v2233, %v2756
      %v2809 = vadd.f32 %v2234, %v2758
      %v2810 = vadd.f32 %v2235, %v2761
      %v2811 = vadd.f32 %v2236, %v2763
      %v2812 = vadd.f32 %v2237, %v2766
      %v2813 = vadd.f32 %v2238, %v2768
      %v2814 = vadd.f32 %v2239, %v2771
      %s2815 = scalar_lea.vmem %s4, 256
      %v2816 = vld [vmem:[%s2815] sm:$0xf]
      %v2817 = vld [vmem:[%s2815 + $0x4] sm:$0xf]
      %v2818 = vld [vmem:[%s2815 + $0x8] sm:$0xf]
      %v2819 = vld [vmem:[%s2815 + $0xc] sm:$0xf]
      %v2820 = vld [vmem:[%s2815 + $0x10] sm:$0xf]
      %v2821 = vld [vmem:[%s2815 + $0x14] sm:$0xf]
      %v2822 = vld [vmem:[%s2815 + $0x18] sm:$0xf]
      %v2823 = vld [vmem:[%s2815 + $0x1c] sm:$0xf]
      %v2824 = vld [vmem:[%s2815 + $0x20] sm:$0xf]
      %v2825 = vld [vmem:[%s2815 + $0x24] sm:$0xf]
      %v2826 = vld [vmem:[%s2815 + $0x28] sm:$0xf]
      %v2827 = vld [vmem:[%s2815 + $0x2c] sm:$0xf]
      %v2828 = vld [vmem:[%s2815 + $0x30] sm:$0xf]
      %v2829 = vld [vmem:[%s2815 + $0x34] sm:$0xf]
      %v2830 = vld [vmem:[%s2815 + $0x38] sm:$0xf]
      %v2831 = vld [vmem:[%s2815 + $0x3c] sm:$0xf]
      %v2832 = vpack.c.b16 %v2343, %v2342
      %v2833 = vpack.c.b16 %v2345, %v2344
      %v2834 = vpack.c.b16 %v2347, %v2346
      %v2835 = vpack.c.b16 %v2349, %v2348
      %v2836 = vpack.c.b16 %v2351, %v2350
      %v2837 = vpack.c.b16 %v2353, %v2352
      %v2838 = vpack.c.b16 %v2355, %v2354
      %v2839 = vpack.c.b16 %v2357, %v2356
      %v2840 = vpack.c.b16 %v2359, %v2358
      %v2841 = vpack.c.b16 %v2361, %v2360
      %v2842 = vpack.c.b16 %v2363, %v2362
      %v2843 = vpack.c.b16 %v2365, %v2364
      %v2844 = vpack.c.b16 %v2367, %v2366
      %v2845 = vpack.c.b16 %v2369, %v2368
      %v2846 = vpack.c.b16 %v2371, %v2370
      %v2847 = vpack.c.b16 %v2373, %v2372
      %v2848 = vpack.c.b16 %v2375, %v2374
      %v2849 = vpack.c.b16 %v2377, %v2376
      %v2850 = vpack.c.b16 %v2379, %v2378
      %v2851 = vpack.c.b16 %v2381, %v2380
      %v2852 = vpack.c.b16 %v2382, %v2382
      %v2890 = vunpack.c.l.b16 %v2816
      %v2891 = vunpack.c.l.b16 %v2817
      %v2892 = vunpack.c.l.b16 %v2818
      %v2893 = vunpack.c.l.b16 %v2819
      %v2894 = vunpack.c.l.b16 %v2820
      %v2895 = vunpack.c.l.b16 %v2821
      %v2896 = vunpack.c.l.b16 %v2822
      %v2897 = vunpack.c.l.b16 %v2823
      %v2898 = vunpack.c.l.b16 %v2824
      %v2899 = vunpack.c.l.b16 %v2825
      %v2900 = vunpack.c.l.b16 %v2826
      %v2901 = vunpack.c.l.b16 %v2827
      %v2902 = vunpack.c.l.b16 %v2828
      %v2903 = vunpack.c.l.b16 %v2829
      %v2904 = vunpack.c.l.b16 %v2830
      %v2905 = vunpack.c.l.b16 %v2831
      %v2906 = vpack.c.b16 %v2891, %v2890
      %v2907 = vpack.c.b16 %v2893, %v2892
      %v2908 = vpack.c.b16 %v2895, %v2894
      %v2909 = vpack.c.b16 %v2897, %v2896
      %v2910 = vpack.c.b16 %v2899, %v2898
      %v2911 = vpack.c.b16 %v2901, %v2900
      %v2912 = vpack.c.b16 %v2903, %v2902
      %v2913 = vpack.c.b16 %v2905, %v2904
      %2922 = vmatpush.bf16.msra.mxu0 %v2913
      %2923 = vmatpush.bf16.msra.mxu0 %v2912
      %2924 = vmatpush.bf16.msra.mxu0 %v2911
      %2925 = vmatpush.bf16.msra.mxu0 %v2910
      %2926 = vmatpush.bf16.msra.mxu0 %v2909
      %2927 = vmatpush.bf16.msra.mxu0 %v2908
      %2928 = vmatpush.bf16.msra.mxu0 %v2907
      %2929 = vmatpush.bf16.msra.mxu0 %v2906
      %2930 = vmatmul.bf16.gmra.mxu0 %v2832
      %v2931 = vpop.f32.mrf.mxu0
      %v2932 = vadd.f32 0.0, %v2931
      %v2933 = vpop.f32.mrf.mxu0
      %v2934 = vadd.f32 0.0, %v2933
      %2935 = vmatmul.bf16.gmra.mxu0 %v2833
      %v2936 = vpop.f32.mrf.mxu0
      %v2937 = vadd.f32 0.0, %v2936
      %v2938 = vpop.f32.mrf.mxu0
      %v2939 = vadd.f32 0.0, %v2938
      %2940 = vmatmul.bf16.gmra.mxu0 %v2834
      %v2941 = vpop.f32.mrf.mxu0
      %v2942 = vadd.f32 0.0, %v2941
      %v2943 = vpop.f32.mrf.mxu0
      %v2944 = vadd.f32 0.0, %v2943
      %2945 = vmatmul.bf16.gmra.mxu0 %v2835
      %v2946 = vpop.f32.mrf.mxu0
      %v2947 = vadd.f32 0.0, %v2946
      %v2948 = vpop.f32.mrf.mxu0
      %v2949 = vadd.f32 0.0, %v2948
      %2950 = vmatmul.bf16.gmra.mxu0 %v2836
      %v2951 = vpop.f32.mrf.mxu0
      %v2952 = vadd.f32 0.0, %v2951
      %v2953 = vpop.f32.mrf.mxu0
      %v2954 = vadd.f32 0.0, %v2953
      %2955 = vmatmul.bf16.gmra.mxu0 %v2837
      %v2956 = vpop.f32.mrf.mxu0
      %v2957 = vadd.f32 0.0, %v2956
      %v2958 = vpop.f32.mrf.mxu0
      %v2959 = vadd.f32 0.0, %v2958
      %2960 = vmatmul.bf16.gmra.mxu0 %v2838
      %v2961 = vpop.f32.mrf.mxu0
      %v2962 = vadd.f32 0.0, %v2961
      %v2963 = vpop.f32.mrf.mxu0
      %v2964 = vadd.f32 0.0, %v2963
      %2965 = vmatmul.bf16.gmra.mxu0 %v2839
      %v2966 = vpop.f32.mrf.mxu0
      %v2967 = vadd.f32 0.0, %v2966
      %v2968 = vpop.f32.mrf.mxu0
      %v2969 = vadd.f32 0.0, %v2968
      %2970 = vmatmul.bf16.gmra.mxu0 %v2840
      %v2971 = vpop.f32.mrf.mxu0
      %v2972 = vadd.f32 0.0, %v2971
      %v2973 = vpop.f32.mrf.mxu0
      %v2974 = vadd.f32 0.0, %v2973
      %2975 = vmatmul.bf16.gmra.mxu0 %v2841
      %v2976 = vpop.f32.mrf.mxu0
      %v2977 = vadd.f32 0.0, %v2976
      %v2978 = vpop.f32.mrf.mxu0
      %v2979 = vadd.f32 0.0, %v2978
      %2980 = vmatmul.bf16.gmra.mxu0 %v2842
      %v2981 = vpop.f32.mrf.mxu0
      %v2982 = vadd.f32 0.0, %v2981
      %v2983 = vpop.f32.mrf.mxu0
      %v2984 = vadd.f32 0.0, %v2983
      %2985 = vmatmul.bf16.gmra.mxu0 %v2843
      %v2986 = vpop.f32.mrf.mxu0
      %v2987 = vadd.f32 0.0, %v2986
      %v2988 = vpop.f32.mrf.mxu0
      %v2989 = vadd.f32 0.0, %v2988
      %2990 = vmatmul.bf16.gmra.mxu0 %v2844
      %v2991 = vpop.f32.mrf.mxu0
      %v2992 = vadd.f32 0.0, %v2991
      %v2993 = vpop.f32.mrf.mxu0
      %v2994 = vadd.f32 0.0, %v2993
      %2995 = vmatmul.bf16.gmra.mxu0 %v2845
      %v2996 = vpop.f32.mrf.mxu0
      %v2997 = vadd.f32 0.0, %v2996
      %v2998 = vpop.f32.mrf.mxu0
      %v2999 = vadd.f32 0.0, %v2998
      %3000 = vmatmul.bf16.gmra.mxu0 %v2846
      %v3001 = vpop.f32.mrf.mxu0
      %v3002 = vadd.f32 0.0, %v3001
      %v3003 = vpop.f32.mrf.mxu0
      %v3004 = vadd.f32 0.0, %v3003
      %3005 = vmatmul.bf16.gmra.mxu0 %v2847
      %v3006 = vpop.f32.mrf.mxu0
      %v3007 = vadd.f32 0.0, %v3006
      %v3008 = vpop.f32.mrf.mxu0
      %v3009 = vadd.f32 0.0, %v3008
      %3010 = vmatmul.bf16.gmra.mxu0 %v2848
      %v3011 = vpop.f32.mrf.mxu0
      %v3012 = vadd.f32 0.0, %v3011
      %v3013 = vpop.f32.mrf.mxu0
      %v3014 = vadd.f32 0.0, %v3013
      %3015 = vmatmul.bf16.gmra.mxu0 %v2849
      %v3016 = vpop.f32.mrf.mxu0
      %v3017 = vadd.f32 0.0, %v3016
      %v3018 = vpop.f32.mrf.mxu0
      %v3019 = vadd.f32 0.0, %v3018
      %3020 = vmatmul.bf16.gmra.mxu0 %v2850
      %v3021 = vpop.f32.mrf.mxu0
      %v3022 = vadd.f32 0.0, %v3021
      %v3023 = vpop.f32.mrf.mxu0
      %v3024 = vadd.f32 0.0, %v3023
      %3025 = vmatmul.bf16.gmra.mxu0 %v2851
      %v3026 = vpop.f32.mrf.mxu0
      %v3027 = vadd.f32 0.0, %v3026
      %v3028 = vpop.f32.mrf.mxu0
      %v3029 = vadd.f32 0.0, %v3028
      %3030 = vmatmul.bf16.gmra.mxu0 %v2852
      %v3031 = vpop.f32.mrf.mxu0
      %v3032 = vadd.f32 0.0, %v3031
      %v3033 = vpop.f32.mrf.mxu0
      %3034 = vdwg.mxu0
      %v3035 = vadd.f32 %v2774, %v2932
      %v3036 = vadd.f32 %v2775, %v2934
      %v3037 = vadd.f32 %v2776, %v2937
      %v3038 = vadd.f32 %v2777, %v2939
      %v3039 = vadd.f32 %v2778, %v2942
      %v3040 = vadd.f32 %v2779, %v2944
      %v3041 = vadd.f32 %v2780, %v2947
      %v3042 = vadd.f32 %v2781, %v2949
      %v3043 = vadd.f32 %v2782, %v2952
      %v3044 = vadd.f32 %v2783, %v2954
      %v3045 = vadd.f32 %v2784, %v2957
      %v3046 = vadd.f32 %v2785, %v2959
      %v3047 = vadd.f32 %v2786, %v2962
      %v3048 = vadd.f32 %v2787, %v2964
      %v3049 = vadd.f32 %v2788, %v2967
      %v3050 = vadd.f32 %v2789, %v2969
      %v3051 = vadd.f32 %v2790, %v2972
      %v3052 = vadd.f32 %v2791, %v2974
      %v3053 = vadd.f32 %v2792, %v2977
      %v3054 = vadd.f32 %v2793, %v2979
      %v3055 = vadd.f32 %v2794, %v2982
      %v3056 = vadd.f32 %v2795, %v2984
      %v3057 = vadd.f32 %v2796, %v2987
      %v3058 = vadd.f32 %v2797, %v2989
      %v3059 = vadd.f32 %v2798, %v2992
      %v3060 = vadd.f32 %v2799, %v2994
      %v3061 = vadd.f32 %v2800, %v2997
      %v3062 = vadd.f32 %v2801, %v2999
      %v3063 = vadd.f32 %v2802, %v3002
      %v3064 = vadd.f32 %v2803, %v3004
      %v3065 = vadd.f32 %v2804, %v3007
      %v3066 = vadd.f32 %v2805, %v3009
      %v3067 = vadd.f32 %v2806, %v3012
      %v3068 = vadd.f32 %v2807, %v3014
      %v3069 = vadd.f32 %v2808, %v3017
      %v3070 = vadd.f32 %v2809, %v3019
      %v3071 = vadd.f32 %v2810, %v3022
      %v3072 = vadd.f32 %v2811, %v3024
      %v3073 = vadd.f32 %v2812, %v3027
      %v3074 = vadd.f32 %v2813, %v3029
      %v3075 = vadd.f32 %v2814, %v3032
      %v3076 = vld [vmem:[#allocation2 + $0xc] sm:$0xf]
      %v3077 = vld [vmem:[#allocation2 + $0x10] sm:$0xf]
      %v3078 = vld [vmem:[#allocation2 + $0x14] sm:$0xf]
      %v3079 = vld [vmem:[#allocation2 + $0x18] sm:$0xf]
      %v3080 = vld [vmem:[#allocation2 + $0x1c] sm:$0xf]
      %v3081 = vld [vmem:[#allocation2 + $0x20] sm:$0xf]
      %v3082 = vld [vmem:[#allocation2 + $0x24] sm:$0xf]
      %v3083 = vld [vmem:[#allocation2 + $0x28] sm:$0xf]
      %v3084 = vld [vmem:[#allocation2 + $0x2c] sm:$0xf]
      %v3085 = vld [vmem:[#allocation2 + $0x30] sm:$0xf]
      %v3086 = vld [vmem:[#allocation2 + $0x34] sm:$0xf]
      %v3087 = vld [vmem:[#allocation2 + $0x38] sm:$0xf]
      %v3088 = vld [vmem:[#allocation2 + $0x3c] sm:$0xf]
      %v3089 = vld [vmem:[#allocation2 + $0x40] sm:$0xf]
      %v3090 = vld [vmem:[#allocation2 + $0x44] sm:$0xf]
      %v3091 = vld [vmem:[#allocation2 + $0x48] sm:$0xf]
      %v3092 = vld [vmem:[#allocation2 + $0x4c] sm:$0xf]
      %v3093 = vld [vmem:[#allocation2 + $0x50] sm:$0xf]
      %v3094 = vld [vmem:[#allocation2 + $0x54] sm:$0xf]
      %v3095 = vld [vmem:[#allocation2 + $0x58] sm:$0xf]
      %v3096 = vld [vmem:[#allocation2 + $0x5c] sm:$0xf]
      %v3097 = vld [vmem:[#allocation2 + $0x60] sm:$0xf]
      %v3098 = vld [vmem:[#allocation2 + $0x64] sm:$0xf]
      %v3099 = vld [vmem:[#allocation2 + $0x68] sm:$0xf]
      %v3100 = vld [vmem:[#allocation2 + $0x6c] sm:$0xf]
      %v3101 = vld [vmem:[#allocation2 + $0x70] sm:$0xf]
      %v3102 = vld [vmem:[#allocation2 + $0x74] sm:$0xf]
      %v3103 = vld [vmem:[#allocation2 + $0x78] sm:$0xf]
      %v3104 = vld [vmem:[#allocation2 + $0x7c] sm:$0xf]
      %v3105 = vld [vmem:[#allocation2 + $0x80] sm:$0xf]
      %v3106 = vld [vmem:[#allocation2 + $0x84] sm:$0xf]
      %v3107 = vld [vmem:[#allocation2 + $0x88] sm:$0xf]
      %v3108 = vld [vmem:[#allocation2 + $0x8c] sm:$0xf]
      %v3109 = vld [vmem:[#allocation2 + $0x90] sm:$0xf]
      %v3110 = vld [vmem:[#allocation2 + $0x94] sm:$0xf]
      %v3111 = vld [vmem:[#allocation2 + $0x98] sm:$0xf]
      %v3112 = vld [vmem:[#allocation2 + $0x9c] sm:$0xf]
      %v3113 = vld [vmem:[#allocation2 + $0xa0] sm:$0xf]
      %v3114 = vld [vmem:[#allocation2 + $0xa4] sm:$0xf]
      %v3115 = vld [vmem:[#allocation2 + $0xa8] sm:$0xf]
      %v3116 = vld [vmem:[#allocation2 + $0xac] sm:$0xf]
      %v3117 = vld [vmem:[#allocation2 + $0xb0] sm:$0x1]
      %s3118 = scalar_lea.vmem %s4, 320
      %v3119 = vld [vmem:[%s3118] sm:$0xf]
      %v3120 = vld [vmem:[%s3118 + $0x4] sm:$0xf]
      %v3121 = vld [vmem:[%s3118 + $0x8] sm:$0xf]
      %v3122 = vld [vmem:[%s3118 + $0xc] sm:$0xf]
      %v3123 = vld [vmem:[%s3118 + $0x10] sm:$0xf]
      %v3124 = vld [vmem:[%s3118 + $0x14] sm:$0xf]
      %v3125 = vld [vmem:[%s3118 + $0x18] sm:$0xf]
      %v3126 = vld [vmem:[%s3118 + $0x1c] sm:$0xf]
      %v3127 = vld [vmem:[%s3118 + $0x20] sm:$0xf]
      %v3128 = vld [vmem:[%s3118 + $0x24] sm:$0xf]
      %v3129 = vld [vmem:[%s3118 + $0x28] sm:$0xf]
      %v3130 = vld [vmem:[%s3118 + $0x2c] sm:$0xf]
      %v3131 = vld [vmem:[%s3118 + $0x30] sm:$0xf]
      %v3132 = vld [vmem:[%s3118 + $0x34] sm:$0xf]
      %v3133 = vld [vmem:[%s3118 + $0x38] sm:$0xf]
      %v3134 = vld [vmem:[%s3118 + $0x3c] sm:$0xf]
      %v3177 = vunpack.c.l.b16 %v3076
      %v3178 = vunpack.c.l.b16 %v3077
      %v3179 = vunpack.c.l.b16 %v3078
      %v3180 = vunpack.c.l.b16 %v3079
      %v3181 = vunpack.c.l.b16 %v3080
      %v3182 = vunpack.c.l.b16 %v3081
      %v3183 = vunpack.c.l.b16 %v3082
      %v3184 = vunpack.c.l.b16 %v3083
      %v3185 = vunpack.c.l.b16 %v3084
      %v3186 = vunpack.c.l.b16 %v3085
      %v3187 = vunpack.c.l.b16 %v3086
      %v3188 = vunpack.c.l.b16 %v3087
      %v3189 = vunpack.c.l.b16 %v3088
      %v3190 = vunpack.c.l.b16 %v3089
      %v3191 = vunpack.c.l.b16 %v3090
      %v3192 = vunpack.c.l.b16 %v3091
      %v3193 = vunpack.c.l.b16 %v3092
      %v3194 = vunpack.c.l.b16 %v3093
      %v3195 = vunpack.c.l.b16 %v3094
      %v3196 = vunpack.c.l.b16 %v3095
      %v3197 = vunpack.c.l.b16 %v3096
      %v3198 = vunpack.c.l.b16 %v3097
      %v3199 = vunpack.c.l.b16 %v3098
      %v3200 = vunpack.c.l.b16 %v3099
      %v3201 = vunpack.c.l.b16 %v3100
      %v3202 = vunpack.c.l.b16 %v3101
      %v3203 = vunpack.c.l.b16 %v3102
      %v3204 = vunpack.c.l.b16 %v3103
      %v3205 = vunpack.c.l.b16 %v3104
      %v3206 = vunpack.c.l.b16 %v3105
      %v3207 = vunpack.c.l.b16 %v3106
      %v3208 = vunpack.c.l.b16 %v3107
      %v3209 = vunpack.c.l.b16 %v3108
      %v3210 = vunpack.c.l.b16 %v3109
      %v3211 = vunpack.c.l.b16 %v3110
      %v3212 = vunpack.c.l.b16 %v3111
      %v3213 = vunpack.c.l.b16 %v3112
      %v3214 = vunpack.c.l.b16 %v3113
      %v3215 = vunpack.c.l.b16 %v3114
      %v3216 = vunpack.c.l.b16 %v3115
      %v3217 = vunpack.c.l.b16 %v3116
      %v3218 = vunpack.c.l.b16 %v3117
      %v3219 = vpack.c.b16 %v3178, %v3177
      %v3220 = vpack.c.b16 %v3180, %v3179
      %v3221 = vpack.c.b16 %v3182, %v3181
      %v3222 = vpack.c.b16 %v3184, %v3183
      %v3223 = vpack.c.b16 %v3186, %v3185
      %v3224 = vpack.c.b16 %v3188, %v3187
      %v3225 = vpack.c.b16 %v3190, %v3189
      %v3226 = vpack.c.b16 %v3192, %v3191
      %v3227 = vpack.c.b16 %v3194, %v3193
      %v3228 = vpack.c.b16 %v3196, %v3195
      %v3229 = vpack.c.b16 %v3198, %v3197
      %v3230 = vpack.c.b16 %v3200, %v3199
      %v3231 = vpack.c.b16 %v3202, %v3201
      %v3232 = vpack.c.b16 %v3204, %v3203
      %v3233 = vpack.c.b16 %v3206, %v3205
      %v3234 = vpack.c.b16 %v3208, %v3207
      %v3235 = vpack.c.b16 %v3210, %v3209
      %v3236 = vpack.c.b16 %v3212, %v3211
      %v3237 = vpack.c.b16 %v3214, %v3213
      %v3238 = vpack.c.b16 %v3216, %v3215
      %v3239 = vpack.c.b16 %v3218, %v3217
      %vm3240 = vsmask.f32 7424
      %v3242 = vshrl.u32 %v3219, 16
      %v3244 = vshll.u32 %v3219, 16
      %v3246 = vrot.slane %v3244, 1
      %v3247 = vor.u32 %v3242, %v3246
      %v3249 = vshll.u32 %v3220, 16
      %v3251 = vrot.slane %v3249, 1
      %v3252 = vsel %vm3240, %v3247, %v3251
      %v3253 = vshrl.u32 %v3220, 16
      %v3255 = vor.u32 %v3253, %v3251
      %v3257 = vshll.u32 %v3221, 16
      %v3259 = vrot.slane %v3257, 1
      %v3260 = vsel %vm3240, %v3255, %v3259
      %v3261 = vshrl.u32 %v3221, 16
      %v3263 = vor.u32 %v3261, %v3259
      %v3265 = vshll.u32 %v3222, 16
      %v3267 = vrot.slane %v3265, 1
      %v3268 = vsel %vm3240, %v3263, %v3267
      %v3269 = vshrl.u32 %v3222, 16
      %v3271 = vor.u32 %v3269, %v3267
      %v3273 = vshll.u32 %v3223, 16
      %v3275 = vrot.slane %v3273, 1
      %v3276 = vsel %vm3240, %v3271, %v3275
      %v3277 = vshrl.u32 %v3223, 16
      %v3279 = vor.u32 %v3277, %v3275
      %v3281 = vshll.u32 %v3224, 16
      %v3283 = vrot.slane %v3281, 1
      %v3284 = vsel %vm3240, %v3279, %v3283
      %v3285 = vshrl.u32 %v3224, 16
      %v3287 = vor.u32 %v3285, %v3283
      %v3289 = vshll.u32 %v3225, 16
      %v3291 = vrot.slane %v3289, 1
      %v3292 = vsel %vm3240, %v3287, %v3291
      %v3293 = vshrl.u32 %v3225, 16
      %v3295 = vor.u32 %v3293, %v3291
      %v3297 = vshll.u32 %v3226, 16
      %v3299 = vrot.slane %v3297, 1
      %v3300 = vsel %vm3240, %v3295, %v3299
      %v3301 = vshrl.u32 %v3226, 16
      %v3303 = vor.u32 %v3301, %v3299
      %v3305 = vshll.u32 %v3227, 16
      %v3307 = vrot.slane %v3305, 1
      %v3308 = vsel %vm3240, %v3303, %v3307
      %v3309 = vshrl.u32 %v3227, 16
      %v3311 = vor.u32 %v3309, %v3307
      %v3313 = vshll.u32 %v3228, 16
      %v3315 = vrot.slane %v3313, 1
      %v3316 = vsel %vm3240, %v3311, %v3315
      %v3317 = vshrl.u32 %v3228, 16
      %v3319 = vor.u32 %v3317, %v3315
      %v3321 = vshll.u32 %v3229, 16
      %v3323 = vrot.slane %v3321, 1
      %v3324 = vsel %vm3240, %v3319, %v3323
      %v3325 = vshrl.u32 %v3229, 16
      %v3327 = vor.u32 %v3325, %v3323
      %v3329 = vshll.u32 %v3230, 16
      %v3331 = vrot.slane %v3329, 1
      %v3332 = vsel %vm3240, %v3327, %v3331
      %v3333 = vshrl.u32 %v3230, 16
      %v3335 = vor.u32 %v3333, %v3331
      %v3337 = vshll.u32 %v3231, 16
      %v3339 = vrot.slane %v3337, 1
      %v3340 = vsel %vm3240, %v3335, %v3339
      %v3341 = vshrl.u32 %v3231, 16
      %v3343 = vor.u32 %v3341, %v3339
      %v3345 = vshll.u32 %v3232, 16
      %v3347 = vrot.slane %v3345, 1
      %v3348 = vsel %vm3240, %v3343, %v3347
      %v3349 = vshrl.u32 %v3232, 16
      %v3351 = vor.u32 %v3349, %v3347
      %v3353 = vshll.u32 %v3233, 16
      %v3355 = vrot.slane %v3353, 1
      %v3356 = vsel %vm3240, %v3351, %v3355
      %v3357 = vshrl.u32 %v3233, 16
      %v3359 = vor.u32 %v3357, %v3355
      %v3361 = vshll.u32 %v3234, 16
      %v3363 = vrot.slane %v3361, 1
      %v3364 = vsel %vm3240, %v3359, %v3363
      %v3365 = vshrl.u32 %v3234, 16
      %v3367 = vor.u32 %v3365, %v3363
      %v3369 = vshll.u32 %v3235, 16
      %v3371 = vrot.slane %v3369, 1
      %v3372 = vsel %vm3240, %v3367, %v3371
      %v3373 = vshrl.u32 %v3235, 16
      %v3375 = vor.u32 %v3373, %v3371
      %v3377 = vshll.u32 %v3236, 16
      %v3379 = vrot.slane %v3377, 1
      %v3380 = vsel %vm3240, %v3375, %v3379
      %v3381 = vshrl.u32 %v3236, 16
      %v3383 = vor.u32 %v3381, %v3379
      %v3385 = vshll.u32 %v3237, 16
      %v3387 = vrot.slane %v3385, 1
      %v3388 = vsel %vm3240, %v3383, %v3387
      %v3389 = vshrl.u32 %v3237, 16
      %v3391 = vor.u32 %v3389, %v3387
      %v3393 = vshll.u32 %v3238, 16
      %v3395 = vrot.slane %v3393, 1
      %v3396 = vsel %vm3240, %v3391, %v3395
      %v3397 = vshrl.u32 %v3238, 16
      %v3399 = vor.u32 %v3397, %v3395
      %v3401 = vshll.u32 %v3239, 16
      %v3403 = vrot.slane %v3401, 1
      %v3404 = vsel %vm3240, %v3399, %v3403
      %v3405 = vshrl.u32 %v3239, 16
      %v3407 = vor.u32 %v3405, %v3403
      %v3445 = vunpack.c.l.b16 %v3119
      %v3446 = vunpack.c.l.b16 %v3120
      %v3447 = vunpack.c.l.b16 %v3121
      %v3448 = vunpack.c.l.b16 %v3122
      %v3449 = vunpack.c.l.b16 %v3123
      %v3450 = vunpack.c.l.b16 %v3124
      %v3451 = vunpack.c.l.b16 %v3125
      %v3452 = vunpack.c.l.b16 %v3126
      %v3453 = vunpack.c.l.b16 %v3127
      %v3454 = vunpack.c.l.b16 %v3128
      %v3455 = vunpack.c.l.b16 %v3129
      %v3456 = vunpack.c.l.b16 %v3130
      %v3457 = vunpack.c.l.b16 %v3131
      %v3458 = vunpack.c.l.b16 %v3132
      %v3459 = vunpack.c.l.b16 %v3133
      %v3460 = vunpack.c.l.b16 %v3134
      %v3461 = vpack.c.b16 %v3446, %v3445
      %v3462 = vpack.c.b16 %v3448, %v3447
      %v3463 = vpack.c.b16 %v3450, %v3449
      %v3464 = vpack.c.b16 %v3452, %v3451
      %v3465 = vpack.c.b16 %v3454, %v3453
      %v3466 = vpack.c.b16 %v3456, %v3455
      %v3467 = vpack.c.b16 %v3458, %v3457
      %v3468 = vpack.c.b16 %v3460, %v3459
      %3477 = vmatpush.bf16.msra.mxu0 %v3468
      %3478 = vmatpush.bf16.msra.mxu0 %v3467
      %3479 = vmatpush.bf16.msra.mxu0 %v3466
      %3480 = vmatpush.bf16.msra.mxu0 %v3465
      %3481 = vmatpush.bf16.msra.mxu0 %v3464
      %3482 = vmatpush.bf16.msra.mxu0 %v3463
      %3483 = vmatpush.bf16.msra.mxu0 %v3462
      %3484 = vmatpush.bf16.msra.mxu0 %v3461
      %3485 = vmatmul.bf16.gmra.mxu0 %v3252
      %v3486 = vpop.f32.mrf.mxu0
      %v3487 = vadd.f32 0.0, %v3486
      %v3488 = vpop.f32.mrf.mxu0
      %v3489 = vadd.f32 0.0, %v3488
      %3490 = vmatmul.bf16.gmra.mxu0 %v3260
      %v3491 = vpop.f32.mrf.mxu0
      %v3492 = vadd.f32 0.0, %v3491
      %v3493 = vpop.f32.mrf.mxu0
      %v3494 = vadd.f32 0.0, %v3493
      %3495 = vmatmul.bf16.gmra.mxu0 %v3268
      %v3496 = vpop.f32.mrf.mxu0
      %v3497 = vadd.f32 0.0, %v3496
      %v3498 = vpop.f32.mrf.mxu0
      %v3499 = vadd.f32 0.0, %v3498
      %3500 = vmatmul.bf16.gmra.mxu0 %v3276
      %v3501 = vpop.f32.mrf.mxu0
      %v3502 = vadd.f32 0.0, %v3501
      %v3503 = vpop.f32.mrf.mxu0
      %v3504 = vadd.f32 0.0, %v3503
      %3505 = vmatmul.bf16.gmra.mxu0 %v3284
      %v3506 = vpop.f32.mrf.mxu0
      %v3507 = vadd.f32 0.0, %v3506
      %v3508 = vpop.f32.mrf.mxu0
      %v3509 = vadd.f32 0.0, %v3508
      %3510 = vmatmul.bf16.gmra.mxu0 %v3292
      %v3511 = vpop.f32.mrf.mxu0
      %v3512 = vadd.f32 0.0, %v3511
      %v3513 = vpop.f32.mrf.mxu0
      %v3514 = vadd.f32 0.0, %v3513
      %3515 = vmatmul.bf16.gmra.mxu0 %v3300
      %v3516 = vpop.f32.mrf.mxu0
      %v3517 = vadd.f32 0.0, %v3516
      %v3518 = vpop.f32.mrf.mxu0
      %v3519 = vadd.f32 0.0, %v3518
      %3520 = vmatmul.bf16.gmra.mxu0 %v3308
      %v3521 = vpop.f32.mrf.mxu0
      %v3522 = vadd.f32 0.0, %v3521
      %v3523 = vpop.f32.mrf.mxu0
      %v3524 = vadd.f32 0.0, %v3523
      %3525 = vmatmul.bf16.gmra.mxu0 %v3316
      %v3526 = vpop.f32.mrf.mxu0
      %v3527 = vadd.f32 0.0, %v3526
      %v3528 = vpop.f32.mrf.mxu0
      %v3529 = vadd.f32 0.0, %v3528
      %3530 = vmatmul.bf16.gmra.mxu0 %v3324
      %v3531 = vpop.f32.mrf.mxu0
      %v3532 = vadd.f32 0.0, %v3531
      %v3533 = vpop.f32.mrf.mxu0
      %v3534 = vadd.f32 0.0, %v3533
      %3535 = vmatmul.bf16.gmra.mxu0 %v3332
      %v3536 = vpop.f32.mrf.mxu0
      %v3537 = vadd.f32 0.0, %v3536
      %v3538 = vpop.f32.mrf.mxu0
      %v3539 = vadd.f32 0.0, %v3538
      %3540 = vmatmul.bf16.gmra.mxu0 %v3340
      %v3541 = vpop.f32.mrf.mxu0
      %v3542 = vadd.f32 0.0, %v3541
      %v3543 = vpop.f32.mrf.mxu0
      %v3544 = vadd.f32 0.0, %v3543
      %3545 = vmatmul.bf16.gmra.mxu0 %v3348
      %v3546 = vpop.f32.mrf.mxu0
      %v3547 = vadd.f32 0.0, %v3546
      %v3548 = vpop.f32.mrf.mxu0
      %v3549 = vadd.f32 0.0, %v3548
      %3550 = vmatmul.bf16.gmra.mxu0 %v3356
      %v3551 = vpop.f32.mrf.mxu0
      %v3552 = vadd.f32 0.0, %v3551
      %v3553 = vpop.f32.mrf.mxu0
      %v3554 = vadd.f32 0.0, %v3553
      %3555 = vmatmul.bf16.gmra.mxu0 %v3364
      %v3556 = vpop.f32.mrf.mxu0
      %v3557 = vadd.f32 0.0, %v3556
      %v3558 = vpop.f32.mrf.mxu0
      %v3559 = vadd.f32 0.0, %v3558
      %3560 = vmatmul.bf16.gmra.mxu0 %v3372
      %v3561 = vpop.f32.mrf.mxu0
      %v3562 = vadd.f32 0.0, %v3561
      %v3563 = vpop.f32.mrf.mxu0
      %v3564 = vadd.f32 0.0, %v3563
      %3565 = vmatmul.bf16.gmra.mxu0 %v3380
      %v3566 = vpop.f32.mrf.mxu0
      %v3567 = vadd.f32 0.0, %v3566
      %v3568 = vpop.f32.mrf.mxu0
      %v3569 = vadd.f32 0.0, %v3568
      %3570 = vmatmul.bf16.gmra.mxu0 %v3388
      %v3571 = vpop.f32.mrf.mxu0
      %v3572 = vadd.f32 0.0, %v3571
      %v3573 = vpop.f32.mrf.mxu0
      %v3574 = vadd.f32 0.0, %v3573
      %3575 = vmatmul.bf16.gmra.mxu0 %v3396
      %v3576 = vpop.f32.mrf.mxu0
      %v3577 = vadd.f32 0.0, %v3576
      %v3578 = vpop.f32.mrf.mxu0
      %v3579 = vadd.f32 0.0, %v3578
      %3580 = vmatmul.bf16.gmra.mxu0 %v3404
      %v3581 = vpop.f32.mrf.mxu0
      %v3582 = vadd.f32 0.0, %v3581
      %v3583 = vpop.f32.mrf.mxu0
      %v3584 = vadd.f32 0.0, %v3583
      %3585 = vmatmul.bf16.gmra.mxu0 %v3407
      %v3586 = vpop.f32.mrf.mxu0
      %v3587 = vadd.f32 0.0, %v3586
      %v3588 = vpop.f32.mrf.mxu0
      %3589 = vdwg.mxu0
      %v3590 = vadd.f32 %v3035, %v3487
      %v3591 = vadd.f32 %v3036, %v3489
      %v3592 = vadd.f32 %v3037, %v3492
      %v3593 = vadd.f32 %v3038, %v3494
      %v3594 = vadd.f32 %v3039, %v3497
      %v3595 = vadd.f32 %v3040, %v3499
      %v3596 = vadd.f32 %v3041, %v3502
      %v3597 = vadd.f32 %v3042, %v3504
      %v3598 = vadd.f32 %v3043, %v3507
      %v3599 = vadd.f32 %v3044, %v3509
      %v3600 = vadd.f32 %v3045, %v3512
      %v3601 = vadd.f32 %v3046, %v3514
      %v3602 = vadd.f32 %v3047, %v3517
      %v3603 = vadd.f32 %v3048, %v3519
      %v3604 = vadd.f32 %v3049, %v3522
      %v3605 = vadd.f32 %v3050, %v3524
      %v3606 = vadd.f32 %v3051, %v3527
      %v3607 = vadd.f32 %v3052, %v3529
      %v3608 = vadd.f32 %v3053, %v3532
      %v3609 = vadd.f32 %v3054, %v3534
      %v3610 = vadd.f32 %v3055, %v3537
      %v3611 = vadd.f32 %v3056, %v3539
      %v3612 = vadd.f32 %v3057, %v3542
      %v3613 = vadd.f32 %v3058, %v3544
      %v3614 = vadd.f32 %v3059, %v3547
      %v3615 = vadd.f32 %v3060, %v3549
      %v3616 = vadd.f32 %v3061, %v3552
      %v3617 = vadd.f32 %v3062, %v3554
      %v3618 = vadd.f32 %v3063, %v3557
      %v3619 = vadd.f32 %v3064, %v3559
      %v3620 = vadd.f32 %v3065, %v3562
      %v3621 = vadd.f32 %v3066, %v3564
      %v3622 = vadd.f32 %v3067, %v3567
      %v3623 = vadd.f32 %v3068, %v3569
      %v3624 = vadd.f32 %v3069, %v3572
      %v3625 = vadd.f32 %v3070, %v3574
      %v3626 = vadd.f32 %v3071, %v3577
      %v3627 = vadd.f32 %v3072, %v3579
      %v3628 = vadd.f32 %v3073, %v3582
      %v3629 = vadd.f32 %v3074, %v3584
      %v3630 = vadd.f32 %v3075, %v3587
      %v3631 = vld [vmem:[#allocation2 + $0x14] sm:$0xf]
      %v3632 = vld [vmem:[#allocation2 + $0x18] sm:$0xf]
      %v3633 = vld [vmem:[#allocation2 + $0x1c] sm:$0xf]
      %v3634 = vld [vmem:[#allocation2 + $0x20] sm:$0xf]
      %v3635 = vld [vmem:[#allocation2 + $0x24] sm:$0xf]
      %v3636 = vld [vmem:[#allocation2 + $0x28] sm:$0xf]
      %v3637 = vld [vmem:[#allocation2 + $0x2c] sm:$0xf]
      %v3638 = vld [vmem:[#allocation2 + $0x30] sm:$0xf]
      %v3639 = vld [vmem:[#allocation2 + $0x34] sm:$0xf]
      %v3640 = vld [vmem:[#allocation2 + $0x38] sm:$0xf]
      %v3641 = vld [vmem:[#allocation2 + $0x3c] sm:$0xf]
      %v3642 = vld [vmem:[#allocation2 + $0x40] sm:$0xf]
      %v3643 = vld [vmem:[#allocation2 + $0x44] sm:$0xf]
      %v3644 = vld [vmem:[#allocation2 + $0x48] sm:$0xf]
      %v3645 = vld [vmem:[#allocation2 + $0x4c] sm:$0xf]
      %v3646 = vld [vmem:[#allocation2 + $0x50] sm:$0xf]
      %v3647 = vld [vmem:[#allocation2 + $0x54] sm:$0xf]
      %v3648 = vld [vmem:[#allocation2 + $0x58] sm:$0xf]
      %v3649 = vld [vmem:[#allocation2 + $0x5c] sm:$0xf]
      %v3650 = vld [vmem:[#allocation2 + $0x60] sm:$0xf]
      %v3651 = vld [vmem:[#allocation2 + $0x64] sm:$0xf]
      %v3652 = vld [vmem:[#allocation2 + $0x68] sm:$0xf]
      %v3653 = vld [vmem:[#allocation2 + $0x6c] sm:$0xf]
      %v3654 = vld [vmem:[#allocation2 + $0x70] sm:$0xf]
      %v3655 = vld [vmem:[#allocation2 + $0x74] sm:$0xf]
      %v3656 = vld [vmem:[#allocation2 + $0x78] sm:$0xf]
      %v3657 = vld [vmem:[#allocation2 + $0x7c] sm:$0xf]
      %v3658 = vld [vmem:[#allocation2 + $0x80] sm:$0xf]
      %v3659 = vld [vmem:[#allocation2 + $0x84] sm:$0xf]
      %v3660 = vld [vmem:[#allocation2 + $0x88] sm:$0xf]
      %v3661 = vld [vmem:[#allocation2 + $0x8c] sm:$0xf]
      %v3662 = vld [vmem:[#allocation2 + $0x90] sm:$0xf]
      %v3663 = vld [vmem:[#allocation2 + $0x94] sm:$0xf]
      %v3664 = vld [vmem:[#allocation2 + $0x98] sm:$0xf]
      %v3665 = vld [vmem:[#allocation2 + $0x9c] sm:$0xf]
      %v3666 = vld [vmem:[#allocation2 + $0xa0] sm:$0xf]
      %v3667 = vld [vmem:[#allocation2 + $0xa4] sm:$0xf]
      %v3668 = vld [vmem:[#allocation2 + $0xa8] sm:$0xf]
      %v3669 = vld [vmem:[#allocation2 + $0xac] sm:$0xf]
      %v3670 = vld [vmem:[#allocation2 + $0xb0] sm:$0xf]
      %v3671 = vld [vmem:[#allocation2 + $0xb4] sm:$0xf]
      %v3672 = vld [vmem:[#allocation2 + $0xb8] sm:$0x1]
      %s3673 = scalar_lea.vmem %s4, 384
      %v3674 = vld [vmem:[%s3673] sm:$0xf]
      %v3675 = vld [vmem:[%s3673 + $0x4] sm:$0xf]
      %v3676 = vld [vmem:[%s3673 + $0x8] sm:$0xf]
      %v3677 = vld [vmem:[%s3673 + $0xc] sm:$0xf]
      %v3678 = vld [vmem:[%s3673 + $0x10] sm:$0xf]
      %v3679 = vld [vmem:[%s3673 + $0x14] sm:$0xf]
      %v3680 = vld [vmem:[%s3673 + $0x18] sm:$0xf]
      %v3681 = vld [vmem:[%s3673 + $0x1c] sm:$0xf]
      %v3682 = vld [vmem:[%s3673 + $0x20] sm:$0xf]
      %v3683 = vld [vmem:[%s3673 + $0x24] sm:$0xf]
      %v3684 = vld [vmem:[%s3673 + $0x28] sm:$0xf]
      %v3685 = vld [vmem:[%s3673 + $0x2c] sm:$0xf]
      %v3686 = vld [vmem:[%s3673 + $0x30] sm:$0xf]
      %v3687 = vld [vmem:[%s3673 + $0x34] sm:$0xf]
      %v3688 = vld [vmem:[%s3673 + $0x38] sm:$0xf]
      %v3689 = vld [vmem:[%s3673 + $0x3c] sm:$0xf]
      %v3732 = vunpack.c.l.b16 %v3631
      %v3733 = vunpack.c.l.b16 %v3632
      %v3734 = vunpack.c.l.b16 %v3633
      %v3735 = vunpack.c.l.b16 %v3634
      %v3736 = vunpack.c.l.b16 %v3635
      %v3737 = vunpack.c.l.b16 %v3636
      %v3738 = vunpack.c.l.b16 %v3637
      %v3739 = vunpack.c.l.b16 %v3638
      %v3740 = vunpack.c.l.b16 %v3639
      %v3741 = vunpack.c.l.b16 %v3640
      %v3742 = vunpack.c.l.b16 %v3641
      %v3743 = vunpack.c.l.b16 %v3642
      %v3744 = vunpack.c.l.b16 %v3643
      %v3745 = vunpack.c.l.b16 %v3644
      %v3746 = vunpack.c.l.b16 %v3645
      %v3747 = vunpack.c.l.b16 %v3646
      %v3748 = vunpack.c.l.b16 %v3647
      %v3749 = vunpack.c.l.b16 %v3648
      %v3750 = vunpack.c.l.b16 %v3649
      %v3751 = vunpack.c.l.b16 %v3650
      %v3752 = vunpack.c.l.b16 %v3651
      %v3753 = vunpack.c.l.b16 %v3652
      %v3754 = vunpack.c.l.b16 %v3653
      %v3755 = vunpack.c.l.b16 %v3654
      %v3756 = vunpack.c.l.b16 %v3655
      %v3757 = vunpack.c.l.b16 %v3656
      %v3758 = vunpack.c.l.b16 %v3657
      %v3759 = vunpack.c.l.b16 %v3658
      %v3760 = vunpack.c.l.b16 %v3659
      %v3761 = vunpack.c.l.b16 %v3660
      %v3762 = vunpack.c.l.b16 %v3661
      %v3763 = vunpack.c.l.b16 %v3662
      %v3764 = vunpack.c.l.b16 %v3663
      %v3765 = vunpack.c.l.b16 %v3664
      %v3766 = vunpack.c.l.b16 %v3665
      %v3767 = vunpack.c.l.b16 %v3666
      %v3768 = vunpack.c.l.b16 %v3667
      %v3769 = vunpack.c.l.b16 %v3668
      %v3770 = vunpack.c.l.b16 %v3669
      %v3771 = vunpack.c.l.b16 %v3670
      %v3772 = vunpack.c.l.b16 %v3671
      %v3773 = vunpack.c.l.b16 %v3672
      %v3774 = vpack.c.b16 %v3733, %v3732
      %v3775 = vpack.c.b16 %v3735, %v3734
      %v3776 = vpack.c.b16 %v3737, %v3736
      %v3777 = vpack.c.b16 %v3739, %v3738
      %v3778 = vpack.c.b16 %v3741, %v3740
      %v3779 = vpack.c.b16 %v3743, %v3742
      %v3780 = vpack.c.b16 %v3745, %v3744
      %v3781 = vpack.c.b16 %v3747, %v3746
      %v3782 = vpack.c.b16 %v3749, %v3748
      %v3783 = vpack.c.b16 %v3751, %v3750
      %v3784 = vpack.c.b16 %v3753, %v3752
      %v3785 = vpack.c.b16 %v3755, %v3754
      %v3786 = vpack.c.b16 %v3757, %v3756
      %v3787 = vpack.c.b16 %v3759, %v3758
      %v3788 = vpack.c.b16 %v3761, %v3760
      %v3789 = vpack.c.b16 %v3763, %v3762
      %v3790 = vpack.c.b16 %v3765, %v3764
      %v3791 = vpack.c.b16 %v3767, %v3766
      %v3792 = vpack.c.b16 %v3769, %v3768
      %v3793 = vpack.c.b16 %v3771, %v3770
      %v3794 = vpack.c.b16 %v3773, %v3772
      %v3796 = vshrl.u32 %v3774, 16
      %v3798 = vshll.u32 %v3774, 16
      %v3800 = vrot.slane %v3798, 1
      %v3801 = vor.u32 %v3796, %v3800
      %v3803 = vshll.u32 %v3775, 16
      %v3805 = vrot.slane %v3803, 1
      %v3806 = vsel %vm3240, %v3801, %v3805
      %v3807 = vshrl.u32 %v3775, 16
      %v3809 = vor.u32 %v3807, %v3805
      %v3811 = vshll.u32 %v3776, 16
      %v3813 = vrot.slane %v3811, 1
      %v3814 = vsel %vm3240, %v3809, %v3813
      %v3815 = vshrl.u32 %v3776, 16
      %v3817 = vor.u32 %v3815, %v3813
      %v3819 = vshll.u32 %v3777, 16
      %v3821 = vrot.slane %v3819, 1
      %v3822 = vsel %vm3240, %v3817, %v3821
      %v3823 = vshrl.u32 %v3777, 16
      %v3825 = vor.u32 %v3823, %v3821
      %v3827 = vshll.u32 %v3778, 16
      %v3829 = vrot.slane %v3827, 1
      %v3830 = vsel %vm3240, %v3825, %v3829
      %v3831 = vshrl.u32 %v3778, 16
      %v3833 = vor.u32 %v3831, %v3829
      %v3835 = vshll.u32 %v3779, 16
      %v3837 = vrot.slane %v3835, 1
      %v3838 = vsel %vm3240, %v3833, %v3837
      %v3839 = vshrl.u32 %v3779, 16
      %v3841 = vor.u32 %v3839, %v3837
      %v3843 = vshll.u32 %v3780, 16
      %v3845 = vrot.slane %v3843, 1
      %v3846 = vsel %vm3240, %v3841, %v3845
      %v3847 = vshrl.u32 %v3780, 16
      %v3849 = vor.u32 %v3847, %v3845
      %v3851 = vshll.u32 %v3781, 16
      %v3853 = vrot.slane %v3851, 1
      %v3854 = vsel %vm3240, %v3849, %v3853
      %v3855 = vshrl.u32 %v3781, 16
      %v3857 = vor.u32 %v3855, %v3853
      %v3859 = vshll.u32 %v3782, 16
      %v3861 = vrot.slane %v3859, 1
      %v3862 = vsel %vm3240, %v3857, %v3861
      %v3863 = vshrl.u32 %v3782, 16
      %v3865 = vor.u32 %v3863, %v3861
      %v3867 = vshll.u32 %v3783, 16
      %v3869 = vrot.slane %v3867, 1
      %v3870 = vsel %vm3240, %v3865, %v3869
      %v3871 = vshrl.u32 %v3783, 16
      %v3873 = vor.u32 %v3871, %v3869
      %v3875 = vshll.u32 %v3784, 16
      %v3877 = vrot.slane %v3875, 1
      %v3878 = vsel %vm3240, %v3873, %v3877
      %v3879 = vshrl.u32 %v3784, 16
      %v3881 = vor.u32 %v3879, %v3877
      %v3883 = vshll.u32 %v3785, 16
      %v3885 = vrot.slane %v3883, 1
      %v3886 = vsel %vm3240, %v3881, %v3885
      %v3887 = vshrl.u32 %v3785, 16
      %v3889 = vor.u32 %v3887, %v3885
      %v3891 = vshll.u32 %v3786, 16
      %v3893 = vrot.slane %v3891, 1
      %v3894 = vsel %vm3240, %v3889, %v3893
      %v3895 = vshrl.u32 %v3786, 16
      %v3897 = vor.u32 %v3895, %v3893
      %v3899 = vshll.u32 %v3787, 16
      %v3901 = vrot.slane %v3899, 1
      %v3902 = vsel %vm3240, %v3897, %v3901
      %v3903 = vshrl.u32 %v3787, 16
      %v3905 = vor.u32 %v3903, %v3901
      %v3907 = vshll.u32 %v3788, 16
      %v3909 = vrot.slane %v3907, 1
      %v3910 = vsel %vm3240, %v3905, %v3909
      %v3911 = vshrl.u32 %v3788, 16
      %v3913 = vor.u32 %v3911, %v3909
      %v3915 = vshll.u32 %v3789, 16
      %v3917 = vrot.slane %v3915, 1
      %v3918 = vsel %vm3240, %v3913, %v3917
      %v3919 = vshrl.u32 %v3789, 16
      %v3921 = vor.u32 %v3919, %v3917
      %v3923 = vshll.u32 %v3790, 16
      %v3925 = vrot.slane %v3923, 1
      %v3926 = vsel %vm3240, %v3921, %v3925
      %v3927 = vshrl.u32 %v3790, 16
      %v3929 = vor.u32 %v3927, %v3925
      %v3931 = vshll.u32 %v3791, 16
      %v3933 = vrot.slane %v3931, 1
      %v3934 = vsel %vm3240, %v3929, %v3933
      %v3935 = vshrl.u32 %v3791, 16
      %v3937 = vor.u32 %v3935, %v3933
      %v3939 = vshll.u32 %v3792, 16
      %v3941 = vrot.slane %v3939, 1
      %v3942 = vsel %vm3240, %v3937, %v3941
      %v3943 = vshrl.u32 %v3792, 16
      %v3945 = vor.u32 %v3943, %v3941
      %v3947 = vshll.u32 %v3793, 16
      %v3949 = vrot.slane %v3947, 1
      %v3950 = vsel %vm3240, %v3945, %v3949
      %v3951 = vshrl.u32 %v3793, 16
      %v3953 = vor.u32 %v3951, %v3949
      %v3955 = vshll.u32 %v3794, 16
      %v3957 = vrot.slane %v3955, 1
      %v3958 = vsel %vm3240, %v3953, %v3957
      %v3959 = vshrl.u32 %v3794, 16
      %v3961 = vor.u32 %v3959, %v3957
      %v3999 = vunpack.c.l.b16 %v3674
      %v4000 = vunpack.c.l.b16 %v3675
      %v4001 = vunpack.c.l.b16 %v3676
      %v4002 = vunpack.c.l.b16 %v3677
      %v4003 = vunpack.c.l.b16 %v3678
      %v4004 = vunpack.c.l.b16 %v3679
      %v4005 = vunpack.c.l.b16 %v3680
      %v4006 = vunpack.c.l.b16 %v3681
      %v4007 = vunpack.c.l.b16 %v3682
      %v4008 = vunpack.c.l.b16 %v3683
      %v4009 = vunpack.c.l.b16 %v3684
      %v4010 = vunpack.c.l.b16 %v3685
      %v4011 = vunpack.c.l.b16 %v3686
      %v4012 = vunpack.c.l.b16 %v3687
      %v4013 = vunpack.c.l.b16 %v3688
      %v4014 = vunpack.c.l.b16 %v3689
      %v4015 = vpack.c.b16 %v4000, %v3999
      %v4016 = vpack.c.b16 %v4002, %v4001
      %v4017 = vpack.c.b16 %v4004, %v4003
      %v4018 = vpack.c.b16 %v4006, %v4005
      %v4019 = vpack.c.b16 %v4008, %v4007
      %v4020 = vpack.c.b16 %v4010, %v4009
      %v4021 = vpack.c.b16 %v4012, %v4011
      %v4022 = vpack.c.b16 %v4014, %v4013
      %4031 = vmatpush.bf16.msra.mxu0 %v4022
      %4032 = vmatpush.bf16.msra.mxu0 %v4021
      %4033 = vmatpush.bf16.msra.mxu0 %v4020
      %4034 = vmatpush.bf16.msra.mxu0 %v4019
      %4035 = vmatpush.bf16.msra.mxu0 %v4018
      %4036 = vmatpush.bf16.msra.mxu0 %v4017
      %4037 = vmatpush.bf16.msra.mxu0 %v4016
      %4038 = vmatpush.bf16.msra.mxu0 %v4015
      %4039 = vmatmul.bf16.gmra.mxu0 %v3806
      %v4040 = vpop.f32.mrf.mxu0
      %v4041 = vadd.f32 0.0, %v4040
      %v4042 = vpop.f32.mrf.mxu0
      %v4043 = vadd.f32 0.0, %v4042
      %4044 = vmatmul.bf16.gmra.mxu0 %v3814
      %v4045 = vpop.f32.mrf.mxu0
      %v4046 = vadd.f32 0.0, %v4045
      %v4047 = vpop.f32.mrf.mxu0
      %v4048 = vadd.f32 0.0, %v4047
      %4049 = vmatmul.bf16.gmra.mxu0 %v3822
      %v4050 = vpop.f32.mrf.mxu0
      %v4051 = vadd.f32 0.0, %v4050
      %v4052 = vpop.f32.mrf.mxu0
      %v4053 = vadd.f32 0.0, %v4052
      %4054 = vmatmul.bf16.gmra.mxu0 %v3830
      %v4055 = vpop.f32.mrf.mxu0
      %v4056 = vadd.f32 0.0, %v4055
      %v4057 = vpop.f32.mrf.mxu0
      %v4058 = vadd.f32 0.0, %v4057
      %4059 = vmatmul.bf16.gmra.mxu0 %v3838
      %v4060 = vpop.f32.mrf.mxu0
      %v4061 = vadd.f32 0.0, %v4060
      %v4062 = vpop.f32.mrf.mxu0
      %v4063 = vadd.f32 0.0, %v4062
      %4064 = vmatmul.bf16.gmra.mxu0 %v3846
      %v4065 = vpop.f32.mrf.mxu0
      %v4066 = vadd.f32 0.0, %v4065
      %v4067 = vpop.f32.mrf.mxu0
      %v4068 = vadd.f32 0.0, %v4067
      %4069 = vmatmul.bf16.gmra.mxu0 %v3854
      %v4070 = vpop.f32.mrf.mxu0
      %v4071 = vadd.f32 0.0, %v4070
      %v4072 = vpop.f32.mrf.mxu0
      %v4073 = vadd.f32 0.0, %v4072
      %4074 = vmatmul.bf16.gmra.mxu0 %v3862
      %v4075 = vpop.f32.mrf.mxu0
      %v4076 = vadd.f32 0.0, %v4075
      %v4077 = vpop.f32.mrf.mxu0
      %v4078 = vadd.f32 0.0, %v4077
      %4079 = vmatmul.bf16.gmra.mxu0 %v3870
      %v4080 = vpop.f32.mrf.mxu0
      %v4081 = vadd.f32 0.0, %v4080
      %v4082 = vpop.f32.mrf.mxu0
      %v4083 = vadd.f32 0.0, %v4082
      %4084 = vmatmul.bf16.gmra.mxu0 %v3878
      %v4085 = vpop.f32.mrf.mxu0
      %v4086 = vadd.f32 0.0, %v4085
      %v4087 = vpop.f32.mrf.mxu0
      %v4088 = vadd.f32 0.0, %v4087
      %4089 = vmatmul.bf16.gmra.mxu0 %v3886
      %v4090 = vpop.f32.mrf.mxu0
      %v4091 = vadd.f32 0.0, %v4090
      %v4092 = vpop.f32.mrf.mxu0
      %v4093 = vadd.f32 0.0, %v4092
      %4094 = vmatmul.bf16.gmra.mxu0 %v3894
      %v4095 = vpop.f32.mrf.mxu0
      %v4096 = vadd.f32 0.0, %v4095
      %v4097 = vpop.f32.mrf.mxu0
      %v4098 = vadd.f32 0.0, %v4097
      %4099 = vmatmul.bf16.gmra.mxu0 %v3902
      %v4100 = vpop.f32.mrf.mxu0
      %v4101 = vadd.f32 0.0, %v4100
      %v4102 = vpop.f32.mrf.mxu0
      %v4103 = vadd.f32 0.0, %v4102
      %4104 = vmatmul.bf16.gmra.mxu0 %v3910
      %v4105 = vpop.f32.mrf.mxu0
      %v4106 = vadd.f32 0.0, %v4105
      %v4107 = vpop.f32.mrf.mxu0
      %v4108 = vadd.f32 0.0, %v4107
      %4109 = vmatmul.bf16.gmra.mxu0 %v3918
      %v4110 = vpop.f32.mrf.mxu0
      %v4111 = vadd.f32 0.0, %v4110
      %v4112 = vpop.f32.mrf.mxu0
      %v4113 = vadd.f32 0.0, %v4112
      %4114 = vmatmul.bf16.gmra.mxu0 %v3926
      %v4115 = vpop.f32.mrf.mxu0
      %v4116 = vadd.f32 0.0, %v4115
      %v4117 = vpop.f32.mrf.mxu0
      %v4118 = vadd.f32 0.0, %v4117
      %4119 = vmatmul.bf16.gmra.mxu0 %v3934
      %v4120 = vpop.f32.mrf.mxu0
      %v4121 = vadd.f32 0.0, %v4120
      %v4122 = vpop.f32.mrf.mxu0
      %v4123 = vadd.f32 0.0, %v4122
      %4124 = vmatmul.bf16.gmra.mxu0 %v3942
      %v4125 = vpop.f32.mrf.mxu0
      %v4126 = vadd.f32 0.0, %v4125
      %v4127 = vpop.f32.mrf.mxu0
      %v4128 = vadd.f32 0.0, %v4127
      %4129 = vmatmul.bf16.gmra.mxu0 %v3950
      %v4130 = vpop.f32.mrf.mxu0
      %v4131 = vadd.f32 0.0, %v4130
      %v4132 = vpop.f32.mrf.mxu0
      %v4133 = vadd.f32 0.0, %v4132
      %4134 = vmatmul.bf16.gmra.mxu0 %v3958
      %v4135 = vpop.f32.mrf.mxu0
      %v4136 = vadd.f32 0.0, %v4135
      %v4137 = vpop.f32.mrf.mxu0
      %v4138 = vadd.f32 0.0, %v4137
      %4139 = vmatmul.bf16.gmra.mxu0 %v3961
      %v4140 = vpop.f32.mrf.mxu0
      %v4141 = vadd.f32 0.0, %v4140
      %v4142 = vpop.f32.mrf.mxu0
      %4143 = vdwg.mxu0
      %v4144 = vadd.f32 %v3590, %v4041
      %v4145 = vadd.f32 %v3591, %v4043
      %v4146 = vadd.f32 %v3592, %v4046
      %v4147 = vadd.f32 %v3593, %v4048
      %v4148 = vadd.f32 %v3594, %v4051
      %v4149 = vadd.f32 %v3595, %v4053
      %v4150 = vadd.f32 %v3596, %v4056
      %v4151 = vadd.f32 %v3597, %v4058
      %v4152 = vadd.f32 %v3598, %v4061
      %v4153 = vadd.f32 %v3599, %v4063
      %v4154 = vadd.f32 %v3600, %v4066
      %v4155 = vadd.f32 %v3601, %v4068
      %v4156 = vadd.f32 %v3602, %v4071
      %v4157 = vadd.f32 %v3603, %v4073
      %v4158 = vadd.f32 %v3604, %v4076
      %v4159 = vadd.f32 %v3605, %v4078
      %v4160 = vadd.f32 %v3606, %v4081
      %v4161 = vadd.f32 %v3607, %v4083
      %v4162 = vadd.f32 %v3608, %v4086
      %v4163 = vadd.f32 %v3609, %v4088
      %v4164 = vadd.f32 %v3610, %v4091
      %v4165 = vadd.f32 %v3611, %v4093
      %v4166 = vadd.f32 %v3612, %v4096
      %v4167 = vadd.f32 %v3613, %v4098
      %v4168 = vadd.f32 %v3614, %v4101
      %v4169 = vadd.f32 %v3615, %v4103
      %v4170 = vadd.f32 %v3616, %v4106
      %v4171 = vadd.f32 %v3617, %v4108
      %v4172 = vadd.f32 %v3618, %v4111
      %v4173 = vadd.f32 %v3619, %v4113
      %v4174 = vadd.f32 %v3620, %v4116
      %v4175 = vadd.f32 %v3621, %v4118
      %v4176 = vadd.f32 %v3622, %v4121
      %v4177 = vadd.f32 %v3623, %v4123
      %v4178 = vadd.f32 %v3624, %v4126
      %v4179 = vadd.f32 %v3625, %v4128
      %v4180 = vadd.f32 %v3626, %v4131
      %v4181 = vadd.f32 %v3627, %v4133
      %v4182 = vadd.f32 %v3628, %v4136
      %v4183 = vadd.f32 %v3629, %v4138
      %v4184 = vadd.f32 %v3630, %v4141
      %v4185 = vld [vmem:[#allocation2 + $0x14] sm:$0xe]
      %s4186 = scalar_lea.vmem %s4, 448
      %v4187 = vld [vmem:[%s4186] sm:$0xf]
      %v4188 = vld [vmem:[%s4186 + $0x4] sm:$0xf]
      %v4189 = vld [vmem:[%s4186 + $0x8] sm:$0xf]
      %v4190 = vld [vmem:[%s4186 + $0xc] sm:$0xf]
      %v4191 = vld [vmem:[%s4186 + $0x10] sm:$0xf]
      %v4192 = vld [vmem:[%s4186 + $0x14] sm:$0xf]
      %v4193 = vld [vmem:[%s4186 + $0x18] sm:$0xf]
      %v4194 = vld [vmem:[%s4186 + $0x1c] sm:$0xf]
      %v4195 = vld [vmem:[%s4186 + $0x20] sm:$0xf]
      %v4196 = vld [vmem:[%s4186 + $0x24] sm:$0xf]
      %v4197 = vld [vmem:[%s4186 + $0x28] sm:$0xf]
      %v4198 = vld [vmem:[%s4186 + $0x2c] sm:$0xf]
      %v4199 = vld [vmem:[%s4186 + $0x30] sm:$0xf]
      %v4200 = vld [vmem:[%s4186 + $0x34] sm:$0xf]
      %v4201 = vld [vmem:[%s4186 + $0x38] sm:$0xf]
      %v4202 = vld [vmem:[%s4186 + $0x3c] sm:$0xf]
      %v4204 = vunpack.c.l.b16 %v4185
      %v4205 = vpack.c.b16 %v3733, %v4204
      %vm4206 = vcmask 1046528
      %v4207 = vrot.slane %v4205, 1
      %v4208 = vrot.slane %v3775, 1
      %v4209 = vsel %vm4206, %v4207, %v4208
      %v4210 = vrot.slane %v3776, 1
      %v4211 = vsel %vm4206, %v4208, %v4210
      %v4212 = vrot.slane %v3777, 1
      %v4213 = vsel %vm4206, %v4210, %v4212
      %v4214 = vrot.slane %v3778, 1
      %v4215 = vsel %vm4206, %v4212, %v4214
      %v4216 = vrot.slane %v3779, 1
      %v4217 = vsel %vm4206, %v4214, %v4216
      %v4218 = vrot.slane %v3780, 1
      %v4219 = vsel %vm4206, %v4216, %v4218
      %v4220 = vrot.slane %v3781, 1
      %v4221 = vsel %vm4206, %v4218, %v4220
      %v4222 = vrot.slane %v3782, 1
      %v4223 = vsel %vm4206, %v4220, %v4222
      %v4224 = vrot.slane %v3783, 1
      %v4225 = vsel %vm4206, %v4222, %v4224
      %v4226 = vrot.slane %v3784, 1
      %v4227 = vsel %vm4206, %v4224, %v4226
      %v4228 = vrot.slane %v3785, 1
      %v4229 = vsel %vm4206, %v4226, %v4228
      %v4230 = vrot.slane %v3786, 1
      %v4231 = vsel %vm4206, %v4228, %v4230
      %v4232 = vrot.slane %v3787, 1
      %v4233 = vsel %vm4206, %v4230, %v4232
      %v4234 = vrot.slane %v3788, 1
      %v4235 = vsel %vm4206, %v4232, %v4234
      %v4236 = vrot.slane %v3789, 1
      %v4237 = vsel %vm4206, %v4234, %v4236
      %v4238 = vrot.slane %v3790, 1
      %v4239 = vsel %vm4206, %v4236, %v4238
      %v4240 = vrot.slane %v3791, 1
      %v4241 = vsel %vm4206, %v4238, %v4240
      %v4242 = vrot.slane %v3792, 1
      %v4243 = vsel %vm4206, %v4240, %v4242
      %v4244 = vrot.slane %v3793, 1
      %v4245 = vsel %vm4206, %v4242, %v4244
      %v4246 = vrot.slane %v3794, 1
      %v4247 = vsel %vm4206, %v4244, %v4246
      %v4285 = vunpack.c.l.b16 %v4187
      %v4286 = vunpack.c.l.b16 %v4188
      %v4287 = vunpack.c.l.b16 %v4189
      %v4288 = vunpack.c.l.b16 %v4190
      %v4289 = vunpack.c.l.b16 %v4191
      %v4290 = vunpack.c.l.b16 %v4192
      %v4291 = vunpack.c.l.b16 %v4193
      %v4292 = vunpack.c.l.b16 %v4194
      %v4293 = vunpack.c.l.b16 %v4195
      %v4294 = vunpack.c.l.b16 %v4196
      %v4295 = vunpack.c.l.b16 %v4197
      %v4296 = vunpack.c.l.b16 %v4198
      %v4297 = vunpack.c.l.b16 %v4199
      %v4298 = vunpack.c.l.b16 %v4200
      %v4299 = vunpack.c.l.b16 %v4201
      %v4300 = vunpack.c.l.b16 %v4202
      %v4301 = vpack.c.b16 %v4286, %v4285
      %v4302 = vpack.c.b16 %v4288, %v4287
      %v4303 = vpack.c.b16 %v4290, %v4289
      %v4304 = vpack.c.b16 %v4292, %v4291
      %v4305 = vpack.c.b16 %v4294, %v4293
      %v4306 = vpack.c.b16 %v4296, %v4295
      %v4307 = vpack.c.b16 %v4298, %v4297
      %v4308 = vpack.c.b16 %v4300, %v4299
      %4317 = vmatpush.bf16.msra.mxu0 %v4308
      %4318 = vmatpush.bf16.msra.mxu0 %v4307
      %4319 = vmatpush.bf16.msra.mxu0 %v4306
      %4320 = vmatpush.bf16.msra.mxu0 %v4305
      %4321 = vmatpush.bf16.msra.mxu0 %v4304
      %4322 = vmatpush.bf16.msra.mxu0 %v4303
      %4323 = vmatpush.bf16.msra.mxu0 %v4302
      %4324 = vmatpush.bf16.msra.mxu0 %v4301
      %4325 = vmatmul.bf16.gmra.mxu0 %v4209
      %v4326 = vpop.f32.mrf.mxu0
      %v4327 = vadd.f32 0.0, %v4326
      %v4328 = vpop.f32.mrf.mxu0
      %v4329 = vadd.f32 0.0, %v4328
      %4330 = vmatmul.bf16.gmra.mxu0 %v4211
      %v4331 = vpop.f32.mrf.mxu0
      %v4332 = vadd.f32 0.0, %v4331
      %v4333 = vpop.f32.mrf.mxu0
      %v4334 = vadd.f32 0.0, %v4333
      %4335 = vmatmul.bf16.gmra.mxu0 %v4213
      %v4336 = vpop.f32.mrf.mxu0
      %v4337 = vadd.f32 0.0, %v4336
      %v4338 = vpop.f32.mrf.mxu0
      %v4339 = vadd.f32 0.0, %v4338
      %4340 = vmatmul.bf16.gmra.mxu0 %v4215
      %v4341 = vpop.f32.mrf.mxu0
      %v4342 = vadd.f32 0.0, %v4341
      %v4343 = vpop.f32.mrf.mxu0
      %v4344 = vadd.f32 0.0, %v4343
      %4345 = vmatmul.bf16.gmra.mxu0 %v4217
      %v4346 = vpop.f32.mrf.mxu0
      %v4347 = vadd.f32 0.0, %v4346
      %v4348 = vpop.f32.mrf.mxu0
      %v4349 = vadd.f32 0.0, %v4348
      %4350 = vmatmul.bf16.gmra.mxu0 %v4219
      %v4351 = vpop.f32.mrf.mxu0
      %v4352 = vadd.f32 0.0, %v4351
      %v4353 = vpop.f32.mrf.mxu0
      %v4354 = vadd.f32 0.0, %v4353
      %4355 = vmatmul.bf16.gmra.mxu0 %v4221
      %v4356 = vpop.f32.mrf.mxu0
      %v4357 = vadd.f32 0.0, %v4356
      %v4358 = vpop.f32.mrf.mxu0
      %v4359 = vadd.f32 0.0, %v4358
      %4360 = vmatmul.bf16.gmra.mxu0 %v4223
      %v4361 = vpop.f32.mrf.mxu0
      %v4362 = vadd.f32 0.0, %v4361
      %v4363 = vpop.f32.mrf.mxu0
      %v4364 = vadd.f32 0.0, %v4363
      %4365 = vmatmul.bf16.gmra.mxu0 %v4225
      %v4366 = vpop.f32.mrf.mxu0
      %v4367 = vadd.f32 0.0, %v4366
      %v4368 = vpop.f32.mrf.mxu0
      %v4369 = vadd.f32 0.0, %v4368
      %4370 = vmatmul.bf16.gmra.mxu0 %v4227
      %v4371 = vpop.f32.mrf.mxu0
      %v4372 = vadd.f32 0.0, %v4371
      %v4373 = vpop.f32.mrf.mxu0
      %v4374 = vadd.f32 0.0, %v4373
      %4375 = vmatmul.bf16.gmra.mxu0 %v4229
      %v4376 = vpop.f32.mrf.mxu0
      %v4377 = vadd.f32 0.0, %v4376
      %v4378 = vpop.f32.mrf.mxu0
      %v4379 = vadd.f32 0.0, %v4378
      %4380 = vmatmul.bf16.gmra.mxu0 %v4231
      %v4381 = vpop.f32.mrf.mxu0
      %v4382 = vadd.f32 0.0, %v4381
      %v4383 = vpop.f32.mrf.mxu0
      %v4384 = vadd.f32 0.0, %v4383
      %4385 = vmatmul.bf16.gmra.mxu0 %v4233
      %v4386 = vpop.f32.mrf.mxu0
      %v4387 = vadd.f32 0.0, %v4386
      %v4388 = vpop.f32.mrf.mxu0
      %v4389 = vadd.f32 0.0, %v4388
      %4390 = vmatmul.bf16.gmra.mxu0 %v4235
      %v4391 = vpop.f32.mrf.mxu0
      %v4392 = vadd.f32 0.0, %v4391
      %v4393 = vpop.f32.mrf.mxu0
      %v4394 = vadd.f32 0.0, %v4393
      %4395 = vmatmul.bf16.gmra.mxu0 %v4237
      %v4396 = vpop.f32.mrf.mxu0
      %v4397 = vadd.f32 0.0, %v4396
      %v4398 = vpop.f32.mrf.mxu0
      %v4399 = vadd.f32 0.0, %v4398
      %4400 = vmatmul.bf16.gmra.mxu0 %v4239
      %v4401 = vpop.f32.mrf.mxu0
      %v4402 = vadd.f32 0.0, %v4401
      %v4403 = vpop.f32.mrf.mxu0
      %v4404 = vadd.f32 0.0, %v4403
      %4405 = vmatmul.bf16.gmra.mxu0 %v4241
      %v4406 = vpop.f32.mrf.mxu0
      %v4407 = vadd.f32 0.0, %v4406
      %v4408 = vpop.f32.mrf.mxu0
      %v4409 = vadd.f32 0.0, %v4408
      %4410 = vmatmul.bf16.gmra.mxu0 %v4243
      %v4411 = vpop.f32.mrf.mxu0
      %v4412 = vadd.f32 0.0, %v4411
      %v4413 = vpop.f32.mrf.mxu0
      %v4414 = vadd.f32 0.0, %v4413
      %4415 = vmatmul.bf16.gmra.mxu0 %v4245
      %v4416 = vpop.f32.mrf.mxu0
      %v4417 = vadd.f32 0.0, %v4416
      %v4418 = vpop.f32.mrf.mxu0
      %v4419 = vadd.f32 0.0, %v4418
      %4420 = vmatmul.bf16.gmra.mxu0 %v4247
      %v4421 = vpop.f32.mrf.mxu0
      %v4422 = vadd.f32 0.0, %v4421
      %v4423 = vpop.f32.mrf.mxu0
      %v4424 = vadd.f32 0.0, %v4423
      %4425 = vmatmul.bf16.gmra.mxu0 %v4246
      %v4426 = vpop.f32.mrf.mxu0
      %v4427 = vadd.f32 0.0, %v4426
      %v4428 = vpop.f32.mrf.mxu0
      %4429 = vdwg.mxu0
      %v4430 = vadd.f32 %v4144, %v4327
      %v4431 = vadd.f32 %v4145, %v4329
      %v4432 = vadd.f32 %v4146, %v4332
      %v4433 = vadd.f32 %v4147, %v4334
      %v4434 = vadd.f32 %v4148, %v4337
      %v4435 = vadd.f32 %v4149, %v4339
      %v4436 = vadd.f32 %v4150, %v4342
      %v4437 = vadd.f32 %v4151, %v4344
      %v4438 = vadd.f32 %v4152, %v4347
      %v4439 = vadd.f32 %v4153, %v4349
      %v4440 = vadd.f32 %v4154, %v4352
      %v4441 = vadd.f32 %v4155, %v4354
      %v4442 = vadd.f32 %v4156, %v4357
      %v4443 = vadd.f32 %v4157, %v4359
      %v4444 = vadd.f32 %v4158, %v4362
      %v4445 = vadd.f32 %v4159, %v4364
      %v4446 = vadd.f32 %v4160, %v4367
      %v4447 = vadd.f32 %v4161, %v4369
      %v4448 = vadd.f32 %v4162, %v4372
      %v4449 = vadd.f32 %v4163, %v4374
      %v4450 = vadd.f32 %v4164, %v4377
      %v4451 = vadd.f32 %v4165, %v4379
      %v4452 = vadd.f32 %v4166, %v4382
      %v4453 = vadd.f32 %v4167, %v4384
      %v4454 = vadd.f32 %v4168, %v4387
      %v4455 = vadd.f32 %v4169, %v4389
      %v4456 = vadd.f32 %v4170, %v4392
      %v4457 = vadd.f32 %v4171, %v4394
      %v4458 = vadd.f32 %v4172, %v4397
      %v4459 = vadd.f32 %v4173, %v4399
      %v4460 = vadd.f32 %v4174, %v4402
      %v4461 = vadd.f32 %v4175, %v4404
      %v4462 = vadd.f32 %v4176, %v4407
      %v4463 = vadd.f32 %v4177, %v4409
      %v4464 = vadd.f32 %v4178, %v4412
      %v4465 = vadd.f32 %v4179, %v4414
      %v4466 = vadd.f32 %v4180, %v4417
      %v4467 = vadd.f32 %v4181, %v4419
      %v4468 = vadd.f32 %v4182, %v4422
      %v4469 = vadd.f32 %v4183, %v4424
      %v4470 = vadd.f32 %v4184, %v4427
      %v4471 = vld [vmem:[#allocation2 + $0xb8] sm:$0x3]
      %s4472 = scalar_lea.vmem %s4, 512
      %v4473 = vld [vmem:[%s4472] sm:$0xf]
      %v4474 = vld [vmem:[%s4472 + $0x4] sm:$0xf]
      %v4475 = vld [vmem:[%s4472 + $0x8] sm:$0xf]
      %v4476 = vld [vmem:[%s4472 + $0xc] sm:$0xf]
      %v4477 = vld [vmem:[%s4472 + $0x10] sm:$0xf]
      %v4478 = vld [vmem:[%s4472 + $0x14] sm:$0xf]
      %v4479 = vld [vmem:[%s4472 + $0x18] sm:$0xf]
      %v4480 = vld [vmem:[%s4472 + $0x1c] sm:$0xf]
      %v4481 = vld [vmem:[%s4472 + $0x20] sm:$0xf]
      %v4482 = vld [vmem:[%s4472 + $0x24] sm:$0xf]
      %v4483 = vld [vmem:[%s4472 + $0x28] sm:$0xf]
      %v4484 = vld [vmem:[%s4472 + $0x2c] sm:$0xf]
      %v4485 = vld [vmem:[%s4472 + $0x30] sm:$0xf]
      %v4486 = vld [vmem:[%s4472 + $0x34] sm:$0xf]
      %v4487 = vld [vmem:[%s4472 + $0x38] sm:$0xf]
      %v4488 = vld [vmem:[%s4472 + $0x3c] sm:$0xf]
      %v4490 = vunpack.c.l.b16 %v4471
      %v4491 = vpack.c.b16 %v4490, %v3772
      %vm4492 = vsmask.f32 6400
      %v4494 = vshrl.u32 %v4205, 16
      %v4496 = vrot.slane %v4494, 1
      %v4497 = vshll.u32 %v4205, 16
      %v4499 = vrot.slane %v4497, 2
      %v4500 = vor.u32 %v4496, %v4499
      %v4501 = vrot.slane %v3807, 1
      %v4502 = vrot.slane %v3803, 2
      %v4503 = vor.u32 %v4501, %v4502
      %v4504 = vsel %vm4492, %v4500, %v4503
      %v4505 = vrot.slane %v3815, 1
      %v4506 = vrot.slane %v3811, 2
      %v4507 = vor.u32 %v4505, %v4506
      %v4508 = vsel %vm4492, %v4503, %v4507
      %v4509 = vrot.slane %v3823, 1
      %v4510 = vrot.slane %v3819, 2
      %v4511 = vor.u32 %v4509, %v4510
      %v4512 = vsel %vm4492, %v4507, %v4511
      %v4513 = vrot.slane %v3831, 1
      %v4514 = vrot.slane %v3827, 2
      %v4515 = vor.u32 %v4513, %v4514
      %v4516 = vsel %vm4492, %v4511, %v4515
      %v4517 = vrot.slane %v3839, 1
      %v4518 = vrot.slane %v3835, 2
      %v4519 = vor.u32 %v4517, %v4518
      %v4520 = vsel %vm4492, %v4515, %v4519
      %v4521 = vrot.slane %v3847, 1
      %v4522 = vrot.slane %v3843, 2
      %v4523 = vor.u32 %v4521, %v4522
      %v4524 = vsel %vm4492, %v4519, %v4523
      %v4525 = vrot.slane %v3855, 1
      %v4526 = vrot.slane %v3851, 2
      %v4527 = vor.u32 %v4525, %v4526
      %v4528 = vsel %vm4492, %v4523, %v4527
      %v4529 = vrot.slane %v3863, 1
      %v4530 = vrot.slane %v3859, 2
      %v4531 = vor.u32 %v4529, %v4530
      %v4532 = vsel %vm4492, %v4527, %v4531
      %v4533 = vrot.slane %v3871, 1
      %v4534 = vrot.slane %v3867, 2
      %v4535 = vor.u32 %v4533, %v4534
      %v4536 = vsel %vm4492, %v4531, %v4535
      %v4537 = vrot.slane %v3879, 1
      %v4538 = vrot.slane %v3875, 2
      %v4539 = vor.u32 %v4537, %v4538
      %v4540 = vsel %vm4492, %v4535, %v4539
      %v4541 = vrot.slane %v3887, 1
      %v4542 = vrot.slane %v3883, 2
      %v4543 = vor.u32 %v4541, %v4542
      %v4544 = vsel %vm4492, %v4539, %v4543
      %v4545 = vrot.slane %v3895, 1
      %v4546 = vrot.slane %v3891, 2
      %v4547 = vor.u32 %v4545, %v4546
      %v4548 = vsel %vm4492, %v4543, %v4547
      %v4549 = vrot.slane %v3903, 1
      %v4550 = vrot.slane %v3899, 2
      %v4551 = vor.u32 %v4549, %v4550
      %v4552 = vsel %vm4492, %v4547, %v4551
      %v4553 = vrot.slane %v3911, 1
      %v4554 = vrot.slane %v3907, 2
      %v4555 = vor.u32 %v4553, %v4554
      %v4556 = vsel %vm4492, %v4551, %v4555
      %v4557 = vrot.slane %v3919, 1
      %v4558 = vrot.slane %v3915, 2
      %v4559 = vor.u32 %v4557, %v4558
      %v4560 = vsel %vm4492, %v4555, %v4559
      %v4561 = vrot.slane %v3927, 1
      %v4562 = vrot.slane %v3923, 2
      %v4563 = vor.u32 %v4561, %v4562
      %v4564 = vsel %vm4492, %v4559, %v4563
      %v4565 = vrot.slane %v3935, 1
      %v4566 = vrot.slane %v3931, 2
      %v4567 = vor.u32 %v4565, %v4566
      %v4568 = vsel %vm4492, %v4563, %v4567
      %v4569 = vrot.slane %v3943, 1
      %v4570 = vrot.slane %v3939, 2
      %v4571 = vor.u32 %v4569, %v4570
      %v4572 = vsel %vm4492, %v4567, %v4571
      %v4573 = vrot.slane %v3951, 1
      %v4574 = vrot.slane %v3947, 2
      %v4575 = vor.u32 %v4573, %v4574
      %v4576 = vsel %vm4492, %v4571, %v4575
      %v4578 = vshrl.u32 %v4491, 16
      %v4580 = vrot.slane %v4578, 1
      %v4581 = vshll.u32 %v4491, 16
      %v4583 = vrot.slane %v4581, 2
      %v4584 = vor.u32 %v4580, %v4583
      %v4585 = vsel %vm4492, %v4575, %v4584
      %v4623 = vunpack.c.l.b16 %v4473
      %v4624 = vunpack.c.l.b16 %v4474
      %v4625 = vunpack.c.l.b16 %v4475
      %v4626 = vunpack.c.l.b16 %v4476
      %v4627 = vunpack.c.l.b16 %v4477
      %v4628 = vunpack.c.l.b16 %v4478
      %v4629 = vunpack.c.l.b16 %v4479
      %v4630 = vunpack.c.l.b16 %v4480
      %v4631 = vunpack.c.l.b16 %v4481
      %v4632 = vunpack.c.l.b16 %v4482
      %v4633 = vunpack.c.l.b16 %v4483
      %v4634 = vunpack.c.l.b16 %v4484
      %v4635 = vunpack.c.l.b16 %v4485
      %v4636 = vunpack.c.l.b16 %v4486
      %v4637 = vunpack.c.l.b16 %v4487
      %v4638 = vunpack.c.l.b16 %v4488
      %v4639 = vpack.c.b16 %v4624, %v4623
      %v4640 = vpack.c.b16 %v4626, %v4625
      %v4641 = vpack.c.b16 %v4628, %v4627
      %v4642 = vpack.c.b16 %v4630, %v4629
      %v4643 = vpack.c.b16 %v4632, %v4631
      %v4644 = vpack.c.b16 %v4634, %v4633
      %v4645 = vpack.c.b16 %v4636, %v4635
      %v4646 = vpack.c.b16 %v4638, %v4637
      %4655 = vmatpush.bf16.msra.mxu0 %v4646
      %4656 = vmatpush.bf16.msra.mxu0 %v4645
      %4657 = vmatpush.bf16.msra.mxu0 %v4644
      %4658 = vmatpush.bf16.msra.mxu0 %v4643
      %4659 = vmatpush.bf16.msra.mxu0 %v4642
      %4660 = vmatpush.bf16.msra.mxu0 %v4641
      %4661 = vmatpush.bf16.msra.mxu0 %v4640
      %4662 = vmatpush.bf16.msra.mxu0 %v4639
      %4663 = vmatmul.bf16.gmra.mxu0 %v4504
      %v4664 = vpop.f32.mrf.mxu0
      %v4665 = vadd.f32 0.0, %v4664
      %v4666 = vpop.f32.mrf.mxu0
      %v4667 = vadd.f32 0.0, %v4666
      %4668 = vmatmul.bf16.gmra.mxu0 %v4508
      %v4669 = vpop.f32.mrf.mxu0
      %v4670 = vadd.f32 0.0, %v4669
      %v4671 = vpop.f32.mrf.mxu0
      %v4672 = vadd.f32 0.0, %v4671
      %4673 = vmatmul.bf16.gmra.mxu0 %v4512
      %v4674 = vpop.f32.mrf.mxu0
      %v4675 = vadd.f32 0.0, %v4674
      %v4676 = vpop.f32.mrf.mxu0
      %v4677 = vadd.f32 0.0, %v4676
      %4678 = vmatmul.bf16.gmra.mxu0 %v4516
      %v4679 = vpop.f32.mrf.mxu0
      %v4680 = vadd.f32 0.0, %v4679
      %v4681 = vpop.f32.mrf.mxu0
      %v4682 = vadd.f32 0.0, %v4681
      %4683 = vmatmul.bf16.gmra.mxu0 %v4520
      %v4684 = vpop.f32.mrf.mxu0
      %v4685 = vadd.f32 0.0, %v4684
      %v4686 = vpop.f32.mrf.mxu0
      %v4687 = vadd.f32 0.0, %v4686
      %4688 = vmatmul.bf16.gmra.mxu0 %v4524
      %v4689 = vpop.f32.mrf.mxu0
      %v4690 = vadd.f32 0.0, %v4689
      %v4691 = vpop.f32.mrf.mxu0
      %v4692 = vadd.f32 0.0, %v4691
      %4693 = vmatmul.bf16.gmra.mxu0 %v4528
      %v4694 = vpop.f32.mrf.mxu0
      %v4695 = vadd.f32 0.0, %v4694
      %v4696 = vpop.f32.mrf.mxu0
      %v4697 = vadd.f32 0.0, %v4696
      %4698 = vmatmul.bf16.gmra.mxu0 %v4532
      %v4699 = vpop.f32.mrf.mxu0
      %v4700 = vadd.f32 0.0, %v4699
      %v4701 = vpop.f32.mrf.mxu0
      %v4702 = vadd.f32 0.0, %v4701
      %4703 = vmatmul.bf16.gmra.mxu0 %v4536
      %v4704 = vpop.f32.mrf.mxu0
      %v4705 = vadd.f32 0.0, %v4704
      %v4706 = vpop.f32.mrf.mxu0
      %v4707 = vadd.f32 0.0, %v4706
      %4708 = vmatmul.bf16.gmra.mxu0 %v4540
      %v4709 = vpop.f32.mrf.mxu0
      %v4710 = vadd.f32 0.0, %v4709
      %v4711 = vpop.f32.mrf.mxu0
      %v4712 = vadd.f32 0.0, %v4711
      %4713 = vmatmul.bf16.gmra.mxu0 %v4544
      %v4714 = vpop.f32.mrf.mxu0
      %v4715 = vadd.f32 0.0, %v4714
      %v4716 = vpop.f32.mrf.mxu0
      %v4717 = vadd.f32 0.0, %v4716
      %4718 = vmatmul.bf16.gmra.mxu0 %v4548
      %v4719 = vpop.f32.mrf.mxu0
      %v4720 = vadd.f32 0.0, %v4719
      %v4721 = vpop.f32.mrf.mxu0
      %v4722 = vadd.f32 0.0, %v4721
      %4723 = vmatmul.bf16.gmra.mxu0 %v4552
      %v4724 = vpop.f32.mrf.mxu0
      %v4725 = vadd.f32 0.0, %v4724
      %v4726 = vpop.f32.mrf.mxu0
      %v4727 = vadd.f32 0.0, %v4726
      %4728 = vmatmul.bf16.gmra.mxu0 %v4556
      %v4729 = vpop.f32.mrf.mxu0
      %v4730 = vadd.f32 0.0, %v4729
      %v4731 = vpop.f32.mrf.mxu0
      %v4732 = vadd.f32 0.0, %v4731
      %4733 = vmatmul.bf16.gmra.mxu0 %v4560
      %v4734 = vpop.f32.mrf.mxu0
      %v4735 = vadd.f32 0.0, %v4734
      %v4736 = vpop.f32.mrf.mxu0
      %v4737 = vadd.f32 0.0, %v4736
      %4738 = vmatmul.bf16.gmra.mxu0 %v4564
      %v4739 = vpop.f32.mrf.mxu0
      %v4740 = vadd.f32 0.0, %v4739
      %v4741 = vpop.f32.mrf.mxu0
      %v4742 = vadd.f32 0.0, %v4741
      %4743 = vmatmul.bf16.gmra.mxu0 %v4568
      %v4744 = vpop.f32.mrf.mxu0
      %v4745 = vadd.f32 0.0, %v4744
      %v4746 = vpop.f32.mrf.mxu0
      %v4747 = vadd.f32 0.0, %v4746
      %4748 = vmatmul.bf16.gmra.mxu0 %v4572
      %v4749 = vpop.f32.mrf.mxu0
      %v4750 = vadd.f32 0.0, %v4749
      %v4751 = vpop.f32.mrf.mxu0
      %v4752 = vadd.f32 0.0, %v4751
      %4753 = vmatmul.bf16.gmra.mxu0 %v4576
      %v4754 = vpop.f32.mrf.mxu0
      %v4755 = vadd.f32 0.0, %v4754
      %v4756 = vpop.f32.mrf.mxu0
      %v4757 = vadd.f32 0.0, %v4756
      %4758 = vmatmul.bf16.gmra.mxu0 %v4585
      %v4759 = vpop.f32.mrf.mxu0
      %v4760 = vadd.f32 0.0, %v4759
      %v4761 = vpop.f32.mrf.mxu0
      %v4762 = vadd.f32 0.0, %v4761
      %4763 = vmatmul.bf16.gmra.mxu0 %v4584
      %v4764 = vpop.f32.mrf.mxu0
      %v4765 = vadd.f32 0.0, %v4764
      %v4766 = vpop.f32.mrf.mxu0
      %4767 = vdwg.mxu0
      %v4768 = vadd.f32 %v4430, %v4665
      %v4769 = vadd.f32 %v4431, %v4667
      %v4770 = vadd.f32 %v4432, %v4670
      %v4771 = vadd.f32 %v4433, %v4672
      %v4772 = vadd.f32 %v4434, %v4675
      %v4773 = vadd.f32 %v4435, %v4677
      %v4774 = vadd.f32 %v4436, %v4680
      %v4775 = vadd.f32 %v4437, %v4682
      %v4776 = vadd.f32 %v4438, %v4685
      %v4777 = vadd.f32 %v4439, %v4687
      %v4778 = vadd.f32 %v4440, %v4690
      %v4779 = vadd.f32 %v4441, %v4692
      %v4780 = vadd.f32 %v4442, %v4695
      %v4781 = vadd.f32 %v4443, %v4697
      %v4782 = vadd.f32 %v4444, %v4700
      %v4783 = vadd.f32 %v4445, %v4702
      %v4784 = vadd.f32 %v4446, %v4705
      %v4785 = vadd.f32 %v4447, %v4707
      %v4786 = vadd.f32 %v4448, %v4710
      %v4787 = vadd.f32 %v4449, %v4712
      %v4788 = vadd.f32 %v4450, %v4715
      %v4789 = vadd.f32 %v4451, %v4717
      %v4790 = vadd.f32 %v4452, %v4720
      %v4791 = vadd.f32 %v4453, %v4722
      %v4792 = vadd.f32 %v4454, %v4725
      %v4793 = vadd.f32 %v4455, %v4727
      %v4794 = vadd.f32 %v4456, %v4730
      %v4795 = vadd.f32 %v4457, %v4732
      %v4796 = vadd.f32 %v4458, %v4735
      %v4797 = vadd.f32 %v4459, %v4737
      %v4798 = vadd.f32 %v4460, %v4740
      %v4799 = vadd.f32 %v4461, %v4742
      %v4800 = vadd.f32 %v4462, %v4745
      %v4801 = vadd.f32 %v4463, %v4747
      %v4802 = vadd.f32 %v4464, %v4750
      %v4803 = vadd.f32 %v4465, %v4752
      %v4804 = vadd.f32 %v4466, %v4755
      %v4805 = vadd.f32 %v4467, %v4757
      %v4806 = vadd.f32 %v4468, %v4760
      %v4807 = vadd.f32 %v4469, %v4762
      %v4808 = vadd.f32 %v4470, %v4765
      %v4809 = vld [vmem:[%s5] sm:$0x1]
      %v4811 = vperm.slane %v4809, 0
      %v4813 = vadd.f32 %v4768, %v4811
      %v4814 = vadd.f32 %v4769, %v4811
      %v4815 = vadd.f32 %v4770, %v4811
      %v4816 = vadd.f32 %v4771, %v4811
      %v4817 = vadd.f32 %v4772, %v4811
      %v4818 = vadd.f32 %v4773, %v4811
      %v4819 = vadd.f32 %v4774, %v4811
      %v4820 = vadd.f32 %v4775, %v4811
      %v4821 = vadd.f32 %v4776, %v4811
      %v4822 = vadd.f32 %v4777, %v4811
      %v4823 = vadd.f32 %v4778, %v4811
      %v4824 = vadd.f32 %v4779, %v4811
      %v4825 = vadd.f32 %v4780, %v4811
      %v4826 = vadd.f32 %v4781, %v4811
      %v4827 = vadd.f32 %v4782, %v4811
      %v4828 = vadd.f32 %v4783, %v4811
      %v4829 = vadd.f32 %v4784, %v4811
      %v4830 = vadd.f32 %v4785, %v4811
      %v4831 = vadd.f32 %v4786, %v4811
      %v4832 = vadd.f32 %v4787, %v4811
      %v4833 = vadd.f32 %v4788, %v4811
      %v4834 = vadd.f32 %v4789, %v4811
      %v4835 = vadd.f32 %v4790, %v4811
      %v4836 = vadd.f32 %v4791, %v4811
      %v4837 = vadd.f32 %v4792, %v4811
      %v4838 = vadd.f32 %v4793, %v4811
      %v4839 = vadd.f32 %v4794, %v4811
      %v4840 = vadd.f32 %v4795, %v4811
      %v4841 = vadd.f32 %v4796, %v4811
      %v4842 = vadd.f32 %v4797, %v4811
      %v4843 = vadd.f32 %v4798, %v4811
      %v4844 = vadd.f32 %v4799, %v4811
      %v4845 = vadd.f32 %v4800, %v4811
      %v4846 = vadd.f32 %v4801, %v4811
      %v4847 = vadd.f32 %v4802, %v4811
      %v4848 = vadd.f32 %v4803, %v4811
      %v4849 = vadd.f32 %v4804, %v4811
      %v4850 = vadd.f32 %v4805, %v4811
      %v4851 = vadd.f32 %v4806, %v4811
      %v4852 = vadd.f32 %v4807, %v4811
      %v4853 = vadd.f32 %v4808, %v4811
      %v4854 = vmax.f32 %v4813, 0.0
      %v4855 = vmax.f32 %v4814, 0.0
      %v4856 = vmax.f32 %v4815, 0.0
      %v4857 = vmax.f32 %v4816, 0.0
      %v4858 = vmax.f32 %v4817, 0.0
      %v4859 = vmax.f32 %v4818, 0.0
      %v4860 = vmax.f32 %v4819, 0.0
      %v4861 = vmax.f32 %v4820, 0.0
      %v4862 = vmax.f32 %v4821, 0.0
      %v4863 = vmax.f32 %v4822, 0.0
      %v4864 = vmax.f32 %v4823, 0.0
      %v4865 = vmax.f32 %v4824, 0.0
      %v4866 = vmax.f32 %v4825, 0.0
      %v4867 = vmax.f32 %v4826, 0.0
      %v4868 = vmax.f32 %v4827, 0.0
      %v4869 = vmax.f32 %v4828, 0.0
      %v4870 = vmax.f32 %v4829, 0.0
      %v4871 = vmax.f32 %v4830, 0.0
      %v4872 = vmax.f32 %v4831, 0.0
      %v4873 = vmax.f32 %v4832, 0.0
      %v4874 = vmax.f32 %v4833, 0.0
      %v4875 = vmax.f32 %v4834, 0.0
      %v4876 = vmax.f32 %v4835, 0.0
      %v4877 = vmax.f32 %v4836, 0.0
      %v4878 = vmax.f32 %v4837, 0.0
      %v4879 = vmax.f32 %v4838, 0.0
      %v4880 = vmax.f32 %v4839, 0.0
      %v4881 = vmax.f32 %v4840, 0.0
      %v4882 = vmax.f32 %v4841, 0.0
      %v4883 = vmax.f32 %v4842, 0.0
      %v4884 = vmax.f32 %v4843, 0.0
      %v4885 = vmax.f32 %v4844, 0.0
      %v4886 = vmax.f32 %v4845, 0.0
      %v4887 = vmax.f32 %v4846, 0.0
      %v4888 = vmax.f32 %v4847, 0.0
      %v4889 = vmax.f32 %v4848, 0.0
      %v4890 = vmax.f32 %v4849, 0.0
      %v4891 = vmax.f32 %v4850, 0.0
      %v4892 = vmax.f32 %v4851, 0.0
      %v4893 = vmax.f32 %v4852, 0.0
      %v4894 = vmax.f32 %v4853, 0.0
      %v4895 = vpack.c.bf16 %v4855, %v4854
      %v4896 = vpack.c.bf16 %v4857, %v4856
      %v4897 = vpack.c.bf16 %v4859, %v4858
      %v4898 = vpack.c.bf16 %v4861, %v4860
      %v4899 = vpack.c.bf16 %v4863, %v4862
      %v4900 = vpack.c.bf16 %v4865, %v4864
      %v4901 = vpack.c.bf16 %v4867, %v4866
      %v4902 = vpack.c.bf16 %v4869, %v4868
      %v4903 = vpack.c.bf16 %v4871, %v4870
      %v4904 = vpack.c.bf16 %v4873, %v4872
      %v4905 = vpack.c.bf16 %v4875, %v4874
      %v4906 = vpack.c.bf16 %v4877, %v4876
      %v4907 = vpack.c.bf16 %v4879, %v4878
      %v4908 = vpack.c.bf16 %v4881, %v4880
      %v4909 = vpack.c.bf16 %v4883, %v4882
      %v4910 = vpack.c.bf16 %v4885, %v4884
      %v4911 = vpack.c.bf16 %v4887, %v4886
      %v4912 = vpack.c.bf16 %v4889, %v4888
      %v4913 = vpack.c.bf16 %v4891, %v4890
      %v4914 = vpack.c.bf16 %v4893, %v4892
      %v4915 = vpack.c.bf16 %v4894, %v4894
      %v4916 = vld [vmem:[%s6] sm:$0xf]
      %v4917 = vld [vmem:[%s6 + $0x4] sm:$0xf]
      %v4918 = vld [vmem:[%s6 + $0x8] sm:$0xf]
      %v4919 = vld [vmem:[%s6 + $0xc] sm:$0xf]
      %v4920 = vld [vmem:[%s6 + $0x10] sm:$0xf]
      %v4921 = vld [vmem:[%s6 + $0x14] sm:$0xf]
      %v4922 = vld [vmem:[%s6 + $0x18] sm:$0xf]
      %v4923 = vld [vmem:[%s6 + $0x1c] sm:$0xf]
      %v4924 = vld [vmem:[%s6 + $0x20] sm:$0xf]
      %v4925 = vld [vmem:[%s6 + $0x24] sm:$0xf]
      %v4926 = vld [vmem:[%s6 + $0x28] sm:$0xf]
      %v4927 = vld [vmem:[%s6 + $0x2c] sm:$0xf]
      %v4928 = vld [vmem:[%s6 + $0x30] sm:$0xf]
      %v4929 = vld [vmem:[%s6 + $0x34] sm:$0xf]
      %v4930 = vld [vmem:[%s6 + $0x38] sm:$0xf]
      %v4931 = vld [vmem:[%s6 + $0x3c] sm:$0xf]
      %v4932 = vld [vmem:[%s7] sm:$0x1]
      %v4934 = vperm.slane %v4932, 0
      %v4952 = vunpack.c.l.b16 %v4916
      %v4953 = vunpack.c.l.b16 %v4917
      %v4954 = vunpack.c.l.b16 %v4918
      %v4955 = vunpack.c.l.b16 %v4919
      %v4956 = vunpack.c.l.b16 %v4920
      %v4957 = vunpack.c.l.b16 %v4921
      %v4958 = vunpack.c.l.b16 %v4922
      %v4959 = vunpack.c.l.b16 %v4923
      %v4960 = vunpack.c.l.b16 %v4924
      %v4961 = vunpack.c.l.b16 %v4925
      %v4962 = vunpack.c.l.b16 %v4926
      %v4963 = vunpack.c.l.b16 %v4927
      %v4964 = vunpack.c.l.b16 %v4928
      %v4965 = vunpack.c.l.b16 %v4929
      %v4966 = vunpack.c.l.b16 %v4930
      %v4967 = vunpack.c.l.b16 %v4931
      %v4968 = vpack.c.b16 %v4953, %v4952
      %v4969 = vpack.c.b16 %v4955, %v4954
      %v4970 = vpack.c.b16 %v4957, %v4956
      %v4971 = vpack.c.b16 %v4959, %v4958
      %v4972 = vpack.c.b16 %v4961, %v4960
      %v4973 = vpack.c.b16 %v4963, %v4962
      %v4974 = vpack.c.b16 %v4965, %v4964
      %v4975 = vpack.c.b16 %v4967, %v4966
      %4984 = vmatpush.bf16.msra.mxu0 %v4975
      %4985 = vmatpush.bf16.msra.mxu0 %v4974
      %4986 = vmatpush.bf16.msra.mxu0 %v4973
      %4987 = vmatpush.bf16.msra.mxu0 %v4972
      %4988 = vmatpush.bf16.msra.mxu0 %v4971
      %4989 = vmatpush.bf16.msra.mxu0 %v4970
      %4990 = vmatpush.bf16.msra.mxu0 %v4969
      %4991 = vmatpush.bf16.msra.mxu0 %v4968
      %4992 = vmatmul.bf16.gmra.mxu0 %v4895
      %v4993 = vpop.f32.mrf.mxu0
      %v4994 = vadd.f32 %v4934, %v4993
      %v4995 = vpop.f32.mrf.mxu0
      %v4996 = vadd.f32 %v4934, %v4995
      %4997 = vmatmul.bf16.gmra.mxu0 %v4896
      %v4998 = vpop.f32.mrf.mxu0
      %v4999 = vadd.f32 %v4934, %v4998
      %v5000 = vpop.f32.mrf.mxu0
      %v5001 = vadd.f32 %v4934, %v5000
      %5002 = vmatmul.bf16.gmra.mxu0 %v4897
      %v5003 = vpop.f32.mrf.mxu0
      %v5004 = vadd.f32 %v4934, %v5003
      %v5005 = vpop.f32.mrf.mxu0
      %v5006 = vadd.f32 %v4934, %v5005
      %5007 = vmatmul.bf16.gmra.mxu0 %v4898
      %v5008 = vpop.f32.mrf.mxu0
      %v5009 = vadd.f32 %v4934, %v5008
      %v5010 = vpop.f32.mrf.mxu0
      %v5011 = vadd.f32 %v4934, %v5010
      %5012 = vmatmul.bf16.gmra.mxu0 %v4899
      %v5013 = vpop.f32.mrf.mxu0
      %v5014 = vadd.f32 %v4934, %v5013
      %v5015 = vpop.f32.mrf.mxu0
      %v5016 = vadd.f32 %v4934, %v5015
      %5017 = vmatmul.bf16.gmra.mxu0 %v4900
      %v5018 = vpop.f32.mrf.mxu0
      %v5019 = vadd.f32 %v4934, %v5018
      %v5020 = vpop.f32.mrf.mxu0
      %v5021 = vadd.f32 %v4934, %v5020
      %5022 = vmatmul.bf16.gmra.mxu0 %v4901
      %v5023 = vpop.f32.mrf.mxu0
      %v5024 = vadd.f32 %v4934, %v5023
      %v5025 = vpop.f32.mrf.mxu0
      %v5026 = vadd.f32 %v4934, %v5025
      %5027 = vmatmul.bf16.gmra.mxu0 %v4902
      %v5028 = vpop.f32.mrf.mxu0
      %v5029 = vadd.f32 %v4934, %v5028
      %v5030 = vpop.f32.mrf.mxu0
      %v5031 = vadd.f32 %v4934, %v5030
      %5032 = vmatmul.bf16.gmra.mxu0 %v4903
      %v5033 = vpop.f32.mrf.mxu0
      %v5034 = vadd.f32 %v4934, %v5033
      %v5035 = vpop.f32.mrf.mxu0
      %v5036 = vadd.f32 %v4934, %v5035
      %5037 = vmatmul.bf16.gmra.mxu0 %v4904
      %v5038 = vpop.f32.mrf.mxu0
      %v5039 = vadd.f32 %v4934, %v5038
      %v5040 = vpop.f32.mrf.mxu0
      %v5041 = vadd.f32 %v4934, %v5040
      %5042 = vmatmul.bf16.gmra.mxu0 %v4905
      %v5043 = vpop.f32.mrf.mxu0
      %v5044 = vadd.f32 %v4934, %v5043
      %v5045 = vpop.f32.mrf.mxu0
      %v5046 = vadd.f32 %v4934, %v5045
      %5047 = vmatmul.bf16.gmra.mxu0 %v4906
      %v5048 = vpop.f32.mrf.mxu0
      %v5049 = vadd.f32 %v4934, %v5048
      %v5050 = vpop.f32.mrf.mxu0
      %v5051 = vadd.f32 %v4934, %v5050
      %5052 = vmatmul.bf16.gmra.mxu0 %v4907
      %v5053 = vpop.f32.mrf.mxu0
      %v5054 = vadd.f32 %v4934, %v5053
      %v5055 = vpop.f32.mrf.mxu0
      %v5056 = vadd.f32 %v4934, %v5055
      %5057 = vmatmul.bf16.gmra.mxu0 %v4908
      %v5058 = vpop.f32.mrf.mxu0
      %v5059 = vadd.f32 %v4934, %v5058
      %v5060 = vpop.f32.mrf.mxu0
      %v5061 = vadd.f32 %v4934, %v5060
      %5062 = vmatmul.bf16.gmra.mxu0 %v4909
      %v5063 = vpop.f32.mrf.mxu0
      %v5064 = vadd.f32 %v4934, %v5063
      %v5065 = vpop.f32.mrf.mxu0
      %v5066 = vadd.f32 %v4934, %v5065
      %5067 = vmatmul.bf16.gmra.mxu0 %v4910
      %v5068 = vpop.f32.mrf.mxu0
      %v5069 = vadd.f32 %v4934, %v5068
      %v5070 = vpop.f32.mrf.mxu0
      %v5071 = vadd.f32 %v4934, %v5070
      %5072 = vmatmul.bf16.gmra.mxu0 %v4911
      %v5073 = vpop.f32.mrf.mxu0
      %v5074 = vadd.f32 %v4934, %v5073
      %v5075 = vpop.f32.mrf.mxu0
      %v5076 = vadd.f32 %v4934, %v5075
      %5077 = vmatmul.bf16.gmra.mxu0 %v4912
      %v5078 = vpop.f32.mrf.mxu0
      %v5079 = vadd.f32 %v4934, %v5078
      %v5080 = vpop.f32.mrf.mxu0
      %v5081 = vadd.f32 %v4934, %v5080
      %5082 = vmatmul.bf16.gmra.mxu0 %v4913
      %v5083 = vpop.f32.mrf.mxu0
      %v5084 = vadd.f32 %v4934, %v5083
      %v5085 = vpop.f32.mrf.mxu0
      %v5086 = vadd.f32 %v4934, %v5085
      %5087 = vmatmul.bf16.gmra.mxu0 %v4914
      %v5088 = vpop.f32.mrf.mxu0
      %v5089 = vadd.f32 %v4934, %v5088
      %v5090 = vpop.f32.mrf.mxu0
      %v5091 = vadd.f32 %v4934, %v5090
      %5092 = vmatmul.bf16.gmra.mxu0 %v4915
      %v5093 = vpop.f32.mrf.mxu0
      %v5094 = vadd.f32 %v4934, %v5093
      %v5095 = vpop.f32.mrf.mxu0
      %5096 = vdwg.mxu0
      %v5097 = vld [vmem:[%s8] sm:$0xf]
      %v5098 = vld [vmem:[%s8 + $0x4] sm:$0xf]
      %v5099 = vld [vmem:[%s8 + $0x8] sm:$0xf]
      %v5100 = vld [vmem:[%s8 + $0xc] sm:$0xf]
      %v5101 = vld [vmem:[%s8 + $0x10] sm:$0xf]
      %v5102 = vld [vmem:[%s8 + $0x14] sm:$0xf]
      %v5103 = vld [vmem:[%s8 + $0x18] sm:$0xf]
      %v5104 = vld [vmem:[%s8 + $0x1c] sm:$0xf]
      %v5105 = vld [vmem:[%s8 + $0x20] sm:$0xf]
      %v5106 = vld [vmem:[%s8 + $0x24] sm:$0xf]
      %v5107 = vld [vmem:[%s8 + $0x28] sm:$0xf]
      %v5108 = vld [vmem:[%s8 + $0x2c] sm:$0xf]
      %v5109 = vld [vmem:[%s8 + $0x30] sm:$0xf]
      %v5110 = vld [vmem:[%s8 + $0x34] sm:$0xf]
      %v5111 = vld [vmem:[%s8 + $0x38] sm:$0xf]
      %v5112 = vld [vmem:[%s8 + $0x3c] sm:$0xf]
      %v5113 = vld [vmem:[%s9] sm:$0x1]
      %v5115 = vperm.slane %v5113, 0
      %v5133 = vunpack.c.l.b16 %v5097
      %v5134 = vunpack.c.l.b16 %v5098
      %v5135 = vunpack.c.l.b16 %v5099
      %v5136 = vunpack.c.l.b16 %v5100
      %v5137 = vunpack.c.l.b16 %v5101
      %v5138 = vunpack.c.l.b16 %v5102
      %v5139 = vunpack.c.l.b16 %v5103
      %v5140 = vunpack.c.l.b16 %v5104
      %v5141 = vunpack.c.l.b16 %v5105
      %v5142 = vunpack.c.l.b16 %v5106
      %v5143 = vunpack.c.l.b16 %v5107
      %v5144 = vunpack.c.l.b16 %v5108
      %v5145 = vunpack.c.l.b16 %v5109
      %v5146 = vunpack.c.l.b16 %v5110
      %v5147 = vunpack.c.l.b16 %v5111
      %v5148 = vunpack.c.l.b16 %v5112
      %v5149 = vpack.c.b16 %v5134, %v5133
      %v5150 = vpack.c.b16 %v5136, %v5135
      %v5151 = vpack.c.b16 %v5138, %v5137
      %v5152 = vpack.c.b16 %v5140, %v5139
      %v5153 = vpack.c.b16 %v5142, %v5141
      %v5154 = vpack.c.b16 %v5144, %v5143
      %v5155 = vpack.c.b16 %v5146, %v5145
      %v5156 = vpack.c.b16 %v5148, %v5147
      %5165 = vmatpush.bf16.msra.mxu0 %v5156
      %5166 = vmatpush.bf16.msra.mxu0 %v5155
      %5167 = vmatpush.bf16.msra.mxu0 %v5154
      %5168 = vmatpush.bf16.msra.mxu0 %v5153
      %5169 = vmatpush.bf16.msra.mxu0 %v5152
      %5170 = vmatpush.bf16.msra.mxu0 %v5151
      %5171 = vmatpush.bf16.msra.mxu0 %v5150
      %5172 = vmatpush.bf16.msra.mxu0 %v5149
      %5173 = vmatmul.bf16.gmra.mxu0 %v545
      %v5174 = vpop.f32.mrf.mxu0
      %v5175 = vadd.f32 %v5115, %v5174
      %v5176 = vpop.f32.mrf.mxu0
      %v5177 = vadd.f32 %v5115, %v5176
      %5178 = vmatmul.bf16.gmra.mxu0 %v546
      %v5179 = vpop.f32.mrf.mxu0
      %v5180 = vadd.f32 %v5115, %v5179
      %v5181 = vpop.f32.mrf.mxu0
      %v5182 = vadd.f32 %v5115, %v5181
      %5183 = vmatmul.bf16.gmra.mxu0 %v547
      %v5184 = vpop.f32.mrf.mxu0
      %v5185 = vadd.f32 %v5115, %v5184
      %v5186 = vpop.f32.mrf.mxu0
      %v5187 = vadd.f32 %v5115, %v5186
      %5188 = vmatmul.bf16.gmra.mxu0 %v548
      %v5189 = vpop.f32.mrf.mxu0
      %v5190 = vadd.f32 %v5115, %v5189
      %v5191 = vpop.f32.mrf.mxu0
      %v5192 = vadd.f32 %v5115, %v5191
      %5193 = vmatmul.bf16.gmra.mxu0 %v549
      %v5194 = vpop.f32.mrf.mxu0
      %v5195 = vadd.f32 %v5115, %v5194
      %v5196 = vpop.f32.mrf.mxu0
      %v5197 = vadd.f32 %v5115, %v5196
      %5198 = vmatmul.bf16.gmra.mxu0 %v550
      %v5199 = vpop.f32.mrf.mxu0
      %v5200 = vadd.f32 %v5115, %v5199
      %v5201 = vpop.f32.mrf.mxu0
      %v5202 = vadd.f32 %v5115, %v5201
      %5203 = vmatmul.bf16.gmra.mxu0 %v551
      %v5204 = vpop.f32.mrf.mxu0
      %v5205 = vadd.f32 %v5115, %v5204
      %v5206 = vpop.f32.mrf.mxu0
      %v5207 = vadd.f32 %v5115, %v5206
      %5208 = vmatmul.bf16.gmra.mxu0 %v552
      %v5209 = vpop.f32.mrf.mxu0
      %v5210 = vadd.f32 %v5115, %v5209
      %v5211 = vpop.f32.mrf.mxu0
      %v5212 = vadd.f32 %v5115, %v5211
      %5213 = vmatmul.bf16.gmra.mxu0 %v553
      %v5214 = vpop.f32.mrf.mxu0
      %v5215 = vadd.f32 %v5115, %v5214
      %v5216 = vpop.f32.mrf.mxu0
      %v5217 = vadd.f32 %v5115, %v5216
      %5218 = vmatmul.bf16.gmra.mxu0 %v554
      %v5219 = vpop.f32.mrf.mxu0
      %v5220 = vadd.f32 %v5115, %v5219
      %v5221 = vpop.f32.mrf.mxu0
      %v5222 = vadd.f32 %v5115, %v5221
      %5223 = vmatmul.bf16.gmra.mxu0 %v555
      %v5224 = vpop.f32.mrf.mxu0
      %v5225 = vadd.f32 %v5115, %v5224
      %v5226 = vpop.f32.mrf.mxu0
      %v5227 = vadd.f32 %v5115, %v5226
      %5228 = vmatmul.bf16.gmra.mxu0 %v556
      %v5229 = vpop.f32.mrf.mxu0
      %v5230 = vadd.f32 %v5115, %v5229
      %v5231 = vpop.f32.mrf.mxu0
      %v5232 = vadd.f32 %v5115, %v5231
      %5233 = vmatmul.bf16.gmra.mxu0 %v557
      %v5234 = vpop.f32.mrf.mxu0
      %v5235 = vadd.f32 %v5115, %v5234
      %v5236 = vpop.f32.mrf.mxu0
      %v5237 = vadd.f32 %v5115, %v5236
      %5238 = vmatmul.bf16.gmra.mxu0 %v558
      %v5239 = vpop.f32.mrf.mxu0
      %v5240 = vadd.f32 %v5115, %v5239
      %v5241 = vpop.f32.mrf.mxu0
      %v5242 = vadd.f32 %v5115, %v5241
      %5243 = vmatmul.bf16.gmra.mxu0 %v559
      %v5244 = vpop.f32.mrf.mxu0
      %v5245 = vadd.f32 %v5115, %v5244
      %v5246 = vpop.f32.mrf.mxu0
      %v5247 = vadd.f32 %v5115, %v5246
      %5248 = vmatmul.bf16.gmra.mxu0 %v560
      %v5249 = vpop.f32.mrf.mxu0
      %v5250 = vadd.f32 %v5115, %v5249
      %v5251 = vpop.f32.mrf.mxu0
      %v5252 = vadd.f32 %v5115, %v5251
      %5253 = vmatmul.bf16.gmra.mxu0 %v561
      %v5254 = vpop.f32.mrf.mxu0
      %v5255 = vadd.f32 %v5115, %v5254
      %v5256 = vpop.f32.mrf.mxu0
      %v5257 = vadd.f32 %v5115, %v5256
      %5258 = vmatmul.bf16.gmra.mxu0 %v562
      %v5259 = vpop.f32.mrf.mxu0
      %v5260 = vadd.f32 %v5115, %v5259
      %v5261 = vpop.f32.mrf.mxu0
      %v5262 = vadd.f32 %v5115, %v5261
      %5263 = vmatmul.bf16.gmra.mxu0 %v563
      %v5264 = vpop.f32.mrf.mxu0
      %v5265 = vadd.f32 %v5115, %v5264
      %v5266 = vpop.f32.mrf.mxu0
      %v5267 = vadd.f32 %v5115, %v5266
      %5268 = vmatmul.bf16.gmra.mxu0 %v564
      %v5269 = vpop.f32.mrf.mxu0
      %v5270 = vadd.f32 %v5115, %v5269
      %v5271 = vpop.f32.mrf.mxu0
      %v5272 = vadd.f32 %v5115, %v5271
      %5273 = vmatmul.bf16.gmra.mxu0 %v565
      %v5274 = vpop.f32.mrf.mxu0
      %v5275 = vadd.f32 %v5115, %v5274
      %v5276 = vpop.f32.mrf.mxu0
      %5277 = vdwg.mxu0
      %v5278 = vadd.f32 %v4994, %v5175
      %v5279 = vadd.f32 %v4996, %v5177
      %v5280 = vadd.f32 %v4999, %v5180
      %v5281 = vadd.f32 %v5001, %v5182
      %v5282 = vadd.f32 %v5004, %v5185
      %v5283 = vadd.f32 %v5006, %v5187
      %v5284 = vadd.f32 %v5009, %v5190
      %v5285 = vadd.f32 %v5011, %v5192
      %v5286 = vadd.f32 %v5014, %v5195
      %v5287 = vadd.f32 %v5016, %v5197
      %v5288 = vadd.f32 %v5019, %v5200
      %v5289 = vadd.f32 %v5021, %v5202
      %v5290 = vadd.f32 %v5024, %v5205
      %v5291 = vadd.f32 %v5026, %v5207
      %v5292 = vadd.f32 %v5029, %v5210
      %v5293 = vadd.f32 %v5031, %v5212
      %v5294 = vadd.f32 %v5034, %v5215
      %v5295 = vadd.f32 %v5036, %v5217
      %v5296 = vadd.f32 %v5039, %v5220
      %v5297 = vadd.f32 %v5041, %v5222
      %v5298 = vadd.f32 %v5044, %v5225
      %v5299 = vadd.f32 %v5046, %v5227
      %v5300 = vadd.f32 %v5049, %v5230
      %v5301 = vadd.f32 %v5051, %v5232
      %v5302 = vadd.f32 %v5054, %v5235
      %v5303 = vadd.f32 %v5056, %v5237
      %v5304 = vadd.f32 %v5059, %v5240
      %v5305 = vadd.f32 %v5061, %v5242
      %v5306 = vadd.f32 %v5064, %v5245
      %v5307 = vadd.f32 %v5066, %v5247
      %v5308 = vadd.f32 %v5069, %v5250
      %v5309 = vadd.f32 %v5071, %v5252
      %v5310 = vadd.f32 %v5074, %v5255
      %v5311 = vadd.f32 %v5076, %v5257
      %v5312 = vadd.f32 %v5079, %v5260
      %v5313 = vadd.f32 %v5081, %v5262
      %v5314 = vadd.f32 %v5084, %v5265
      %v5315 = vadd.f32 %v5086, %v5267
      %v5316 = vadd.f32 %v5089, %v5270
      %v5317 = vadd.f32 %v5091, %v5272
      %v5318 = vadd.f32 %v5094, %v5275
      %v5319 = vmax.f32 %v5278, 0.0
      %v5320 = vmax.f32 %v5279, 0.0
      %v5321 = vmax.f32 %v5280, 0.0
      %v5322 = vmax.f32 %v5281, 0.0
      %v5323 = vmax.f32 %v5282, 0.0
      %v5324 = vmax.f32 %v5283, 0.0
      %v5325 = vmax.f32 %v5284, 0.0
      %v5326 = vmax.f32 %v5285, 0.0
      %v5327 = vmax.f32 %v5286, 0.0
      %v5328 = vmax.f32 %v5287, 0.0
      %v5329 = vmax.f32 %v5288, 0.0
      %v5330 = vmax.f32 %v5289, 0.0
      %v5331 = vmax.f32 %v5290, 0.0
      %v5332 = vmax.f32 %v5291, 0.0
      %v5333 = vmax.f32 %v5292, 0.0
      %v5334 = vmax.f32 %v5293, 0.0
      %v5335 = vmax.f32 %v5294, 0.0
      %v5336 = vmax.f32 %v5295, 0.0
      %v5337 = vmax.f32 %v5296, 0.0
      %v5338 = vmax.f32 %v5297, 0.0
      %v5339 = vmax.f32 %v5298, 0.0
      %v5340 = vmax.f32 %v5299, 0.0
      %v5341 = vmax.f32 %v5300, 0.0
      %v5342 = vmax.f32 %v5301, 0.0
      %v5343 = vmax.f32 %v5302, 0.0
      %v5344 = vmax.f32 %v5303, 0.0
      %v5345 = vmax.f32 %v5304, 0.0
      %v5346 = vmax.f32 %v5305, 0.0
      %v5347 = vmax.f32 %v5306, 0.0
      %v5348 = vmax.f32 %v5307, 0.0
      %v5349 = vmax.f32 %v5308, 0.0
      %v5350 = vmax.f32 %v5309, 0.0
      %v5351 = vmax.f32 %v5310, 0.0
      %v5352 = vmax.f32 %v5311, 0.0
      %v5353 = vmax.f32 %v5312, 0.0
      %v5354 = vmax.f32 %v5313, 0.0
      %v5355 = vmax.f32 %v5314, 0.0
      %v5356 = vmax.f32 %v5315, 0.0
      %v5357 = vmax.f32 %v5316, 0.0
      %v5358 = vmax.f32 %v5317, 0.0
      %v5359 = vmax.f32 %v5318, 0.0
      %v5360 = vpack.c.bf16 %v5319, %v5319
      %v5361 = vpack.c.bf16 %v5320, %v5320
      %v5362 = vpack.c.bf16 %v5321, %v5321
      %v5363 = vpack.c.bf16 %v5322, %v5322
      %v5364 = vpack.c.bf16 %v5323, %v5323
      %v5365 = vpack.c.bf16 %v5324, %v5324
      %v5366 = vpack.c.bf16 %v5325, %v5325
      %v5367 = vpack.c.bf16 %v5326, %v5326
      %v5368 = vpack.c.bf16 %v5327, %v5327
      %v5369 = vpack.c.bf16 %v5328, %v5328
      %v5370 = vpack.c.bf16 %v5329, %v5329
      %v5371 = vpack.c.bf16 %v5330, %v5330
      %v5372 = vpack.c.bf16 %v5331, %v5331
      %v5373 = vpack.c.bf16 %v5332, %v5332
      %v5374 = vpack.c.bf16 %v5333, %v5333
      %v5375 = vpack.c.bf16 %v5334, %v5334
      %v5376 = vpack.c.bf16 %v5335, %v5335
      %v5377 = vpack.c.bf16 %v5336, %v5336
      %v5378 = vpack.c.bf16 %v5337, %v5337
      %v5379 = vpack.c.bf16 %v5338, %v5338
      %v5380 = vpack.c.bf16 %v5339, %v5339
      %v5381 = vpack.c.bf16 %v5340, %v5340
      %v5382 = vpack.c.bf16 %v5341, %v5341
      %v5383 = vpack.c.bf16 %v5342, %v5342
      %v5384 = vpack.c.bf16 %v5343, %v5343
      %v5385 = vpack.c.bf16 %v5344, %v5344
      %v5386 = vpack.c.bf16 %v5345, %v5345
      %v5387 = vpack.c.bf16 %v5346, %v5346
      %v5388 = vpack.c.bf16 %v5347, %v5347
      %v5389 = vpack.c.bf16 %v5348, %v5348
      %v5390 = vpack.c.bf16 %v5349, %v5349
      %v5391 = vpack.c.bf16 %v5350, %v5350
      %v5392 = vpack.c.bf16 %v5351, %v5351
      %v5393 = vpack.c.bf16 %v5352, %v5352
      %v5394 = vpack.c.bf16 %v5353, %v5353
      %v5395 = vpack.c.bf16 %v5354, %v5354
      %v5396 = vpack.c.bf16 %v5355, %v5355
      %v5397 = vpack.c.bf16 %v5356, %v5356
      %v5398 = vpack.c.bf16 %v5357, %v5357
      %v5399 = vpack.c.bf16 %v5358, %v5358
      %v5400 = vpack.c.bf16 %v5359, %v5359
      %5401 = vst [vmem:[%s359] sm:$0xf] %v5360
      %5402 = vst [vmem:[%s359 + $0x4] sm:$0xf] %v5361
      %5403 = vst [vmem:[%s359 + $0x8] sm:$0xf] %v5362
      %5404 = vst [vmem:[%s359 + $0xc] sm:$0xf] %v5363
      %5405 = vst [vmem:[%s359 + $0x10] sm:$0xf] %v5364
      %5406 = vst [vmem:[%s359 + $0x14] sm:$0xf] %v5365
      %5407 = vst [vmem:[%s359 + $0x18] sm:$0xf] %v5366
      %5408 = vst [vmem:[%s359 + $0x1c] sm:$0xf] %v5367
      %5409 = vst [vmem:[%s359 + $0x20] sm:$0xf] %v5368
      %5410 = vst [vmem:[%s359 + $0x24] sm:$0xf] %v5369
      %5411 = vst [vmem:[%s359 + $0x28] sm:$0xf] %v5370
      %5412 = vst [vmem:[%s359 + $0x2c] sm:$0xf] %v5371
      %5413 = vst [vmem:[%s359 + $0x30] sm:$0xf] %v5372
      %5414 = vst [vmem:[%s359 + $0x34] sm:$0xf] %v5373
      %5415 = vst [vmem:[%s359 + $0x38] sm:$0xf] %v5374
      %5416 = vst [vmem:[%s359 + $0x3c] sm:$0xf] %v5375
      %5417 = vst [vmem:[%s359 + $0x40] sm:$0xf] %v5376
      %5418 = vst [vmem:[%s359 + $0x44] sm:$0xf] %v5377
      %5419 = vst [vmem:[%s359 + $0x48] sm:$0xf] %v5378
      %5420 = vst [vmem:[%s359 + $0x4c] sm:$0xf] %v5379
      %5421 = vst [vmem:[%s359 + $0x50] sm:$0xf] %v5380
      %5422 = vst [vmem:[%s359 + $0x54] sm:$0xf] %v5381
      %5423 = vst [vmem:[%s359 + $0x58] sm:$0xf] %v5382
      %5424 = vst [vmem:[%s359 + $0x5c] sm:$0xf] %v5383
      %5425 = vst [vmem:[%s359 + $0x60] sm:$0xf] %v5384
      %5426 = vst [vmem:[%s359 + $0x64] sm:$0xf] %v5385
      %5427 = vst [vmem:[%s359 + $0x68] sm:$0xf] %v5386
      %5428 = vst [vmem:[%s359 + $0x6c] sm:$0xf] %v5387
      %5429 = vst [vmem:[%s359 + $0x70] sm:$0xf] %v5388
      %5430 = vst [vmem:[%s359 + $0x74] sm:$0xf] %v5389
      %5431 = vst [vmem:[%s359 + $0x78] sm:$0xf] %v5390
      %5432 = vst [vmem:[%s359 + $0x7c] sm:$0xf] %v5391
      %5433 = vst [vmem:[%s359 + $0x80] sm:$0xf] %v5392
      %5434 = vst [vmem:[%s359 + $0x84] sm:$0xf] %v5393
      %5435 = vst [vmem:[%s359 + $0x88] sm:$0xf] %v5394
      %5436 = vst [vmem:[%s359 + $0x8c] sm:$0xf] %v5395
      %5437 = vst [vmem:[%s359 + $0x90] sm:$0xf] %v5396
      %5438 = vst [vmem:[%s359 + $0x94] sm:$0xf] %v5397
      %5439 = vst [vmem:[%s359 + $0x98] sm:$0xf] %v5398
      %5440 = vst [vmem:[%s359 + $0x9c] sm:$0xf] %v5399
      %5441 = vst [vmem:[%s359 + $0xa0] sm:$0xf] %v5400
      %p5442 = scmp.lt.s32.totalorder %s21, 1
      %s5443 = scalar_select %p5442, %s21, 1
      %s5444 = smul.addr %s5443, 41
      %s5445 = smul.addr %s5444, 4
      %s5446 = scalar_lea.vmem %s10, %s5445
      // Predicated region
      $region61: #{bottleneck_forward.1} parent=59 // pred_check
        %p5447 = pneg %p254
      $region62: #{bottleneck_forward.1} parent=59 // pred_check_branch
        %5449 = sbr.rel (%p5447) target = $region64
      $region63: #{bottleneck_forward.1} parent=59 // pred_region
        _
      $region64: #{bottleneck_forward.1} parent=59 // pred_fallthru
        _
    $region60: #{bottleneck_forward.1} parent=5 // pred_fallthru
      _
    %p5450 = scmp.le.s32.totalorder 2, %s16
    // Predicated region
    $region65: #{bottleneck_forward.1} parent=5 // pred_check
      %p5451 = pneg %p5450
    $region66: #{bottleneck_forward.1} parent=5 // pred_check_branch
      %5453 = sbr.rel (%p5451) target = $region68
    $region67: #{bottleneck_forward.1} parent=5 // pred_region
      %s5454 = ssub.s32 %s16, 2
      // Predicated region
      $region69: #{bottleneck_forward.1} parent=67 // pred_check
        %p5455 = pneg %p260
      $region70: #{bottleneck_forward.1} parent=67 // pred_check_branch
        %5457 = sbr.rel (%p5455) target = $region72
      $region71: #{bottleneck_forward.1} parent=67 // pred_region
        %p5458 = scmp.lt.s32.totalorder %s22, 1
        %s5459 = scalar_select %p5458, %s22, 1
        %s5460 = smul.addr %s5459, 41
        %s5461 = smul.addr %s5460, 4
        %s5462 = scalar_lea.vmem %s10, %s5461
      $region72: #{bottleneck_forward.1} parent=67 // pred_fallthru
        _
    $region68: #{bottleneck_forward.1} parent=5 // pred_fallthru
      _
  $region6: #{bottleneck_forward.1} parent=0 // loop_footer
    %s20 = sadd.s32 1, %s16
  $region7: #{bottleneck_forward.1} parent=0 // loop_footer_branch
    %15 = sbr.rel target = $region3
  $region8: #{bottleneck_forward.1} parent=0 // loop_exit
    _

</llo_original>
